<compile_context>
chip_gen: v7x
topology: tpu7x:2x2x1
jax: 0.10.0
libtpu: 0.0.40
codegen_flags: <defaults>
</compile_context>

<pallas_src>
import jax
import jax.numpy as jnp
from jax.experimental import pallas as pl
from jax.experimental.pallas import tpu as pltpu

EPSILON = 1e-6
LANE = 128      # lane width  (last dim)
SUBLANE = 8     # sublane width (second-to-last dim)


def _round_up(n, m):
    return ((n + m - 1) // m) * m


# -----------------------------------------------------------------------------
# Kernel: `time_tile` DualityRNN cell steps per grid point.
# Grid = (num_batch_tiles, num_time_tiles):
#   axis 0 "parallel"  — independent batch tiles (megacore / v7x dual-TC)
#   axis 1 "arbitrary" — time tiles (carries h in xh_scr)
# The time axis MUST stay the innermost (minor) grid axis and xh_scr is
# re-initialized at time-tile 0 — do not reorder the grid axes.
# -----------------------------------------------------------------------------
def duality_rnn_seq_kernel(x_ref, h0_ref, w_sa_ref, w_p_ref, b_ref,
                           out_ref, xh_scr):
    tt = pl.program_id(1)

    tb = x_ref.shape[0]          # timesteps in this tile (static)
    i_sz = x_ref.shape[-1]       # TRUE (un-padded) input feature size
    hp = w_p_ref.shape[-1]       # padded hidden size (multiple of 128)
    k = w_p_ref.shape[0]         # K = Ip + Hp
    ip = k - hp

    cdt = w_sa_ref.dtype         # MXU dtype for the fused sum|alpha matmul

    @pl.when(tt == 0)
    def _init():
        # New batch tile: clear the [x | h] staging buffer so the padded x
        # lanes are exactly zero (inert against the zero weight rows), then
        # load the initial hidden state into the right half.
        xh_scr[...] = jnp.zeros_like(xh_scr)
        xh_scr[:, ip:] = h0_ref[...].astype(jnp.float32)

    # Bias rows loaded once per time tile (hoisted out of the step loop).
    b_sum = b_ref[0:1, :]
    b_alpha = b_ref[1:2, :]
    b_prod = b_ref[2:3, :]

    def step(s, carry):
        # Scatter this step's un-padded input into the left half of xh.
        xh_scr[:, :i_sz] = x_ref[s].astype(jnp.float32)
        xh = xh_scr[...]                              # (bt, K) f32
        log_xh = jnp.log(xh + EPSILON)                # EUP transcendental

        # Fused sum|alpha matmul: (bt, K) @ (K, 2*Hp)  (bf16 or f32 MXU).
        z = jnp.dot(xh.astype(cdt), w_sa_ref[...],
                    preferred_element_type=jnp.float32)
        # Product path in log domain, kept in f32 (bf16 rounding would be
        # amplified multiplicatively through exp()).
        prod_log = jnp.dot(log_xh, w_p_ref[...],
                           preferred_element_type=jnp.float32)

        sum_path = z[:, :hp] + b_sum                  # bias_ih_sum + bias_hh_sum
        alpha = jax.nn.sigmoid(z[:, hp:] + b_alpha)   # bias_alpha
        prod_path = jnp.exp(prod_log) + b_prod        # prod bias added AFTER exp

        # tanh(alpha*sum + (1-alpha)*prod), one fewer VALU op.
        h_new = jnp.tanh(prod_path + alpha * (sum_path - prod_path))

        xh_scr[:, ip:] = h_new                        # carry (f32) for next step
        out_ref[s] = h_new.astype(out_ref.dtype)
        return carry

    jax.lax.fori_loop(0, tb, step, 0, unroll=True)


# -----------------------------------------------------------------------------
# One-time parameter packing (hoisted out of the hot path).
# -----------------------------------------------------------------------------
def prepare_params(params, input_size, hidden_size, compute_dtype=jnp.bfloat16):
    f32 = jnp.float32
    ip = _round_up(input_size, LANE)
    hp = _round_up(hidden_size, LANE)
    k = ip + hp

    # Fused sum|alpha weight acting on [x | h]: (K, 2*Hp).
    w_sa = jnp.zeros((k, 2 * hp), f32)
    w_sa = w_sa.at[:input_size, :hidden_size].set(params["weight_ih_sum"].T.astype(f32))
    w_sa = w_sa.at[ip:ip + hidden_size, :hidden_size].set(params["weight_hh_sum"].T.astype(f32))
    w_sa = w_sa.at[:input_size, hp:hp + hidden_size].set(params["weight_ih_alpha"].T.astype(f32))
    w_sa = w_sa.at[ip:ip + hidden_size, hp:hp + hidden_size].set(params["weight_hh_alpha"].T.astype(f32))

    # Product-path weight acting on [log(x+eps) | log(h+eps)]: (K, Hp).
    # Always f32 (see kernel comment).
    w_p = jnp.zeros((k, hp), f32)
    w_p = w_p.at[:input_size, :hidden_size].set(params["weight_ih_prod"].T.astype(f32))
    w_p = w_p.at[ip:ip + hidden_size, :hidden_size].set(params["weight_hh_prod"].T.astype(f32))

    # Biases packed into a single (3, Hp) block: [sum, alpha, prod].
    b = jnp.zeros((3, hp), f32)
    b = b.at[0, :hidden_size].set(params["bias_ih_sum"] + params["bias_hh_sum"])
    b = b.at[1, :hidden_size].set(params["bias_alpha"])
    b = b.at[2, :hidden_size].set(params["bias_ih_prod"] + params["bias_hh_prod"])

    # Padded weight rows / columns / bias lanes are zero by construction; the
    # kernel relies on this so padded lanes stay inert (exp() never blows up).
    return {
        "w_sa": w_sa.astype(compute_dtype),
        "w_p": w_p,
        "b": b,
        "input_size": input_size,
        "hidden_size": hidden_size,
        "ip": ip,
        "hp": hp,
    }


# -----------------------------------------------------------------------------
# Wrappers
# -----------------------------------------------------------------------------
def duality_rnn_sequence(x_seq, hx, prep, *, batch_tile=None, time_tile=8,
                         out_dtype=jnp.float32):
    """Run the DualityRNN cell over a whole sequence in ONE pallas_call.

    x_seq: [T, B, input_size] f32
    hx:    [B, hidden_size] f32 or None
    returns: [T, B, hidden_size] (hidden state after each step), dtype=out_dtype
    """
    T, B, I = x_seq.shape
    assert I == prep["input_size"]
    H = prep["hidden_size"]
    ip, hp = prep["ip"], prep["hp"]
    k = ip + hp

    if hx is None:
        hx = jnp.zeros((B, H), jnp.float32)

    # --- batch tiling: fill MXU rows, keep >=2 tiles when possible (v7x) -----
    b_rounded = _round_up(B, SUBLANE)
    if batch_tile is None:
        bt = min(256, b_rounded)                  # one full MXU pass (v6e/v7x)
        if b_rounded // bt < 2 and bt >= 2 * SUBLANE:
            bt = _round_up(bt // 2, SUBLANE)      # give both v7x TCs a tile
    else:
        bt = _round_up(batch_tile, SUBLANE)
    bp = _round_up(B, bt)
    n_bt = bp // bt

    # --- time tiling: amortize per-grid-step overhead -------------------------
    tb_t = max(1, min(time_tile, T))
    n_tt = pl.cdiv(T, tb_t)
    tp = n_tt * tb_t

    # x keeps its TRUE feature width (no zero-padded Ip slab in HBM); batch /
    # time are only padded when actually needed.
    if tp == T and bp == B:
        x_p = x_seq.astype(jnp.float32)
    else:
        x_p = jnp.zeros((tp, bp, I), jnp.float32).at[:T, :B, :].set(
            x_seq.astype(jnp.float32))
    h0_p = jnp.zeros((bp, hp), jnp.float32).at[:B, :H].set(hx.astype(jnp.float32))

    # Conservative VMEM budget: double-buffered blocks + resident weights
    # (v5e scoped default is only 16 MiB, so set this explicitly).
    w_bytes = (k * 2 * hp * jnp.dtype(prep["w_sa"].dtype).itemsize
               + k * hp * 4 + 8 * hp * 4)
    io_bytes = (tb_t * bt * I * 4
                + tb_t * bt * hp * jnp.dtype(out_dtype).itemsize
                + bt * hp * 4)
    vmem_limit = int(min(48 << 20,
                         max(16 << 20,
                             2 * (w_bytes + io_bytes) + bt * k * 4 + (4 << 20))))

    out = pl.pallas_call(
        duality_rnn_seq_kernel,
        out_shape=jax.ShapeDtypeStruct((tp, bp, hp), out_dtype),
        grid=(n_bt, n_tt),     # time innermost: carries h in xh_scr
        in_specs=[
            pl.BlockSpec((tb_t, bt, I), lambda b, t: (t, b, 0)),   # x (true width)
            pl.BlockSpec((bt, hp),      lambda b, t: (b, 0)),      # h0 (per tile)
            pl.BlockSpec((k, 2 * hp),   lambda b, t: (0, 0)),      # W_sa (resident)
            pl.BlockSpec((k, hp),       lambda b, t: (0, 0)),      # W_p  (resident)
            pl.BlockSpec((3, hp),       lambda b, t: (0, 0)),      # biases (resident)
        ],
        out_specs=pl.BlockSpec((tb_t, bt, hp), lambda b, t: (t, b, 0)),
        scratch_shapes=[pltpu.VMEM((bt, k), jnp.float32)],  # persistent [x | h]
        compiler_params=pltpu.CompilerParams(
            dimension_semantics=("parallel", "arbitrary"),
            vmem_limit_bytes=vmem_limit),
    )(x_p, h0_p, prep["w_sa"], prep["w_p"], prep["b"])

    return out[:T, :B, :H]


def duality_rnn_cell(x, hx, prep, out_dtype=jnp.float32):
    """Single DualityRNN cell step (the literal nn.Module forward)."""
    return duality_rnn_sequence(x[None], hx, prep, time_tile=1,
                                out_dtype=out_dtype)[0]


# -----------------------------------------------------------------------------
# Pure-JAX reference mirroring the PyTorch module exactly (full-precision dots).
# -----------------------------------------------------------------------------
def reference_cell(x, hx, params):
    hi = jax.lax.Precision.HIGHEST
    ih_sum = jnp.dot(x, params["weight_ih_sum"].T, precision=hi) + params["bias_ih_sum"]
    hh_sum = jnp.dot(hx, params["weight_hh_sum"].T, precision=hi) + params["bias_hh_sum"]
    sum_path = ih_sum + hh_sum
    log_x = jnp.log(x + EPSILON)
    log_hx = jnp.log(hx + EPSILON)
    prod_path = jnp.exp(jnp.dot(log_x, params["weight_ih_prod"].T, precision=hi)
                        + jnp.dot(log_hx, params["weight_hh_prod"].T, precision=hi))
    prod_path = prod_path + params["bias_ih_prod"] + params["bias_hh_prod"]
    alpha = jax.nn.sigmoid(jnp.dot(x, params["weight_ih_alpha"].T, precision=hi)
                           + jnp.dot(hx, params["weight_hh_alpha"].T, precision=hi)
                           + params["bias_alpha"])
    return jnp.tanh(alpha * sum_path + (1.0 - alpha) * prod_path)


def reference_sequence(x_seq, hx, params):
    T, B, _ = x_seq.shape
    H = params["weight_ih_sum"].shape[0]
    if hx is None:
        hx = jnp.zeros((B, H), jnp.float32)
    h = hx
    outs = []
    for t in range(T):
        h = reference_cell(x_seq[t], h, params)
        outs.append(h)
    return jnp.stack(outs, axis=0)


def init_params(key, input_size, hidden_size):
    """Deterministic synthetic init.

    The product path takes log(h + eps) of the RECURRENT state, so a rollout
    is only numerically well-defined when the state stays positive (a property
    of the module, not of this kernel).  The demo init uses small non-negative
    sum/prod weights so h stays in (0, 1) and the log-domain path is finite.
    """
    ks = jax.random.split(key, 8)
    H, I = hidden_size, input_size
    u = jax.random.uniform
    return {
        "weight_ih_sum":   u(ks[0], (H, I), jnp.float32, 0.0, 0.06),
        "weight_hh_sum":   u(ks[1], (H, H), jnp.float32, 0.0, 0.03),
        "weight_ih_prod":  u(ks[2], (H, I), jnp.float32, 0.0, 0.02),
        "weight_hh_prod":  u(ks[3], (H, H), jnp.float32, 0.0, 0.015),
        "weight_ih_alpha": jax.random.normal(ks[4], (H, I), jnp.float32) * 0.02,
        "weight_hh_alpha": jax.random.normal(ks[5], (H, H), jnp.float32) * 0.02,
        "bias_ih_sum":   u(ks[6], (H,), jnp.float32, 0.0, 0.05),
        "bias_hh_sum":   jnp.zeros((H,), jnp.float32),
        "bias_ih_prod":  u(ks[7], (H,), jnp.float32, 0.0, 0.05),
        "bias_hh_prod":  jnp.zeros((H,), jnp.float32),
        "bias_alpha":    jnp.zeros((H,), jnp.float32),
    }


if __name__ == "__main__":
    T, B, INPUT_SIZE, HIDDEN_SIZE = 8, 2, 4, 32

    key = jax.random.PRNGKey(0)
    k_params, k_x, k_h = jax.random.split(key, 3)

    params = init_params(k_params, INPUT_SIZE, HIDDEN_SIZE)
    # Positive inputs keep log(x + eps) well-behaved, like typical usage.
    x_seq = jax.random.uniform(k_x, (T, B, INPUT_SIZE), jnp.float32,
                               minval=0.1, maxval=1.0)
    hx = jax.random.uniform(k_h, (B, HIDDEN_SIZE), jnp.float32,
                            minval=0.1, maxval=1.0)

    ref = reference_sequence(x_seq, hx, params)

    # --- f32 MXU path, f32 output: numerical parity with the reference -------
    prep_f32 = prepare_params(params, INPUT_SIZE, HIDDEN_SIZE,
                              compute_dtype=jnp.float32)
    out_f32 = jax.block_until_ready(duality_rnn_sequence(x_seq, hx, prep_f32))
    assert out_f32.shape == (T, B, HIDDEN_SIZE)
    assert jnp.allclose(out_f32, ref, atol=1e-3, rtol=1e-3), \
        "f32 Pallas kernel mismatch vs reference"

    # Single-step call (the literal nn.Module forward) through the same kernel.
    out_step = jax.block_until_ready(duality_rnn_cell(x_seq[0], hx, prep_f32))
    assert jnp.allclose(out_step, ref[0], atol=1e-3, rtol=1e-3), \
        "single-step Pallas kernel mismatch vs reference"

    # --- bf16 sum/alpha matmul + bf16 writeback; product path stays f32 ------
    prep_bf16 = prepare_params(params, INPUT_SIZE, HIDDEN_SIZE,
                               compute_dtype=jnp.bfloat16)
    out_bf16 = jax.block_until_ready(
        duality_rnn_sequence(x_seq, hx, prep_bf16, out_dtype=jnp.bfloat16))
    assert out_bf16.shape == (T, B, HIDDEN_SIZE)
    out_bf16_f32 = out_bf16.astype(jnp.float32)
    assert bool(jnp.all(jnp.isfinite(out_bf16_f32)))
    assert float(jnp.max(jnp.abs(out_bf16_f32 - ref))) < 0.05, \
        "bf16 Pallas kernel deviates too much from reference"

    print("KERNEL_OK")
</pallas_src>

<mosaic_0001>
module attributes {stable_mosaic.version = 11 : i64} {
  func.func @duality_rnn_seq_kernel(%arg0: i32, %arg1: i32, %arg2: memref<8x8x4xf32, #tpu.memory_space<vmem>>, %arg3: memref<8x128xf32, #tpu.memory_space<vmem>>, %arg4: memref<256x256xf32, #tpu.memory_space<vmem>>, %arg5: memref<256x128xf32, #tpu.memory_space<vmem>>, %arg6: memref<3x128xf32, #tpu.memory_space<vmem>>, %arg7: memref<8x8x128xf32, #tpu.memory_space<vmem>>, %arg8: memref<8x256xf32, #tpu.memory_space<vmem>>) attributes {dimension_semantics = [#tpu.dimension_semantics<parallel>, #tpu.dimension_semantics<arbitrary>], iteration_bounds = array<i64: 1, 1>, scalar_prefetch = 0 : i64, scratch_operands = 1 : i64, tpu.core_type = #tpu.core_type<tc>, window_params = [{transform_indices = @transform_0, window_bounds = array<i64: 8, 8, 4>}, {transform_indices = @transform_1, window_bounds = array<i64: 8, 128>}, {pipeline_mode = #tpu.pipeline_mode<synchronous>, transform_indices = @transform_2, window_bounds = array<i64: 256, 256>}, {pipeline_mode = #tpu.pipeline_mode<synchronous>, transform_indices = @transform_3, window_bounds = array<i64: 256, 128>}, {pipeline_mode = #tpu.pipeline_mode<synchronous>, transform_indices = @transform_4, window_bounds = array<i64: 3, 128>}, {transform_indices = @transform_5, window_bounds = array<i64: 8, 8, 128>}]} {
    %c0_i32 = arith.constant 0 : i32
    %0 = arith.cmpi eq, %arg1, %c0_i32 : i32
    %1 = arith.extui %0 : i1 to i32
    %c0_i32_0 = arith.constant 0 : i32
    %2 = arith.cmpi ne, %1, %c0_i32_0 : i32
    scf.if %2 {
      %cst_147 = arith.constant 0.000000e+00 : f32
      %286 = vector.broadcast %cst_147 : f32 to vector<8x256xf32>
      %c0_148 = arith.constant 0 : index
      %c0_149 = arith.constant 0 : index
      %287 = vector.load %arg8[%c0_148, %c0_149] : memref<8x256xf32, #tpu.memory_space<vmem>>, vector<8x256xf32>
      tpu.vector_store %arg8[%c0_148, %c0_149], %286 {strides = array<i32>} : memref<8x256xf32, #tpu.memory_space<vmem>>, vector<8x256xf32>,
      %c0_150 = arith.constant 0 : index
      %c0_151 = arith.constant 0 : index
      %288 = vector.load %arg3[%c0_150, %c0_151] : memref<8x128xf32, #tpu.memory_space<vmem>>, vector<8x128xf32>
      %c0_152 = arith.constant 0 : index
      %c128_153 = arith.constant 128 : index
      %289 = vector.load %arg8[%c0_152, %c128_153] : memref<8x256xf32, #tpu.memory_space<vmem>>, vector<8x128xf32>
      tpu.vector_store %arg8[%c0_152, %c128_153], %288 {strides = array<i32>} : memref<8x256xf32, #tpu.memory_space<vmem>>, vector<8x128xf32>,
    } else {
    }
    %c0 = arith.constant 0 : index
    %c0_1 = arith.constant 0 : index
    %3 = vector.load %arg6[%c0, %c0_1] : memref<3x128xf32, #tpu.memory_space<vmem>>, vector<1x128xf32>
    %c1 = arith.constant 1 : index
    %c0_2 = arith.constant 0 : index
    %4 = vector.load %arg6[%c1, %c0_2] : memref<3x128xf32, #tpu.memory_space<vmem>>, vector<1x128xf32>
    %c2 = arith.constant 2 : index
    %c0_3 = arith.constant 0 : index
    %5 = vector.load %arg6[%c2, %c0_3] : memref<3x128xf32, #tpu.memory_space<vmem>>, vector<1x128xf32>
    %c0_i32_4 = arith.constant 0 : i32
    %6 = arith.index_cast %c0_i32_4 : i32 to index
    %c0_5 = arith.constant 0 : index
    %c0_6 = arith.constant 0 : index
    %7 = vector.load %arg2[%6, %c0_5, %c0_6] : memref<8x8x4xf32, #tpu.memory_space<vmem>>, vector<1x8x4xf32>
    %8 = vector.shape_cast %7 : vector<1x8x4xf32> to vector<8x4xf32>
    %c0_7 = arith.constant 0 : index
    %c0_8 = arith.constant 0 : index
    %9 = vector.load %arg8[%c0_7, %c0_8] : memref<8x256xf32, #tpu.memory_space<vmem>>, vector<8x4xf32>
    tpu.vector_store %arg8[%c0_7, %c0_8], %8 {strides = array<i32>} : memref<8x256xf32, #tpu.memory_space<vmem>>, vector<8x4xf32>,
    %c0_9 = arith.constant 0 : index
    %c0_10 = arith.constant 0 : index
    %10 = vector.load %arg8[%c0_9, %c0_10] : memref<8x256xf32, #tpu.memory_space<vmem>>, vector<8x256xf32>
    %cst = arith.constant 9.99999997E-7 : f32
    %11 = vector.broadcast %cst : f32 to vector<8x256xf32>
    %12 = arith.addf %10, %11 : vector<8x256xf32>
    %13 = math.log %12 : vector<8x256xf32>
    %c0_11 = arith.constant 0 : index
    %c0_12 = arith.constant 0 : index
    %14 = vector.load %arg4[%c0_11, %c0_12] : memref<256x256xf32, #tpu.memory_space<vmem>>, vector<256x256xf32>
    %cst_13 = arith.constant dense<0.000000e+00> : vector<8x256xf32>
    %15 = tpu.matmul %10, %14, %cst_13 {dimension_numbers = #tpu.dot_dimension_numbers<[1], [0], [0], [1], [0, 0, 1, 1], [], []>} : vector<8x256xf32>, vector<256x256xf32>, vector<8x256xf32> -> vector<8x256xf32>
    %c0_14 = arith.constant 0 : index
    %c0_15 = arith.constant 0 : index
    %16 = vector.load %arg5[%c0_14, %c0_15] : memref<256x128xf32, #tpu.memory_space<vmem>>, vector<256x128xf32>
    %cst_16 = arith.constant dense<0.000000e+00> : vector<8x128xf32>
    %17 = tpu.matmul %13, %16, %cst_16 {dimension_numbers = #tpu.dot_dimension_numbers<[1], [0], [0], [1], [0, 0, 1, 1], [], []>} : vector<8x256xf32>, vector<256x128xf32>, vector<8x128xf32> -> vector<8x128xf32>
    %18 = vector.extract_strided_slice %15 {offsets = [0, 0], sizes = [8, 128], strides = [1, 1]} : vector<8x256xf32> to vector<8x128xf32>
    %19 = vector.broadcast %3 : vector<1x128xf32> to vector<8x128xf32>
    %20 = arith.addf %18, %19 : vector<8x128xf32>
    %21 = vector.extract_strided_slice %15 {offsets = [0, 128], sizes = [8, 128], strides = [1, 1]} : vector<8x256xf32> to vector<8x128xf32>
    %22 = vector.broadcast %4 : vector<1x128xf32> to vector<8x128xf32>
    %23 = arith.addf %21, %22 : vector<8x128xf32>
    %24 = arith.negf %23 : vector<8x128xf32>
    %25 = math.exp %24 : vector<8x128xf32>
    %cst_17 = arith.constant 1.000000e+00 : f32
    %26 = vector.broadcast %cst_17 : f32 to vector<8x128xf32>
    %27 = arith.addf %26, %25 : vector<8x128xf32>
    %28 = arith.divf %26, %27 : vector<8x128xf32>
    %29 = math.exp %17 : vector<8x128xf32>
    %30 = vector.broadcast %5 : vector<1x128xf32> to vector<8x128xf32>
    %31 = arith.addf %29, %30 : vector<8x128xf32>
    %32 = arith.subf %20, %31 : vector<8x128xf32>
    %33 = arith.mulf %28, %32 : vector<8x128xf32>
    %34 = arith.addf %31, %33 : vector<8x128xf32>
    %35 = math.tanh %34 : vector<8x128xf32>
    %c0_18 = arith.constant 0 : index
    %c128 = arith.constant 128 : index
    %36 = vector.load %arg8[%c0_18, %c128] : memref<8x256xf32, #tpu.memory_space<vmem>>, vector<8x128xf32>
    tpu.vector_store %arg8[%c0_18, %c128], %35 {strides = array<i32>} : memref<8x256xf32, #tpu.memory_space<vmem>>, vector<8x128xf32>,
    %37 = arith.index_cast %c0_i32_4 : i32 to index
    %c0_19 = arith.constant 0 : index
    %c0_20 = arith.constant 0 : index
    %38 = vector.load %arg7[%37, %c0_19, %c0_20] : memref<8x8x128xf32, #tpu.memory_space<vmem>>, vector<1x8x128xf32>
    %39 = vector.shape_cast %38 : vector<1x8x128xf32> to vector<8x128xf32>
    %40 = vector.shape_cast %35 : vector<8x128xf32> to vector<1x8x128xf32>
    tpu.vector_store %arg7[%37, %c0_19, %c0_20], %40 {strides = array<i32>} : memref<8x8x128xf32, #tpu.memory_space<vmem>>, vector<1x8x128xf32>,
    %c1_i32 = arith.constant 1 : i32
    %41 = arith.index_cast %c1_i32 : i32 to index
    %c0_21 = arith.constant 0 : index
    %c0_22 = arith.constant 0 : index
    %42 = vector.load %arg2[%41, %c0_21, %c0_22] : memref<8x8x4xf32, #tpu.memory_space<vmem>>, vector<1x8x4xf32>
    %43 = vector.shape_cast %42 : vector<1x8x4xf32> to vector<8x4xf32>
    %c0_23 = arith.constant 0 : index
    %c0_24 = arith.constant 0 : index
    %44 = vector.load %arg8[%c0_23, %c0_24] : memref<8x256xf32, #tpu.memory_space<vmem>>, vector<8x4xf32>
    tpu.vector_store %arg8[%c0_23, %c0_24], %43 {strides = array<i32>} : memref<8x256xf32, #tpu.memory_space<vmem>>, vector<8x4xf32>,
    %c0_25 = arith.constant 0 : index
    %c0_26 = arith.constant 0 : index
    %45 = vector.load %arg8[%c0_25, %c0_26] : memref<8x256xf32, #tpu.memory_space<vmem>>, vector<8x256xf32>
    %cst_27 = arith.constant 9.99999997E-7 : f32
    %46 = vector.broadcast %cst_27 : f32 to vector<8x256xf32>
    %47 = arith.addf %45, %46 : vector<8x256xf32>
    %48 = math.log %47 : vector<8x256xf32>
    %c0_28 = arith.constant 0 : index
    %c0_29 = arith.constant 0 : index
    %49 = vector.load %arg4[%c0_28, %c0_29] : memref<256x256xf32, #tpu.memory_space<vmem>>, vector<256x256xf32>
    %cst_30 = arith.constant dense<0.000000e+00> : vector<8x256xf32>
    %50 = tpu.matmul %45, %49, %cst_30 {dimension_numbers = #tpu.dot_dimension_numbers<[1], [0], [0], [1], [0, 0, 1, 1], [], []>} : vector<8x256xf32>, vector<256x256xf32>, vector<8x256xf32> -> vector<8x256xf32>
    %c0_31 = arith.constant 0 : index
    %c0_32 = arith.constant 0 : index
    %51 = vector.load %arg5[%c0_31, %c0_32] : memref<256x128xf32, #tpu.memory_space<vmem>>, vector<256x128xf32>
    %cst_33 = arith.constant dense<0.000000e+00> : vector<8x128xf32>
    %52 = tpu.matmul %48, %51, %cst_33 {dimension_numbers = #tpu.dot_dimension_numbers<[1], [0], [0], [1], [0, 0, 1, 1], [], []>} : vector<8x256xf32>, vector<256x128xf32>, vector<8x128xf32> -> vector<8x128xf32>
    %53 = vector.extract_strided_slice %50 {offsets = [0, 0], sizes = [8, 128], strides = [1, 1]} : vector<8x256xf32> to vector<8x128xf32>
    %54 = vector.broadcast %3 : vector<1x128xf32> to vector<8x128xf32>
    %55 = arith.addf %53, %54 : vector<8x128xf32>
    %56 = vector.extract_strided_slice %50 {offsets = [0, 128], sizes = [8, 128], strides = [1, 1]} : vector<8x256xf32> to vector<8x128xf32>
    %57 = vector.broadcast %4 : vector<1x128xf32> to vector<8x128xf32>
    %58 = arith.addf %56, %57 : vector<8x128xf32>
    %59 = arith.negf %58 : vector<8x128xf32>
    %60 = math.exp %59 : vector<8x128xf32>
    %cst_34 = arith.constant 1.000000e+00 : f32
    %61 = vector.broadcast %cst_34 : f32 to vector<8x128xf32>
    %62 = arith.addf %61, %60 : vector<8x128xf32>
    %63 = arith.divf %61, %62 : vector<8x128xf32>
    %64 = math.exp %52 : vector<8x128xf32>
    %65 = vector.broadcast %5 : vector<1x128xf32> to vector<8x128xf32>
    %66 = arith.addf %64, %65 : vector<8x128xf32>
    %67 = arith.subf %55, %66 : vector<8x128xf32>
    %68 = arith.mulf %63, %67 : vector<8x128xf32>
    %69 = arith.addf %66, %68 : vector<8x128xf32>
    %70 = math.tanh %69 : vector<8x128xf32>
    %c0_35 = arith.constant 0 : index
    %c128_36 = arith.constant 128 : index
    %71 = vector.load %arg8[%c0_35, %c128_36] : memref<8x256xf32, #tpu.memory_space<vmem>>, vector<8x128xf32>
    tpu.vector_store %arg8[%c0_35, %c128_36], %70 {strides = array<i32>} : memref<8x256xf32, #tpu.memory_space<vmem>>, vector<8x128xf32>,
    %72 = arith.index_cast %c1_i32 : i32 to index
    %c0_37 = arith.constant 0 : index
    %c0_38 = arith.constant 0 : index
    %73 = vector.load %arg7[%72, %c0_37, %c0_38] : memref<8x8x128xf32, #tpu.memory_space<vmem>>, vector<1x8x128xf32>
    %74 = vector.shape_cast %73 : vector<1x8x128xf32> to vector<8x128xf32>
    %75 = vector.shape_cast %70 : vector<8x128xf32> to vector<1x8x128xf32>
    tpu.vector_store %arg7[%72, %c0_37, %c0_38], %75 {strides = array<i32>} : memref<8x8x128xf32, #tpu.memory_space<vmem>>, vector<1x8x128xf32>,
    %c2_i32 = arith.constant 2 : i32
    %76 = arith.index_cast %c2_i32 : i32 to index
    %c0_39 = arith.constant 0 : index
    %c0_40 = arith.constant 0 : index
    %77 = vector.load %arg2[%76, %c0_39, %c0_40] : memref<8x8x4xf32, #tpu.memory_space<vmem>>, vector<1x8x4xf32>
    %78 = vector.shape_cast %77 : vector<1x8x4xf32> to vector<8x4xf32>
    %c0_41 = arith.constant 0 : index
    %c0_42 = arith.constant 0 : index
    %79 = vector.load %arg8[%c0_41, %c0_42] : memref<8x256xf32, #tpu.memory_space<vmem>>, vector<8x4xf32>
    tpu.vector_store %arg8[%c0_41, %c0_42], %78 {strides = array<i32>} : memref<8x256xf32, #tpu.memory_space<vmem>>, vector<8x4xf32>,
    %c0_43 = arith.constant 0 : index
    %c0_44 = arith.constant 0 : index
    %80 = vector.load %arg8[%c0_43, %c0_44] : memref<8x256xf32, #tpu.memory_space<vmem>>, vector<8x256xf32>
    %cst_45 = arith.constant 9.99999997E-7 : f32
    %81 = vector.broadcast %cst_45 : f32 to vector<8x256xf32>
    %82 = arith.addf %80, %81 : vector<8x256xf32>
    %83 = math.log %82 : vector<8x256xf32>
    %c0_46 = arith.constant 0 : index
    %c0_47 = arith.constant 0 : index
    %84 = vector.load %arg4[%c0_46, %c0_47] : memref<256x256xf32, #tpu.memory_space<vmem>>, vector<256x256xf32>
    %cst_48 = arith.constant dense<0.000000e+00> : vector<8x256xf32>
    %85 = tpu.matmul %80, %84, %cst_48 {dimension_numbers = #tpu.dot_dimension_numbers<[1], [0], [0], [1], [0, 0, 1, 1], [], []>} : vector<8x256xf32>, vector<256x256xf32>, vector<8x256xf32> -> vector<8x256xf32>
    %c0_49 = arith.constant 0 : index
    %c0_50 = arith.constant 0 : index
    %86 = vector.load %arg5[%c0_49, %c0_50] : memref<256x128xf32, #tpu.memory_space<vmem>>, vector<256x128xf32>
    %cst_51 = arith.constant dense<0.000000e+00> : vector<8x128xf32>
    %87 = tpu.matmul %83, %86, %cst_51 {dimension_numbers = #tpu.dot_dimension_numbers<[1], [0], [0], [1], [0, 0, 1, 1], [], []>} : vector<8x256xf32>, vector<256x128xf32>, vector<8x128xf32> -> vector<8x128xf32>
    %88 = vector.extract_strided_slice %85 {offsets = [0, 0], sizes = [8, 128], strides = [1, 1]} : vector<8x256xf32> to vector<8x128xf32>
    %89 = vector.broadcast %3 : vector<1x128xf32> to vector<8x128xf32>
    %90 = arith.addf %88, %89 : vector<8x128xf32>
    %91 = vector.extract_strided_slice %85 {offsets = [0, 128], sizes = [8, 128], strides = [1, 1]} : vector<8x256xf32> to vector<8x128xf32>
    %92 = vector.broadcast %4 : vector<1x128xf32> to vector<8x128xf32>
    %93 = arith.addf %91, %92 : vector<8x128xf32>
    %94 = arith.negf %93 : vector<8x128xf32>
    %95 = math.exp %94 : vector<8x128xf32>
    %cst_52 = arith.constant 1.000000e+00 : f32
    %96 = vector.broadcast %cst_52 : f32 to vector<8x128xf32>
    %97 = arith.addf %96, %95 : vector<8x128xf32>
    %98 = arith.divf %96, %97 : vector<8x128xf32>
    %99 = math.exp %87 : vector<8x128xf32>
    %100 = vector.broadcast %5 : vector<1x128xf32> to vector<8x128xf32>
    %101 = arith.addf %99, %100 : vector<8x128xf32>
    %102 = arith.subf %90, %101 : vector<8x128xf32>
    %103 = arith.mulf %98, %102 : vector<8x128xf32>
    %104 = arith.addf %101, %103 : vector<8x128xf32>
    %105 = math.tanh %104 : vector<8x128xf32>
    %c0_53 = arith.constant 0 : index
    %c128_54 = arith.constant 128 : index
    %106 = vector.load %arg8[%c0_53, %c128_54] : memref<8x256xf32, #tpu.memory_space<vmem>>, vector<8x128xf32>
    tpu.vector_store %arg8[%c0_53, %c128_54], %105 {strides = array<i32>} : memref<8x256xf32, #tpu.memory_space<vmem>>, vector<8x128xf32>,
    %107 = arith.index_cast %c2_i32 : i32 to index
    %c0_55 = arith.constant 0 : index
    %c0_56 = arith.constant 0 : index
    %108 = vector.load %arg7[%107, %c0_55, %c0_56] : memref<8x8x128xf32, #tpu.memory_space<vmem>>, vector<1x8x128xf32>
    %109 = vector.shape_cast %108 : vector<1x8x128xf32> to vector<8x128xf32>
    %110 = vector.shape_cast %105 : vector<8x128xf32> to vector<1x8x128xf32>
    tpu.vector_store %arg7[%107, %c0_55, %c0_56], %110 {strides = array<i32>} : memref<8x8x128xf32, #tpu.memory_space<vmem>>, vector<1x8x128xf32>,
    %c3_i32 = arith.constant 3 : i32
    %111 = arith.index_cast %c3_i32 : i32 to index
    %c0_57 = arith.constant 0 : index
    %c0_58 = arith.constant 0 : index
    %112 = vector.load %arg2[%111, %c0_57, %c0_58] : memref<8x8x4xf32, #tpu.memory_space<vmem>>, vector<1x8x4xf32>
    %113 = vector.shape_cast %112 : vector<1x8x4xf32> to vector<8x4xf32>
    %c0_59 = arith.constant 0 : index
    %c0_60 = arith.constant 0 : index
    %114 = vector.load %arg8[%c0_59, %c0_60] : memref<8x256xf32, #tpu.memory_space<vmem>>, vector<8x4xf32>
    tpu.vector_store %arg8[%c0_59, %c0_60], %113 {strides = array<i32>} : memref<8x256xf32, #tpu.memory_space<vmem>>, vector<8x4xf32>,
    %c0_61 = arith.constant 0 : index
    %c0_62 = arith.constant 0 : index
    %115 = vector.load %arg8[%c0_61, %c0_62] : memref<8x256xf32, #tpu.memory_space<vmem>>, vector<8x256xf32>
    %cst_63 = arith.constant 9.99999997E-7 : f32
    %116 = vector.broadcast %cst_63 : f32 to vector<8x256xf32>
    %117 = arith.addf %115, %116 : vector<8x256xf32>
    %118 = math.log %117 : vector<8x256xf32>
    %c0_64 = arith.constant 0 : index
    %c0_65 = arith.constant 0 : index
    %119 = vector.load %arg4[%c0_64, %c0_65] : memref<256x256xf32, #tpu.memory_space<vmem>>, vector<256x256xf32>
    %cst_66 = arith.constant dense<0.000000e+00> : vector<8x256xf32>
    %120 = tpu.matmul %115, %119, %cst_66 {dimension_numbers = #tpu.dot_dimension_numbers<[1], [0], [0], [1], [0, 0, 1, 1], [], []>} : vector<8x256xf32>, vector<256x256xf32>, vector<8x256xf32> -> vector<8x256xf32>
    %c0_67 = arith.constant 0 : index
    %c0_68 = arith.constant 0 : index
    %121 = vector.load %arg5[%c0_67, %c0_68] : memref<256x128xf32, #tpu.memory_space<vmem>>, vector<256x128xf32>
    %cst_69 = arith.constant dense<0.000000e+00> : vector<8x128xf32>
    %122 = tpu.matmul %118, %121, %cst_69 {dimension_numbers = #tpu.dot_dimension_numbers<[1], [0], [0], [1], [0, 0, 1, 1], [], []>} : vector<8x256xf32>, vector<256x128xf32>, vector<8x128xf32> -> vector<8x128xf32>
    %123 = vector.extract_strided_slice %120 {offsets = [0, 0], sizes = [8, 128], strides = [1, 1]} : vector<8x256xf32> to vector<8x128xf32>
    %124 = vector.broadcast %3 : vector<1x128xf32> to vector<8x128xf32>
    %125 = arith.addf %123, %124 : vector<8x128xf32>
    %126 = vector.extract_strided_slice %120 {offsets = [0, 128], sizes = [8, 128], strides = [1, 1]} : vector<8x256xf32> to vector<8x128xf32>
    %127 = vector.broadcast %4 : vector<1x128xf32> to vector<8x128xf32>
    %128 = arith.addf %126, %127 : vector<8x128xf32>
    %129 = arith.negf %128 : vector<8x128xf32>
    %130 = math.exp %129 : vector<8x128xf32>
    %cst_70 = arith.constant 1.000000e+00 : f32
    %131 = vector.broadcast %cst_70 : f32 to vector<8x128xf32>
    %132 = arith.addf %131, %130 : vector<8x128xf32>
    %133 = arith.divf %131, %132 : vector<8x128xf32>
    %134 = math.exp %122 : vector<8x128xf32>
    %135 = vector.broadcast %5 : vector<1x128xf32> to vector<8x128xf32>
    %136 = arith.addf %134, %135 : vector<8x128xf32>
    %137 = arith.subf %125, %136 : vector<8x128xf32>
    %138 = arith.mulf %133, %137 : vector<8x128xf32>
    %139 = arith.addf %136, %138 : vector<8x128xf32>
    %140 = math.tanh %139 : vector<8x128xf32>
    %c0_71 = arith.constant 0 : index
    %c128_72 = arith.constant 128 : index
    %141 = vector.load %arg8[%c0_71, %c128_72] : memref<8x256xf32, #tpu.memory_space<vmem>>, vector<8x128xf32>
    tpu.vector_store %arg8[%c0_71, %c128_72], %140 {strides = array<i32>} : memref<8x256xf32, #tpu.memory_space<vmem>>, vector<8x128xf32>,
    %142 = arith.index_cast %c3_i32 : i32 to index
    %c0_73 = arith.constant 0 : index
    %c0_74 = arith.constant 0 : index
    %143 = vector.load %arg7[%142, %c0_73, %c0_74] : memref<8x8x128xf32, #tpu.memory_space<vmem>>, vector<1x8x128xf32>
    %144 = vector.shape_cast %143 : vector<1x8x128xf32> to vector<8x128xf32>
    %145 = vector.shape_cast %140 : vector<8x128xf32> to vector<1x8x128xf32>
    tpu.vector_store %arg7[%142, %c0_73, %c0_74], %145 {strides = array<i32>} : memref<8x8x128xf32, #tpu.memory_space<vmem>>, vector<1x8x128xf32>,
    %c4_i32 = arith.constant 4 : i32
    %146 = arith.index_cast %c4_i32 : i32 to index
    %c0_75 = arith.constant 0 : index
    %c0_76 = arith.constant 0 : index
    %147 = vector.load %arg2[%146, %c0_75, %c0_76] : memref<8x8x4xf32, #tpu.memory_space<vmem>>, vector<1x8x4xf32>
    %148 = vector.shape_cast %147 : vector<1x8x4xf32> to vector<8x4xf32>
    %c0_77 = arith.constant 0 : index
    %c0_78 = arith.constant 0 : index
    %149 = vector.load %arg8[%c0_77, %c0_78] : memref<8x256xf32, #tpu.memory_space<vmem>>, vector<8x4xf32>
    tpu.vector_store %arg8[%c0_77, %c0_78], %148 {strides = array<i32>} : memref<8x256xf32, #tpu.memory_space<vmem>>, vector<8x4xf32>,
    %c0_79 = arith.constant 0 : index
    %c0_80 = arith.constant 0 : index
    %150 = vector.load %arg8[%c0_79, %c0_80] : memref<8x256xf32, #tpu.memory_space<vmem>>, vector<8x256xf32>
    %cst_81 = arith.constant 9.99999997E-7 : f32
    %151 = vector.broadcast %cst_81 : f32 to vector<8x256xf32>
    %152 = arith.addf %150, %151 : vector<8x256xf32>
    %153 = math.log %152 : vector<8x256xf32>
    %c0_82 = arith.constant 0 : index
    %c0_83 = arith.constant 0 : index
    %154 = vector.load %arg4[%c0_82, %c0_83] : memref<256x256xf32, #tpu.memory_space<vmem>>, vector<256x256xf32>
    %cst_84 = arith.constant dense<0.000000e+00> : vector<8x256xf32>
    %155 = tpu.matmul %150, %154, %cst_84 {dimension_numbers = #tpu.dot_dimension_numbers<[1], [0], [0], [1], [0, 0, 1, 1], [], []>} : vector<8x256xf32>, vector<256x256xf32>, vector<8x256xf32> -> vector<8x256xf32>
    %c0_85 = arith.constant 0 : index
    %c0_86 = arith.constant 0 : index
    %156 = vector.load %arg5[%c0_85, %c0_86] : memref<256x128xf32, #tpu.memory_space<vmem>>, vector<256x128xf32>
    %cst_87 = arith.constant dense<0.000000e+00> : vector<8x128xf32>
    %157 = tpu.matmul %153, %156, %cst_87 {dimension_numbers = #tpu.dot_dimension_numbers<[1], [0], [0], [1], [0, 0, 1, 1], [], []>} : vector<8x256xf32>, vector<256x128xf32>, vector<8x128xf32> -> vector<8x128xf32>
    %158 = vector.extract_strided_slice %155 {offsets = [0, 0], sizes = [8, 128], strides = [1, 1]} : vector<8x256xf32> to vector<8x128xf32>
    %159 = vector.broadcast %3 : vector<1x128xf32> to vector<8x128xf32>
    %160 = arith.addf %158, %159 : vector<8x128xf32>
    %161 = vector.extract_strided_slice %155 {offsets = [0, 128], sizes = [8, 128], strides = [1, 1]} : vector<8x256xf32> to vector<8x128xf32>
    %162 = vector.broadcast %4 : vector<1x128xf32> to vector<8x128xf32>
    %163 = arith.addf %161, %162 : vector<8x128xf32>
    %164 = arith.negf %163 : vector<8x128xf32>
    %165 = math.exp %164 : vector<8x128xf32>
    %cst_88 = arith.constant 1.000000e+00 : f32
    %166 = vector.broadcast %cst_88 : f32 to vector<8x128xf32>
    %167 = arith.addf %166, %165 : vector<8x128xf32>
    %168 = arith.divf %166, %167 : vector<8x128xf32>
    %169 = math.exp %157 : vector<8x128xf32>
    %170 = vector.broadcast %5 : vector<1x128xf32> to vector<8x128xf32>
    %171 = arith.addf %169, %170 : vector<8x128xf32>
    %172 = arith.subf %160, %171 : vector<8x128xf32>
    %173 = arith.mulf %168, %172 : vector<8x128xf32>
    %174 = arith.addf %171, %173 : vector<8x128xf32>
    %175 = math.tanh %174 : vector<8x128xf32>
    %c0_89 = arith.constant 0 : index
    %c128_90 = arith.constant 128 : index
    %176 = vector.load %arg8[%c0_89, %c128_90] : memref<8x256xf32, #tpu.memory_space<vmem>>, vector<8x128xf32>
    tpu.vector_store %arg8[%c0_89, %c128_90], %175 {strides = array<i32>} : memref<8x256xf32, #tpu.memory_space<vmem>>, vector<8x128xf32>,
    %177 = arith.index_cast %c4_i32 : i32 to index
    %c0_91 = arith.constant 0 : index
    %c0_92 = arith.constant 0 : index
    %178 = vector.load %arg7[%177, %c0_91, %c0_92] : memref<8x8x128xf32, #tpu.memory_space<vmem>>, vector<1x8x128xf32>
    %179 = vector.shape_cast %178 : vector<1x8x128xf32> to vector<8x128xf32>
    %180 = vector.shape_cast %175 : vector<8x128xf32> to vector<1x8x128xf32>
    tpu.vector_store %arg7[%177, %c0_91, %c0_92], %180 {strides = array<i32>} : memref<8x8x128xf32, #tpu.memory_space<vmem>>, vector<1x8x128xf32>,
    %c5_i32 = arith.constant 5 : i32
    %181 = arith.index_cast %c5_i32 : i32 to index
    %c0_93 = arith.constant 0 : index
    %c0_94 = arith.constant 0 : index
    %182 = vector.load %arg2[%181, %c0_93, %c0_94] : memref<8x8x4xf32, #tpu.memory_space<vmem>>, vector<1x8x4xf32>
    %183 = vector.shape_cast %182 : vector<1x8x4xf32> to vector<8x4xf32>
    %c0_95 = arith.constant 0 : index
    %c0_96 = arith.constant 0 : index
    %184 = vector.load %arg8[%c0_95, %c0_96] : memref<8x256xf32, #tpu.memory_space<vmem>>, vector<8x4xf32>
    tpu.vector_store %arg8[%c0_95, %c0_96], %183 {strides = array<i32>} : memref<8x256xf32, #tpu.memory_space<vmem>>, vector<8x4xf32>,
    %c0_97 = arith.constant 0 : index
    %c0_98 = arith.constant 0 : index
    %185 = vector.load %arg8[%c0_97, %c0_98] : memref<8x256xf32, #tpu.memory_space<vmem>>, vector<8x256xf32>
    %cst_99 = arith.constant 9.99999997E-7 : f32
    %186 = vector.broadcast %cst_99 : f32 to vector<8x256xf32>
    %187 = arith.addf %185, %186 : vector<8x256xf32>
    %188 = math.log %187 : vector<8x256xf32>
    %c0_100 = arith.constant 0 : index
    %c0_101 = arith.constant 0 : index
    %189 = vector.load %arg4[%c0_100, %c0_101] : memref<256x256xf32, #tpu.memory_space<vmem>>, vector<256x256xf32>
    %cst_102 = arith.constant dense<0.000000e+00> : vector<8x256xf32>
    %190 = tpu.matmul %185, %189, %cst_102 {dimension_numbers = #tpu.dot_dimension_numbers<[1], [0], [0], [1], [0, 0, 1, 1], [], []>} : vector<8x256xf32>, vector<256x256xf32>, vector<8x256xf32> -> vector<8x256xf32>
    %c0_103 = arith.constant 0 : index
    %c0_104 = arith.constant 0 : index
    %191 = vector.load %arg5[%c0_103, %c0_104] : memref<256x128xf32, #tpu.memory_space<vmem>>, vector<256x128xf32>
    %cst_105 = arith.constant dense<0.000000e+00> : vector<8x128xf32>
    %192 = tpu.matmul %188, %191, %cst_105 {dimension_numbers = #tpu.dot_dimension_numbers<[1], [0], [0], [1], [0, 0, 1, 1], [], []>} : vector<8x256xf32>, vector<256x128xf32>, vector<8x128xf32> -> vector<8x128xf32>
    %193 = vector.extract_strided_slice %190 {offsets = [0, 0], sizes = [8, 128], strides = [1, 1]} : vector<8x256xf32> to vector<8x128xf32>
    %194 = vector.broadcast %3 : vector<1x128xf32> to vector<8x128xf32>
    %195 = arith.addf %193, %194 : vector<8x128xf32>
    %196 = vector.extract_strided_slice %190 {offsets = [0, 128], sizes = [8, 128], strides = [1, 1]} : vector<8x256xf32> to vector<8x128xf32>
    %197 = vector.broadcast %4 : vector<1x128xf32> to vector<8x128xf32>
    %198 = arith.addf %196, %197 : vector<8x128xf32>
    %199 = arith.negf %198 : vector<8x128xf32>
    %200 = math.exp %199 : vector<8x128xf32>
    %cst_106 = arith.constant 1.000000e+00 : f32
    %201 = vector.broadcast %cst_106 : f32 to vector<8x128xf32>
    %202 = arith.addf %201, %200 : vector<8x128xf32>
    %203 = arith.divf %201, %202 : vector<8x128xf32>
    %204 = math.exp %192 : vector<8x128xf32>
    %205 = vector.broadcast %5 : vector<1x128xf32> to vector<8x128xf32>
    %206 = arith.addf %204, %205 : vector<8x128xf32>
    %207 = arith.subf %195, %206 : vector<8x128xf32>
    %208 = arith.mulf %203, %207 : vector<8x128xf32>
    %209 = arith.addf %206, %208 : vector<8x128xf32>
    %210 = math.tanh %209 : vector<8x128xf32>
    %c0_107 = arith.constant 0 : index
    %c128_108 = arith.constant 128 : index
    %211 = vector.load %arg8[%c0_107, %c128_108] : memref<8x256xf32, #tpu.memory_space<vmem>>, vector<8x128xf32>
    tpu.vector_store %arg8[%c0_107, %c128_108], %210 {strides = array<i32>} : memref<8x256xf32, #tpu.memory_space<vmem>>, vector<8x128xf32>,
    %212 = arith.index_cast %c5_i32 : i32 to index
    %c0_109 = arith.constant 0 : index
    %c0_110 = arith.constant 0 : index
    %213 = vector.load %arg7[%212, %c0_109, %c0_110] : memref<8x8x128xf32, #tpu.memory_space<vmem>>, vector<1x8x128xf32>
    %214 = vector.shape_cast %213 : vector<1x8x128xf32> to vector<8x128xf32>
    %215 = vector.shape_cast %210 : vector<8x128xf32> to vector<1x8x128xf32>
    tpu.vector_store %arg7[%212, %c0_109, %c0_110], %215 {strides = array<i32>} : memref<8x8x128xf32, #tpu.memory_space<vmem>>, vector<1x8x128xf32>,
    %c6_i32 = arith.constant 6 : i32
    %216 = arith.index_cast %c6_i32 : i32 to index
    %c0_111 = arith.constant 0 : index
    %c0_112 = arith.constant 0 : index
    %217 = vector.load %arg2[%216, %c0_111, %c0_112] : memref<8x8x4xf32, #tpu.memory_space<vmem>>, vector<1x8x4xf32>
    %218 = vector.shape_cast %217 : vector<1x8x4xf32> to vector<8x4xf32>
    %c0_113 = arith.constant 0 : index
    %c0_114 = arith.constant 0 : index
    %219 = vector.load %arg8[%c0_113, %c0_114] : memref<8x256xf32, #tpu.memory_space<vmem>>, vector<8x4xf32>
    tpu.vector_store %arg8[%c0_113, %c0_114], %218 {strides = array<i32>} : memref<8x256xf32, #tpu.memory_space<vmem>>, vector<8x4xf32>,
    %c0_115 = arith.constant 0 : index
    %c0_116 = arith.constant 0 : index
    %220 = vector.load %arg8[%c0_115, %c0_116] : memref<8x256xf32, #tpu.memory_space<vmem>>, vector<8x256xf32>
    %cst_117 = arith.constant 9.99999997E-7 : f32
    %221 = vector.broadcast %cst_117 : f32 to vector<8x256xf32>
    %222 = arith.addf %220, %221 : vector<8x256xf32>
    %223 = math.log %222 : vector<8x256xf32>
    %c0_118 = arith.constant 0 : index
    %c0_119 = arith.constant 0 : index
    %224 = vector.load %arg4[%c0_118, %c0_119] : memref<256x256xf32, #tpu.memory_space<vmem>>, vector<256x256xf32>
    %cst_120 = arith.constant dense<0.000000e+00> : vector<8x256xf32>
    %225 = tpu.matmul %220, %224, %cst_120 {dimension_numbers = #tpu.dot_dimension_numbers<[1], [0], [0], [1], [0, 0, 1, 1], [], []>} : vector<8x256xf32>, vector<256x256xf32>, vector<8x256xf32> -> vector<8x256xf32>
    %c0_121 = arith.constant 0 : index
    %c0_122 = arith.constant 0 : index
    %226 = vector.load %arg5[%c0_121, %c0_122] : memref<256x128xf32, #tpu.memory_space<vmem>>, vector<256x128xf32>
    %cst_123 = arith.constant dense<0.000000e+00> : vector<8x128xf32>
    %227 = tpu.matmul %223, %226, %cst_123 {dimension_numbers = #tpu.dot_dimension_numbers<[1], [0], [0], [1], [0, 0, 1, 1], [], []>} : vector<8x256xf32>, vector<256x128xf32>, vector<8x128xf32> -> vector<8x128xf32>
    %228 = vector.extract_strided_slice %225 {offsets = [0, 0], sizes = [8, 128], strides = [1, 1]} : vector<8x256xf32> to vector<8x128xf32>
    %229 = vector.broadcast %3 : vector<1x128xf32> to vector<8x128xf32>
    %230 = arith.addf %228, %229 : vector<8x128xf32>
    %231 = vector.extract_strided_slice %225 {offsets = [0, 128], sizes = [8, 128], strides = [1, 1]} : vector<8x256xf32> to vector<8x128xf32>
    %232 = vector.broadcast %4 : vector<1x128xf32> to vector<8x128xf32>
    %233 = arith.addf %231, %232 : vector<8x128xf32>
    %234 = arith.negf %233 : vector<8x128xf32>
    %235 = math.exp %234 : vector<8x128xf32>
    %cst_124 = arith.constant 1.000000e+00 : f32
    %236 = vector.broadcast %cst_124 : f32 to vector<8x128xf32>
    %237 = arith.addf %236, %235 : vector<8x128xf32>
    %238 = arith.divf %236, %237 : vector<8x128xf32>
    %239 = math.exp %227 : vector<8x128xf32>
    %240 = vector.broadcast %5 : vector<1x128xf32> to vector<8x128xf32>
    %241 = arith.addf %239, %240 : vector<8x128xf32>
    %242 = arith.subf %230, %241 : vector<8x128xf32>
    %243 = arith.mulf %238, %242 : vector<8x128xf32>
    %244 = arith.addf %241, %243 : vector<8x128xf32>
    %245 = math.tanh %244 : vector<8x128xf32>
    %c0_125 = arith.constant 0 : index
    %c128_126 = arith.constant 128 : index
    %246 = vector.load %arg8[%c0_125, %c128_126] : memref<8x256xf32, #tpu.memory_space<vmem>>, vector<8x128xf32>
    tpu.vector_store %arg8[%c0_125, %c128_126], %245 {strides = array<i32>} : memref<8x256xf32, #tpu.memory_space<vmem>>, vector<8x128xf32>,
    %247 = arith.index_cast %c6_i32 : i32 to index
    %c0_127 = arith.constant 0 : index
    %c0_128 = arith.constant 0 : index
    %248 = vector.load %arg7[%247, %c0_127, %c0_128] : memref<8x8x128xf32, #tpu.memory_space<vmem>>, vector<1x8x128xf32>
    %249 = vector.shape_cast %248 : vector<1x8x128xf32> to vector<8x128xf32>
    %250 = vector.shape_cast %245 : vector<8x128xf32> to vector<1x8x128xf32>
    tpu.vector_store %arg7[%247, %c0_127, %c0_128], %250 {strides = array<i32>} : memref<8x8x128xf32, #tpu.memory_space<vmem>>, vector<1x8x128xf32>,
    %c7_i32 = arith.constant 7 : i32
    %251 = arith.index_cast %c7_i32 : i32 to index
    %c0_129 = arith.constant 0 : index
    %c0_130 = arith.constant 0 : index
    %252 = vector.load %arg2[%251, %c0_129, %c0_130] : memref<8x8x4xf32, #tpu.memory_space<vmem>>, vector<1x8x4xf32>
    %253 = vector.shape_cast %252 : vector<1x8x4xf32> to vector<8x4xf32>
    %c0_131 = arith.constant 0 : index
    %c0_132 = arith.constant 0 : index
    %254 = vector.load %arg8[%c0_131, %c0_132] : memref<8x256xf32, #tpu.memory_space<vmem>>, vector<8x4xf32>
    tpu.vector_store %arg8[%c0_131, %c0_132], %253 {strides = array<i32>} : memref<8x256xf32, #tpu.memory_space<vmem>>, vector<8x4xf32>,
    %c0_133 = arith.constant 0 : index
    %c0_134 = arith.constant 0 : index
    %255 = vector.load %arg8[%c0_133, %c0_134] : memref<8x256xf32, #tpu.memory_space<vmem>>, vector<8x256xf32>
    %cst_135 = arith.constant 9.99999997E-7 : f32
    %256 = vector.broadcast %cst_135 : f32 to vector<8x256xf32>
    %257 = arith.addf %255, %256 : vector<8x256xf32>
    %258 = math.log %257 : vector<8x256xf32>
    %c0_136 = arith.constant 0 : index
    %c0_137 = arith.constant 0 : index
    %259 = vector.load %arg4[%c0_136, %c0_137] : memref<256x256xf32, #tpu.memory_space<vmem>>, vector<256x256xf32>
    %cst_138 = arith.constant dense<0.000000e+00> : vector<8x256xf32>
    %260 = tpu.matmul %255, %259, %cst_138 {dimension_numbers = #tpu.dot_dimension_numbers<[1], [0], [0], [1], [0, 0, 1, 1], [], []>} : vector<8x256xf32>, vector<256x256xf32>, vector<8x256xf32> -> vector<8x256xf32>
    %c0_139 = arith.constant 0 : index
    %c0_140 = arith.constant 0 : index
    %261 = vector.load %arg5[%c0_139, %c0_140] : memref<256x128xf32, #tpu.memory_space<vmem>>, vector<256x128xf32>
    %cst_141 = arith.constant dense<0.000000e+00> : vector<8x128xf32>
    %262 = tpu.matmul %258, %261, %cst_141 {dimension_numbers = #tpu.dot_dimension_numbers<[1], [0], [0], [1], [0, 0, 1, 1], [], []>} : vector<8x256xf32>, vector<256x128xf32>, vector<8x128xf32> -> vector<8x128xf32>
    %263 = vector.extract_strided_slice %260 {offsets = [0, 0], sizes = [8, 128], strides = [1, 1]} : vector<8x256xf32> to vector<8x128xf32>
    %264 = vector.broadcast %3 : vector<1x128xf32> to vector<8x128xf32>
    %265 = arith.addf %263, %264 : vector<8x128xf32>
    %266 = vector.extract_strided_slice %260 {offsets = [0, 128], sizes = [8, 128], strides = [1, 1]} : vector<8x256xf32> to vector<8x128xf32>
    %267 = vector.broadcast %4 : vector<1x128xf32> to vector<8x128xf32>
    %268 = arith.addf %266, %267 : vector<8x128xf32>
    %269 = arith.negf %268 : vector<8x128xf32>
    %270 = math.exp %269 : vector<8x128xf32>
    %cst_142 = arith.constant 1.000000e+00 : f32
    %271 = vector.broadcast %cst_142 : f32 to vector<8x128xf32>
    %272 = arith.addf %271, %270 : vector<8x128xf32>
    %273 = arith.divf %271, %272 : vector<8x128xf32>
    %274 = math.exp %262 : vector<8x128xf32>
    %275 = vector.broadcast %5 : vector<1x128xf32> to vector<8x128xf32>
    %276 = arith.addf %274, %275 : vector<8x128xf32>
    %277 = arith.subf %265, %276 : vector<8x128xf32>
    %278 = arith.mulf %273, %277 : vector<8x128xf32>
    %279 = arith.addf %276, %278 : vector<8x128xf32>
    %280 = math.tanh %279 : vector<8x128xf32>
    %c0_143 = arith.constant 0 : index
    %c128_144 = arith.constant 128 : index
    %281 = vector.load %arg8[%c0_143, %c128_144] : memref<8x256xf32, #tpu.memory_space<vmem>>, vector<8x128xf32>
    tpu.vector_store %arg8[%c0_143, %c128_144], %280 {strides = array<i32>} : memref<8x256xf32, #tpu.memory_space<vmem>>, vector<8x128xf32>,
    %282 = arith.index_cast %c7_i32 : i32 to index
    %c0_145 = arith.constant 0 : index
    %c0_146 = arith.constant 0 : index
    %283 = vector.load %arg7[%282, %c0_145, %c0_146] : memref<8x8x128xf32, #tpu.memory_space<vmem>>, vector<1x8x128xf32>
    %284 = vector.shape_cast %283 : vector<1x8x128xf32> to vector<8x128xf32>
    %285 = vector.shape_cast %280 : vector<8x128xf32> to vector<1x8x128xf32>
    tpu.vector_store %arg7[%282, %c0_145, %c0_146], %285 {strides = array<i32>} : memref<8x8x128xf32, #tpu.memory_space<vmem>>, vector<1x8x128xf32>,
    %c8_i32 = arith.constant 8 : i32
    return
  }
  func.func @transform_0(%arg0: i32, %arg1: i32) -> (i32, i32, i32) {
    %c0_i32 = arith.constant 0 : i32
    %c0_i32_0 = arith.constant 0 : i32
    return %arg1, %arg0, %c0_i32 : i32, i32, i32
  }
  func.func @transform_1(%arg0: i32, %arg1: i32) -> (i32, i32) {
    %c0_i32 = arith.constant 0 : i32
    %c0_i32_0 = arith.constant 0 : i32
    return %arg0, %c0_i32 : i32, i32
  }
  func.func @transform_2(%arg0: i32, %arg1: i32) -> (i32, i32) {
    %c0_i32 = arith.constant 0 : i32
    %c0_i32_0 = arith.constant 0 : i32
    %c0_i32_1 = arith.constant 0 : i32
    return %c0_i32, %c0_i32_0 : i32, i32
  }
  func.func @transform_3(%arg0: i32, %arg1: i32) -> (i32, i32) {
    %c0_i32 = arith.constant 0 : i32
    %c0_i32_0 = arith.constant 0 : i32
    %c0_i32_1 = arith.constant 0 : i32
    return %c0_i32, %c0_i32_0 : i32, i32
  }
  func.func @transform_4(%arg0: i32, %arg1: i32) -> (i32, i32) {
    %c0_i32 = arith.constant 0 : i32
    %c0_i32_0 = arith.constant 0 : i32
    %c0_i32_1 = arith.constant 0 : i32
    return %c0_i32, %c0_i32_0 : i32, i32
  }
  func.func @transform_5(%arg0: i32, %arg1: i32) -> (i32, i32, i32) {
    %c0_i32 = arith.constant 0 : i32
    %c0_i32_0 = arith.constant 0 : i32
    return %arg1, %arg0, %c0_i32 : i32, i32, i32
  }
}

</mosaic_0001>

<llo_original>
// kernel: tpu_custom_call.1
$region0: #{tpu_custom_call.1}
  #allocation0 [shape = 'u32[]', space=smem, size = 0x4, offset = 0x4, fixed_abs, tag = 'smem constant byte address 0x4 - core index']
  #allocation1 [shape = 'u32[144,128]{1,0:T(1,128)}', space=vmem, size = 0x12000, scoped, tag = 'internal scratch']
  #allocation2 [shape = 'f32[8,256]{1,0:T(8,128)}', space=vmem, size = 0x2000, scoped, tag = 'scratch operand']
  %s0 = inlined_call_operand.vmem [shape: f32[8,8,4], index: 0, kind: input, shape index: {}]
  %s1 = inlined_call_operand.vmem [shape: f32[8,128], index: 1, kind: input, shape index: {}]
  %s2 = inlined_call_operand.hbm [shape: f32[256,256], index: 2, kind: input, shape index: {}]
  %s3 = inlined_call_operand.hbm [shape: f32[256,128], index: 3, kind: input, shape index: {}]
  %s4 = inlined_call_operand.vmem [shape: f32[3,128], index: 4, kind: input, shape index: {}]
  %s5 = inlined_call_operand.hbm [shape: f32[8,8,128], index: 5, kind: output, shape index: {}]
  %s6 = sld [smem:[#allocation0]]
  $region42: #{tpu_custom_call.1} parent=0
    _
  %s8 = ssub.s32 1, %s6
  %s9 = scalar_select 0, %s8, %s6
  $region1: #{tpu_custom_call.1} parent=0
    #allocation3 [shape = 'u8[262144]{0}', space=vmem, size = 0x40000, scoped, tag = 'input window, operand 2, single buffered']
    #allocation4 [shape = 's32[1]{0}', space=sflag, size = 0x4, scoped, tag = 'scoped memory for tpu_custom_call.1']
    #allocation5 [shape = 's32[1]{0}', space=sflag, size = 0x4, scoped, tag = 'scoped memory for tpu_custom_call.1']
    #allocation6 [shape = 'u8[131072]{0}', space=vmem, size = 0x20000, scoped, tag = 'input window, operand 3, single buffered']
    #allocation7 [shape = 's32[1]{0}', space=sflag, size = 0x4, scoped, tag = 'scoped memory for tpu_custom_call.1']
    #allocation8 [shape = 'u8[32768]{0}', space=vmem, size = 0x8000, scoped, tag = 'output window, operand 0, single buffered']
    %10 = vsyncpa [#allocation4], 0
    %11 = vsyncpa [#allocation7], 0
    %12 = vsyncpa [#allocation5], 0
    // Predicated region
    $region2: #{tpu_custom_call.1} parent=1 // pred_check
      _
    $region3: #{tpu_custom_call.1} parent=1 // pred_check_branch
      %14 = sbr.rel (0) target = $region5
    $region4: #{tpu_custom_call.1} parent=1 // pred_region
      _
    $region5: #{tpu_custom_call.1} parent=1 // pred_fallthru
      _
    // Predicated region
    $region6: #{tpu_custom_call.1} parent=1 // pred_check
      _
    $region7: #{tpu_custom_call.1} parent=1 // pred_check_branch
      %16 = sbr.rel (0) target = $region9
    $region8: #{tpu_custom_call.1} parent=1 // pred_region
      _
    $region9: #{tpu_custom_call.1} parent=1 // pred_fallthru
      _
    // Predicated region
    $region10: #{tpu_custom_call.1} parent=1 // pred_check
      _
    $region11: #{tpu_custom_call.1} parent=1 // pred_check_branch
      %18 = sbr.rel (0) target = $region13
    $region12: #{tpu_custom_call.1} parent=1 // pred_region
      %s20 = ssub.s32 8192, 8192
      %21 = vsyncadd [#allocation4], %s20
      %s22 = sshll.u32 [#allocation3], 4
      %s23 = int_to_ptr.vmem [resolvable:$true] %s22
      %28 = dma.hbm_to_vmem [thread:$0]  %s2, 8192, %s23, [#allocation4], 256, 256, 16
    $region13: #{tpu_custom_call.1} parent=1 // pred_fallthru
      _
    // Predicated region
    $region14: #{tpu_custom_call.1} parent=1 // pred_check
      _
    $region15: #{tpu_custom_call.1} parent=1 // pred_check_branch
      %30 = sbr.rel (0) target = $region17
    $region16: #{tpu_custom_call.1} parent=1 // pred_region
      %s32 = ssub.s32 4096, 4096
      %33 = vsyncadd [#allocation7], %s32
      %s34 = sshll.u32 [#allocation6], 4
      %s35 = int_to_ptr.vmem [resolvable:$true] %s34
      %40 = dma.hbm_to_vmem [thread:$0]  %s3, 4096, %s35, [#allocation7], 128, 128, 8
    $region17: #{tpu_custom_call.1} parent=1 // pred_fallthru
      _
    // Predicated region
    $region18: #{tpu_custom_call.1} parent=1 // pred_check
      _
    $region19: #{tpu_custom_call.1} parent=1 // pred_check_branch
      %42 = sbr.rel (0) target = $region21
    $region20: #{tpu_custom_call.1} parent=1 // pred_region
      _
    $region21: #{tpu_custom_call.1} parent=1 // pred_fallthru
      _
    // Predicated region
    $region22: #{tpu_custom_call.1} parent=1 // pred_check
      _
    $region23: #{tpu_custom_call.1} parent=1 // pred_check_branch
      %44 = sbr.rel (0) target = $region25
    $region24: #{tpu_custom_call.1} parent=1 // pred_region
      %45 = dma.done [#allocation4], 8192
    $region25: #{tpu_custom_call.1} parent=1 // pred_fallthru
      _
    // Predicated region
    $region26: #{tpu_custom_call.1} parent=1 // pred_check
      _
    $region27: #{tpu_custom_call.1} parent=1 // pred_check_branch
      %47 = sbr.rel (0) target = $region29
    $region28: #{tpu_custom_call.1} parent=1 // pred_region
      %48 = dma.done [#allocation7], 4096
    $region29: #{tpu_custom_call.1} parent=1 // pred_fallthru
      _
    %p49 = scmp.eq.s32.totalorder 0, 0
    // Predicated region
    $region30: #{tpu_custom_call.1} parent=1 // pred_check
      %p50 = pneg %p49
    $region31: #{tpu_custom_call.1} parent=1 // pred_check_branch
      %52 = sbr.rel (%p50) target = $region33
    $region32: #{tpu_custom_call.1} parent=1 // pred_region
      %53 = vst [vmem:[#allocation2] sm:$0xff] 0.0
      %54 = vst [vmem:[#allocation2 + $0x8] sm:$0xff] 0.0
      %v55 = vld [vmem:[%s1] sm:$0xff]
      %56 = vst [vmem:[#allocation2 + $0x8] sm:$0xff] %v55
    $region33: #{tpu_custom_call.1} parent=1 // pred_fallthru
      _
    %v57 = vld [vmem:[%s4] sm:$0x1]
    %v58 = vld [vmem:[%s4 + $0x1] sm:$0x1]
    %v59 = vld [vmem:[%s4 + $0x2] sm:$0x1]
    %v60 = vld [vmem:[%s0] sm:$0xff]
    %vm61 = vcmask 31744
    %62 = vst.msk [vmem:[#allocation2] sm:$0xff] %vm61, %v60
    %v63 = vld [vmem:[#allocation2] sm:$0xff]
    %v64 = vld [vmem:[#allocation2 + $0x8] sm:$0xff]
    %v65 = vadd.f32 %v63, 1e-06
    %v66 = vadd.f32 %v64, 1e-06
    %v67 = vlog2.pop %v65
    %v68 = vmul.f32 %v67, 0.6931472
    %v69 = vlog2.pop %v66
    %v70 = vmul.f32 %v69, 0.6931472
    %v71 = vld [vmem:[#allocation3] sm:$0xff]
    %v72 = vld [vmem:[#allocation3 + $0x8] sm:$0xff]
    %v73 = vld [vmem:[#allocation3 + $0x10] sm:$0xff]
    %v74 = vld [vmem:[#allocation3 + $0x18] sm:$0xff]
    %v75 = vld [vmem:[#allocation3 + $0x20] sm:$0xff]
    %v76 = vld [vmem:[#allocation3 + $0x28] sm:$0xff]
    %v77 = vld [vmem:[#allocation3 + $0x30] sm:$0xff]
    %v78 = vld [vmem:[#allocation3 + $0x38] sm:$0xff]
    %v79 = vld [vmem:[#allocation3 + $0x40] sm:$0xff]
    %v80 = vld [vmem:[#allocation3 + $0x48] sm:$0xff]
    %v81 = vld [vmem:[#allocation3 + $0x50] sm:$0xff]
    %v82 = vld [vmem:[#allocation3 + $0x58] sm:$0xff]
    %v83 = vld [vmem:[#allocation3 + $0x60] sm:$0xff]
    %v84 = vld [vmem:[#allocation3 + $0x68] sm:$0xff]
    %v85 = vld [vmem:[#allocation3 + $0x70] sm:$0xff]
    %v86 = vld [vmem:[#allocation3 + $0x78] sm:$0xff]
    %v87 = vld [vmem:[#allocation3 + $0x80] sm:$0xff]
    %v88 = vld [vmem:[#allocation3 + $0x88] sm:$0xff]
    %v89 = vld [vmem:[#allocation3 + $0x90] sm:$0xff]
    %v90 = vld [vmem:[#allocation3 + $0x98] sm:$0xff]
    %v91 = vld [vmem:[#allocation3 + $0xa0] sm:$0xff]
    %v92 = vld [vmem:[#allocation3 + $0xa8] sm:$0xff]
    %v93 = vld [vmem:[#allocation3 + $0xb0] sm:$0xff]
    %v94 = vld [vmem:[#allocation3 + $0xb8] sm:$0xff]
    %v95 = vld [vmem:[#allocation3 + $0xc0] sm:$0xff]
    %v96 = vld [vmem:[#allocation3 + $0xc8] sm:$0xff]
    %v97 = vld [vmem:[#allocation3 + $0xd0] sm:$0xff]
    %v98 = vld [vmem:[#allocation3 + $0xd8] sm:$0xff]
    %v99 = vld [vmem:[#allocation3 + $0xe0] sm:$0xff]
    %v100 = vld [vmem:[#allocation3 + $0xe8] sm:$0xff]
    %v101 = vld [vmem:[#allocation3 + $0xf0] sm:$0xff]
    %v102 = vld [vmem:[#allocation3 + $0xf8] sm:$0xff]
    %v103 = vld [vmem:[#allocation3 + $0x100] sm:$0xff]
    %v104 = vld [vmem:[#allocation3 + $0x108] sm:$0xff]
    %v105 = vld [vmem:[#allocation3 + $0x110] sm:$0xff]
    %v106 = vld [vmem:[#allocation3 + $0x118] sm:$0xff]
    %v107 = vld [vmem:[#allocation3 + $0x120] sm:$0xff]
    %v108 = vld [vmem:[#allocation3 + $0x128] sm:$0xff]
    %v109 = vld [vmem:[#allocation3 + $0x130] sm:$0xff]
    %v110 = vld [vmem:[#allocation3 + $0x138] sm:$0xff]
    %v111 = vld [vmem:[#allocation3 + $0x140] sm:$0xff]
    %v112 = vld [vmem:[#allocation3 + $0x148] sm:$0xff]
    %v113 = vld [vmem:[#allocation3 + $0x150] sm:$0xff]
    %v114 = vld [vmem:[#allocation3 + $0x158] sm:$0xff]
    %v115 = vld [vmem:[#allocation3 + $0x160] sm:$0xff]
    %v116 = vld [vmem:[#allocation3 + $0x168] sm:$0xff]
    %v117 = vld [vmem:[#allocation3 + $0x170] sm:$0xff]
    %v118 = vld [vmem:[#allocation3 + $0x178] sm:$0xff]
    %v119 = vld [vmem:[#allocation3 + $0x180] sm:$0xff]
    %v120 = vld [vmem:[#allocation3 + $0x188] sm:$0xff]
    %v121 = vld [vmem:[#allocation3 + $0x190] sm:$0xff]
    %v122 = vld [vmem:[#allocation3 + $0x198] sm:$0xff]
    %v123 = vld [vmem:[#allocation3 + $0x1a0] sm:$0xff]
    %v124 = vld [vmem:[#allocation3 + $0x1a8] sm:$0xff]
    %v125 = vld [vmem:[#allocation3 + $0x1b0] sm:$0xff]
    %v126 = vld [vmem:[#allocation3 + $0x1b8] sm:$0xff]
    %v127 = vld [vmem:[#allocation3 + $0x1c0] sm:$0xff]
    %v128 = vld [vmem:[#allocation3 + $0x1c8] sm:$0xff]
    %v129 = vld [vmem:[#allocation3 + $0x1d0] sm:$0xff]
    %v130 = vld [vmem:[#allocation3 + $0x1d8] sm:$0xff]
    %v131 = vld [vmem:[#allocation3 + $0x1e0] sm:$0xff]
    %v132 = vld [vmem:[#allocation3 + $0x1e8] sm:$0xff]
    %v133 = vld [vmem:[#allocation3 + $0x1f0] sm:$0xff]
    %v134 = vld [vmem:[#allocation3 + $0x1f8] sm:$0xff]
    %135 = vmatprep.subr.mxu0 %v72
    %136 = vmatpush1.msra.mxu0 %v71
    %137 = vmatprep.subr.mxu0 %v74
    %138 = vmatpush1.msra.mxu0 %v73
    %139 = vmatprep.subr.mxu0 %v76
    %140 = vmatpush1.msra.mxu0 %v75
    %141 = vmatprep.subr.mxu0 %v78
    %142 = vmatpush1.msra.mxu0 %v77
    %143 = vmatprep.subr.mxu0 %v80
    %144 = vmatpush1.msra.mxu0 %v79
    %145 = vmatprep.subr.mxu0 %v82
    %146 = vmatpush1.msra.mxu0 %v81
    %147 = vmatprep.subr.mxu0 %v84
    %148 = vmatpush1.msra.mxu0 %v83
    %149 = vmatprep.subr.mxu0 %v86
    %150 = vmatpush1.msra.mxu0 %v85
    %151 = vmatprep.subr.mxu0 %v88
    %152 = vmatpush1.msra.mxu0 %v87
    %153 = vmatprep.subr.mxu0 %v90
    %154 = vmatpush1.msra.mxu0 %v89
    %155 = vmatprep.subr.mxu0 %v92
    %156 = vmatpush1.msra.mxu0 %v91
    %157 = vmatprep.subr.mxu0 %v94
    %158 = vmatpush1.msra.mxu0 %v93
    %159 = vmatprep.subr.mxu0 %v96
    %160 = vmatpush1.msra.mxu0 %v95
    %161 = vmatprep.subr.mxu0 %v98
    %162 = vmatpush1.msra.mxu0 %v97
    %163 = vmatprep.subr.mxu0 %v100
    %164 = vmatpush1.msra.mxu0 %v99
    %165 = vmatprep.subr.mxu0 %v102
    %166 = vmatpush1.msra.mxu0 %v101
    %167 = vmatprep.subr.mxu0 %v104
    %168 = vmatpush1.msra.mxu0 %v103
    %169 = vmatprep.subr.mxu0 %v106
    %170 = vmatpush1.msra.mxu0 %v105
    %171 = vmatprep.subr.mxu0 %v108
    %172 = vmatpush1.msra.mxu0 %v107
    %173 = vmatprep.subr.mxu0 %v110
    %174 = vmatpush1.msra.mxu0 %v109
    %175 = vmatprep.subr.mxu0 %v112
    %176 = vmatpush1.msra.mxu0 %v111
    %177 = vmatprep.subr.mxu0 %v114
    %178 = vmatpush1.msra.mxu0 %v113
    %179 = vmatprep.subr.mxu0 %v116
    %180 = vmatpush1.msra.mxu0 %v115
    %181 = vmatprep.subr.mxu0 %v118
    %182 = vmatpush1.msra.mxu0 %v117
    %183 = vmatprep.subr.mxu0 %v120
    %184 = vmatpush1.msra.mxu0 %v119
    %185 = vmatprep.subr.mxu0 %v122
    %186 = vmatpush1.msra.mxu0 %v121
    %187 = vmatprep.subr.mxu0 %v124
    %188 = vmatpush1.msra.mxu0 %v123
    %189 = vmatprep.subr.mxu0 %v126
    %190 = vmatpush1.msra.mxu0 %v125
    %191 = vmatprep.subr.mxu0 %v128
    %192 = vmatpush1.msra.mxu0 %v127
    %193 = vmatprep.subr.mxu0 %v130
    %194 = vmatpush1.msra.mxu0 %v129
    %195 = vmatprep.subr.mxu0 %v132
    %196 = vmatpush1.msra.mxu0 %v131
    %197 = vmatprep.subr.mxu0 %v134
    %198 = vmatpush1.msra.mxu0 %v133
    %199 = vmatprep.mubr.f32.mxu0 %v64
    %200 = vmatmul.mubr.f32.gmra.mrb[0].mxu0 %v63
    %v201 = vpop.f32.mrb[0].mxu0
    %v202 = vadd.f32 0.0, %v201
    %v203 = vpop.f32.mrb[0].mxu0
    %v204 = vadd.f32 0.0, %v203
    %205 = vdwg.mxu0
    %v206 = vld [vmem:[#allocation6] sm:$0xff]
    %v207 = vld [vmem:[#allocation6 + $0x8] sm:$0xff]
    %v208 = vld [vmem:[#allocation6 + $0x10] sm:$0xff]
    %v209 = vld [vmem:[#allocation6 + $0x18] sm:$0xff]
    %v210 = vld [vmem:[#allocation6 + $0x20] sm:$0xff]
    %v211 = vld [vmem:[#allocation6 + $0x28] sm:$0xff]
    %v212 = vld [vmem:[#allocation6 + $0x30] sm:$0xff]
    %v213 = vld [vmem:[#allocation6 + $0x38] sm:$0xff]
    %v214 = vld [vmem:[#allocation6 + $0x40] sm:$0xff]
    %v215 = vld [vmem:[#allocation6 + $0x48] sm:$0xff]
    %v216 = vld [vmem:[#allocation6 + $0x50] sm:$0xff]
    %v217 = vld [vmem:[#allocation6 + $0x58] sm:$0xff]
    %v218 = vld [vmem:[#allocation6 + $0x60] sm:$0xff]
    %v219 = vld [vmem:[#allocation6 + $0x68] sm:$0xff]
    %v220 = vld [vmem:[#allocation6 + $0x70] sm:$0xff]
    %v221 = vld [vmem:[#allocation6 + $0x78] sm:$0xff]
    %v222 = vld [vmem:[#allocation6 + $0x80] sm:$0xff]
    %v223 = vld [vmem:[#allocation6 + $0x88] sm:$0xff]
    %v224 = vld [vmem:[#allocation6 + $0x90] sm:$0xff]
    %v225 = vld [vmem:[#allocation6 + $0x98] sm:$0xff]
    %v226 = vld [vmem:[#allocation6 + $0xa0] sm:$0xff]
    %v227 = vld [vmem:[#allocation6 + $0xa8] sm:$0xff]
    %v228 = vld [vmem:[#allocation6 + $0xb0] sm:$0xff]
    %v229 = vld [vmem:[#allocation6 + $0xb8] sm:$0xff]
    %v230 = vld [vmem:[#allocation6 + $0xc0] sm:$0xff]
    %v231 = vld [vmem:[#allocation6 + $0xc8] sm:$0xff]
    %v232 = vld [vmem:[#allocation6 + $0xd0] sm:$0xff]
    %v233 = vld [vmem:[#allocation6 + $0xd8] sm:$0xff]
    %v234 = vld [vmem:[#allocation6 + $0xe0] sm:$0xff]
    %v235 = vld [vmem:[#allocation6 + $0xe8] sm:$0xff]
    %v236 = vld [vmem:[#allocation6 + $0xf0] sm:$0xff]
    %v237 = vld [vmem:[#allocation6 + $0xf8] sm:$0xff]
    %238 = vmatprep.subr.mxu0 0.0
    %239 = vmatpush1.msra.mxu0 %v206
    %240 = vmatprep.subr.mxu0 0.0
    %241 = vmatpush1.msra.mxu0 %v207
    %242 = vmatprep.subr.mxu0 0.0
    %243 = vmatpush1.msra.mxu0 %v208
    %244 = vmatprep.subr.mxu0 0.0
    %245 = vmatpush1.msra.mxu0 %v209
    %246 = vmatprep.subr.mxu0 0.0
    %247 = vmatpush1.msra.mxu0 %v210
    %248 = vmatprep.subr.mxu0 0.0
    %249 = vmatpush1.msra.mxu0 %v211
    %250 = vmatprep.subr.mxu0 0.0
    %251 = vmatpush1.msra.mxu0 %v212
    %252 = vmatprep.subr.mxu0 0.0
    %253 = vmatpush1.msra.mxu0 %v213
    %254 = vmatprep.subr.mxu0 0.0
    %255 = vmatpush1.msra.mxu0 %v214
    %256 = vmatprep.subr.mxu0 0.0
    %257 = vmatpush1.msra.mxu0 %v215
    %258 = vmatprep.subr.mxu0 0.0
    %259 = vmatpush1.msra.mxu0 %v216
    %260 = vmatprep.subr.mxu0 0.0
    %261 = vmatpush1.msra.mxu0 %v217
    %262 = vmatprep.subr.mxu0 0.0
    %263 = vmatpush1.msra.mxu0 %v218
    %264 = vmatprep.subr.mxu0 0.0
    %265 = vmatpush1.msra.mxu0 %v219
    %266 = vmatprep.subr.mxu0 0.0
    %267 = vmatpush1.msra.mxu0 %v220
    %268 = vmatprep.subr.mxu0 0.0
    %269 = vmatpush1.msra.mxu0 %v221
    %270 = vmatprep.subr.mxu0 0.0
    %271 = vmatpush1.msra.mxu0 %v222
    %272 = vmatprep.subr.mxu0 0.0
    %273 = vmatpush1.msra.mxu0 %v223
    %274 = vmatprep.subr.mxu0 0.0
    %275 = vmatpush1.msra.mxu0 %v224
    %276 = vmatprep.subr.mxu0 0.0
    %277 = vmatpush1.msra.mxu0 %v225
    %278 = vmatprep.subr.mxu0 0.0
    %279 = vmatpush1.msra.mxu0 %v226
    %280 = vmatprep.subr.mxu0 0.0
    %281 = vmatpush1.msra.mxu0 %v227
    %282 = vmatprep.subr.mxu0 0.0
    %283 = vmatpush1.msra.mxu0 %v228
    %284 = vmatprep.subr.mxu0 0.0
    %285 = vmatpush1.msra.mxu0 %v229
    %286 = vmatprep.subr.mxu0 0.0
    %287 = vmatpush1.msra.mxu0 %v230
    %288 = vmatprep.subr.mxu0 0.0
    %289 = vmatpush1.msra.mxu0 %v231
    %290 = vmatprep.subr.mxu0 0.0
    %291 = vmatpush1.msra.mxu0 %v232
    %292 = vmatprep.subr.mxu0 0.0
    %293 = vmatpush1.msra.mxu0 %v233
    %294 = vmatprep.subr.mxu0 0.0
    %295 = vmatpush1.msra.mxu0 %v234
    %296 = vmatprep.subr.mxu0 0.0
    %297 = vmatpush1.msra.mxu0 %v235
    %298 = vmatprep.subr.mxu0 0.0
    %299 = vmatpush1.msra.mxu0 %v236
    %300 = vmatprep.subr.mxu0 0.0
    %301 = vmatpush1.msra.mxu0 %v237
    %302 = vmatprep.mubr.f32.mxu0 %v70
    %303 = vmatmul.mubr.f32.gmra.mrb[0].mxu0 %v68
    %v304 = vpop.f32.mrb[0].mxu0
    %v305 = vadd.f32 0.0, %v304
    %v306 = vpop.f32.mrb[0].mxu0
    %307 = vdwg.mxu0
    %v308 = vlaneseq
    %v309 = vshrl.u32 %v308, 7
    %v310 = vsub.s32 0, %v309
    %v311 = vrot.slane %v57, %v310
    %v312 = vadd.f32 %v202, %v311
    %v313 = vlaneseq
    %v314 = vshrl.u32 %v313, 7
    %v315 = vsub.s32 0, %v314
    %v316 = vrot.slane %v58, %v315
    %v317 = vadd.f32 %v204, %v316
    %v318 = vxor.u32 %v317, 2147483648
    %v319 = vmul.f32 %v318, 1.442695
    %v320 = vpow.pop %v319
    %v321 = vadd.f32 %v320, 1.0
    %v322 = vrcp.pop %v321
    %v323 = vmul.f32 1.0, %v322
    %v324 = vmul.f32 %v305, 1.442695
    %v325 = vpow.pop %v324
    %v326 = vlaneseq
    %v327 = vshrl.u32 %v326, 7
    %v328 = vsub.s32 0, %v327
    %v329 = vrot.slane %v59, %v328
    %v330 = vadd.f32 %v325, %v329
    %v331 = vsub.f32 %v312, %v330
    %v332 = vmul.f32 %v323, %v331
    %v333 = vadd.f32 %v330, %v332
    %v334 = vtanh.pop %v333
    %335 = vst [vmem:[#allocation2 + $0x8] sm:$0xff] %v334
    %336 = vst [vmem:[#allocation8] sm:$0xff] %v334
    %s337 = scalar_lea.vmem %s0, 8
    %v338 = vld [vmem:[%s337] sm:$0xff]
    %339 = vst.msk [vmem:[#allocation2] sm:$0xff] %vm61, %v338
    %v340 = vld [vmem:[#allocation2] sm:$0xff]
    %v341 = vld [vmem:[#allocation2 + $0x8] sm:$0xff]
    %v342 = vadd.f32 %v340, 1e-06
    %v343 = vadd.f32 %v341, 1e-06
    %v344 = vlog2.pop %v342
    %v345 = vmul.f32 %v344, 0.6931472
    %v346 = vlog2.pop %v343
    %v347 = vmul.f32 %v346, 0.6931472
    %v348 = vld [vmem:[#allocation3] sm:$0xff]
    %v349 = vld [vmem:[#allocation3 + $0x8] sm:$0xff]
    %v350 = vld [vmem:[#allocation3 + $0x10] sm:$0xff]
    %v351 = vld [vmem:[#allocation3 + $0x18] sm:$0xff]
    %v352 = vld [vmem:[#allocation3 + $0x20] sm:$0xff]
    %v353 = vld [vmem:[#allocation3 + $0x28] sm:$0xff]
    %v354 = vld [vmem:[#allocation3 + $0x30] sm:$0xff]
    %v355 = vld [vmem:[#allocation3 + $0x38] sm:$0xff]
    %v356 = vld [vmem:[#allocation3 + $0x40] sm:$0xff]
    %v357 = vld [vmem:[#allocation3 + $0x48] sm:$0xff]
    %v358 = vld [vmem:[#allocation3 + $0x50] sm:$0xff]
    %v359 = vld [vmem:[#allocation3 + $0x58] sm:$0xff]
    %v360 = vld [vmem:[#allocation3 + $0x60] sm:$0xff]
    %v361 = vld [vmem:[#allocation3 + $0x68] sm:$0xff]
    %v362 = vld [vmem:[#allocation3 + $0x70] sm:$0xff]
    %v363 = vld [vmem:[#allocation3 + $0x78] sm:$0xff]
    %v364 = vld [vmem:[#allocation3 + $0x80] sm:$0xff]
    %v365 = vld [vmem:[#allocation3 + $0x88] sm:$0xff]
    %v366 = vld [vmem:[#allocation3 + $0x90] sm:$0xff]
    %v367 = vld [vmem:[#allocation3 + $0x98] sm:$0xff]
    %v368 = vld [vmem:[#allocation3 + $0xa0] sm:$0xff]
    %v369 = vld [vmem:[#allocation3 + $0xa8] sm:$0xff]
    %v370 = vld [vmem:[#allocation3 + $0xb0] sm:$0xff]
    %v371 = vld [vmem:[#allocation3 + $0xb8] sm:$0xff]
    %v372 = vld [vmem:[#allocation3 + $0xc0] sm:$0xff]
    %v373 = vld [vmem:[#allocation3 + $0xc8] sm:$0xff]
    %v374 = vld [vmem:[#allocation3 + $0xd0] sm:$0xff]
    %v375 = vld [vmem:[#allocation3 + $0xd8] sm:$0xff]
    %v376 = vld [vmem:[#allocation3 + $0xe0] sm:$0xff]
    %v377 = vld [vmem:[#allocation3 + $0xe8] sm:$0xff]
    %v378 = vld [vmem:[#allocation3 + $0xf0] sm:$0xff]
    %v379 = vld [vmem:[#allocation3 + $0xf8] sm:$0xff]
    %v380 = vld [vmem:[#allocation3 + $0x100] sm:$0xff]
    %v381 = vld [vmem:[#allocation3 + $0x108] sm:$0xff]
    %v382 = vld [vmem:[#allocation3 + $0x110] sm:$0xff]
    %v383 = vld [vmem:[#allocation3 + $0x118] sm:$0xff]
    %v384 = vld [vmem:[#allocation3 + $0x120] sm:$0xff]
    %v385 = vld [vmem:[#allocation3 + $0x128] sm:$0xff]
    %v386 = vld [vmem:[#allocation3 + $0x130] sm:$0xff]
    %v387 = vld [vmem:[#allocation3 + $0x138] sm:$0xff]
    %v388 = vld [vmem:[#allocation3 + $0x140] sm:$0xff]
    %v389 = vld [vmem:[#allocation3 + $0x148] sm:$0xff]
    %v390 = vld [vmem:[#allocation3 + $0x150] sm:$0xff]
    %v391 = vld [vmem:[#allocation3 + $0x158] sm:$0xff]
    %v392 = vld [vmem:[#allocation3 + $0x160] sm:$0xff]
    %v393 = vld [vmem:[#allocation3 + $0x168] sm:$0xff]
    %v394 = vld [vmem:[#allocation3 + $0x170] sm:$0xff]
    %v395 = vld [vmem:[#allocation3 + $0x178] sm:$0xff]
    %v396 = vld [vmem:[#allocation3 + $0x180] sm:$0xff]
    %v397 = vld [vmem:[#allocation3 + $0x188] sm:$0xff]
    %v398 = vld [vmem:[#allocation3 + $0x190] sm:$0xff]
    %v399 = vld [vmem:[#allocation3 + $0x198] sm:$0xff]
    %v400 = vld [vmem:[#allocation3 + $0x1a0] sm:$0xff]
    %v401 = vld [vmem:[#allocation3 + $0x1a8] sm:$0xff]
    %v402 = vld [vmem:[#allocation3 + $0x1b0] sm:$0xff]
    %v403 = vld [vmem:[#allocation3 + $0x1b8] sm:$0xff]
    %v404 = vld [vmem:[#allocation3 + $0x1c0] sm:$0xff]
    %v405 = vld [vmem:[#allocation3 + $0x1c8] sm:$0xff]
    %v406 = vld [vmem:[#allocation3 + $0x1d0] sm:$0xff]
    %v407 = vld [vmem:[#allocation3 + $0x1d8] sm:$0xff]
    %v408 = vld [vmem:[#allocation3 + $0x1e0] sm:$0xff]
    %v409 = vld [vmem:[#allocation3 + $0x1e8] sm:$0xff]
    %v410 = vld [vmem:[#allocation3 + $0x1f0] sm:$0xff]
    %v411 = vld [vmem:[#allocation3 + $0x1f8] sm:$0xff]
    %412 = vmatprep.subr.mxu0 %v349
    %413 = vmatpush1.msra.mxu0 %v348
    %414 = vmatprep.subr.mxu0 %v351
    %415 = vmatpush1.msra.mxu0 %v350
    %416 = vmatprep.subr.mxu0 %v353
    %417 = vmatpush1.msra.mxu0 %v352
    %418 = vmatprep.subr.mxu0 %v355
    %419 = vmatpush1.msra.mxu0 %v354
    %420 = vmatprep.subr.mxu0 %v357
    %421 = vmatpush1.msra.mxu0 %v356
    %422 = vmatprep.subr.mxu0 %v359
    %423 = vmatpush1.msra.mxu0 %v358
    %424 = vmatprep.subr.mxu0 %v361
    %425 = vmatpush1.msra.mxu0 %v360
    %426 = vmatprep.subr.mxu0 %v363
    %427 = vmatpush1.msra.mxu0 %v362
    %428 = vmatprep.subr.mxu0 %v365
    %429 = vmatpush1.msra.mxu0 %v364
    %430 = vmatprep.subr.mxu0 %v367
    %431 = vmatpush1.msra.mxu0 %v366
    %432 = vmatprep.subr.mxu0 %v369
    %433 = vmatpush1.msra.mxu0 %v368
    %434 = vmatprep.subr.mxu0 %v371
    %435 = vmatpush1.msra.mxu0 %v370
    %436 = vmatprep.subr.mxu0 %v373
    %437 = vmatpush1.msra.mxu0 %v372
    %438 = vmatprep.subr.mxu0 %v375
    %439 = vmatpush1.msra.mxu0 %v374
    %440 = vmatprep.subr.mxu0 %v377
    %441 = vmatpush1.msra.mxu0 %v376
    %442 = vmatprep.subr.mxu0 %v379
    %443 = vmatpush1.msra.mxu0 %v378
    %444 = vmatprep.subr.mxu0 %v381
    %445 = vmatpush1.msra.mxu0 %v380
    %446 = vmatprep.subr.mxu0 %v383
    %447 = vmatpush1.msra.mxu0 %v382
    %448 = vmatprep.subr.mxu0 %v385
    %449 = vmatpush1.msra.mxu0 %v384
    %450 = vmatprep.subr.mxu0 %v387
    %451 = vmatpush1.msra.mxu0 %v386
    %452 = vmatprep.subr.mxu0 %v389
    %453 = vmatpush1.msra.mxu0 %v388
    %454 = vmatprep.subr.mxu0 %v391
    %455 = vmatpush1.msra.mxu0 %v390
    %456 = vmatprep.subr.mxu0 %v393
    %457 = vmatpush1.msra.mxu0 %v392
    %458 = vmatprep.subr.mxu0 %v395
    %459 = vmatpush1.msra.mxu0 %v394
    %460 = vmatprep.subr.mxu0 %v397
    %461 = vmatpush1.msra.mxu0 %v396
    %462 = vmatprep.subr.mxu0 %v399
    %463 = vmatpush1.msra.mxu0 %v398
    %464 = vmatprep.subr.mxu0 %v401
    %465 = vmatpush1.msra.mxu0 %v400
    %466 = vmatprep.subr.mxu0 %v403
    %467 = vmatpush1.msra.mxu0 %v402
    %468 = vmatprep.subr.mxu0 %v405
    %469 = vmatpush1.msra.mxu0 %v404
    %470 = vmatprep.subr.mxu0 %v407
    %471 = vmatpush1.msra.mxu0 %v406
    %472 = vmatprep.subr.mxu0 %v409
    %473 = vmatpush1.msra.mxu0 %v408
    %474 = vmatprep.subr.mxu0 %v411
    %475 = vmatpush1.msra.mxu0 %v410
    %476 = vmatprep.mubr.f32.mxu0 %v341
    %477 = vmatmul.mubr.f32.gmra.mrb[0].mxu0 %v340
    %v478 = vpop.f32.mrb[0].mxu0
    %v479 = vadd.f32 0.0, %v478
    %v480 = vpop.f32.mrb[0].mxu0
    %v481 = vadd.f32 0.0, %v480
    %482 = vdwg.mxu0
    %v483 = vld [vmem:[#allocation6] sm:$0xff]
    %v484 = vld [vmem:[#allocation6 + $0x8] sm:$0xff]
    %v485 = vld [vmem:[#allocation6 + $0x10] sm:$0xff]
    %v486 = vld [vmem:[#allocation6 + $0x18] sm:$0xff]
    %v487 = vld [vmem:[#allocation6 + $0x20] sm:$0xff]
    %v488 = vld [vmem:[#allocation6 + $0x28] sm:$0xff]
    %v489 = vld [vmem:[#allocation6 + $0x30] sm:$0xff]
    %v490 = vld [vmem:[#allocation6 + $0x38] sm:$0xff]
    %v491 = vld [vmem:[#allocation6 + $0x40] sm:$0xff]
    %v492 = vld [vmem:[#allocation6 + $0x48] sm:$0xff]
    %v493 = vld [vmem:[#allocation6 + $0x50] sm:$0xff]
    %v494 = vld [vmem:[#allocation6 + $0x58] sm:$0xff]
    %v495 = vld [vmem:[#allocation6 + $0x60] sm:$0xff]
    %v496 = vld [vmem:[#allocation6 + $0x68] sm:$0xff]
    %v497 = vld [vmem:[#allocation6 + $0x70] sm:$0xff]
    %v498 = vld [vmem:[#allocation6 + $0x78] sm:$0xff]
    %v499 = vld [vmem:[#allocation6 + $0x80] sm:$0xff]
    %v500 = vld [vmem:[#allocation6 + $0x88] sm:$0xff]
    %v501 = vld [vmem:[#allocation6 + $0x90] sm:$0xff]
    %v502 = vld [vmem:[#allocation6 + $0x98] sm:$0xff]
    %v503 = vld [vmem:[#allocation6 + $0xa0] sm:$0xff]
    %v504 = vld [vmem:[#allocation6 + $0xa8] sm:$0xff]
    %v505 = vld [vmem:[#allocation6 + $0xb0] sm:$0xff]
    %v506 = vld [vmem:[#allocation6 + $0xb8] sm:$0xff]
    %v507 = vld [vmem:[#allocation6 + $0xc0] sm:$0xff]
    %v508 = vld [vmem:[#allocation6 + $0xc8] sm:$0xff]
    %v509 = vld [vmem:[#allocation6 + $0xd0] sm:$0xff]
    %v510 = vld [vmem:[#allocation6 + $0xd8] sm:$0xff]
    %v511 = vld [vmem:[#allocation6 + $0xe0] sm:$0xff]
    %v512 = vld [vmem:[#allocation6 + $0xe8] sm:$0xff]
    %v513 = vld [vmem:[#allocation6 + $0xf0] sm:$0xff]
    %v514 = vld [vmem:[#allocation6 + $0xf8] sm:$0xff]
    %515 = vmatprep.subr.mxu0 0.0
    %516 = vmatpush1.msra.mxu0 %v483
    %517 = vmatprep.subr.mxu0 0.0
    %518 = vmatpush1.msra.mxu0 %v484
    %519 = vmatprep.subr.mxu0 0.0
    %520 = vmatpush1.msra.mxu0 %v485
    %521 = vmatprep.subr.mxu0 0.0
    %522 = vmatpush1.msra.mxu0 %v486
    %523 = vmatprep.subr.mxu0 0.0
    %524 = vmatpush1.msra.mxu0 %v487
    %525 = vmatprep.subr.mxu0 0.0
    %526 = vmatpush1.msra.mxu0 %v488
    %527 = vmatprep.subr.mxu0 0.0
    %528 = vmatpush1.msra.mxu0 %v489
    %529 = vmatprep.subr.mxu0 0.0
    %530 = vmatpush1.msra.mxu0 %v490
    %531 = vmatprep.subr.mxu0 0.0
    %532 = vmatpush1.msra.mxu0 %v491
    %533 = vmatprep.subr.mxu0 0.0
    %534 = vmatpush1.msra.mxu0 %v492
    %535 = vmatprep.subr.mxu0 0.0
    %536 = vmatpush1.msra.mxu0 %v493
    %537 = vmatprep.subr.mxu0 0.0
    %538 = vmatpush1.msra.mxu0 %v494
    %539 = vmatprep.subr.mxu0 0.0
    %540 = vmatpush1.msra.mxu0 %v495
    %541 = vmatprep.subr.mxu0 0.0
    %542 = vmatpush1.msra.mxu0 %v496
    %543 = vmatprep.subr.mxu0 0.0
    %544 = vmatpush1.msra.mxu0 %v497
    %545 = vmatprep.subr.mxu0 0.0
    %546 = vmatpush1.msra.mxu0 %v498
    %547 = vmatprep.subr.mxu0 0.0
    %548 = vmatpush1.msra.mxu0 %v499
    %549 = vmatprep.subr.mxu0 0.0
    %550 = vmatpush1.msra.mxu0 %v500
    %551 = vmatprep.subr.mxu0 0.0
    %552 = vmatpush1.msra.mxu0 %v501
    %553 = vmatprep.subr.mxu0 0.0
    %554 = vmatpush1.msra.mxu0 %v502
    %555 = vmatprep.subr.mxu0 0.0
    %556 = vmatpush1.msra.mxu0 %v503
    %557 = vmatprep.subr.mxu0 0.0
    %558 = vmatpush1.msra.mxu0 %v504
    %559 = vmatprep.subr.mxu0 0.0
    %560 = vmatpush1.msra.mxu0 %v505
    %561 = vmatprep.subr.mxu0 0.0
    %562 = vmatpush1.msra.mxu0 %v506
    %563 = vmatprep.subr.mxu0 0.0
    %564 = vmatpush1.msra.mxu0 %v507
    %565 = vmatprep.subr.mxu0 0.0
    %566 = vmatpush1.msra.mxu0 %v508
    %567 = vmatprep.subr.mxu0 0.0
    %568 = vmatpush1.msra.mxu0 %v509
    %569 = vmatprep.subr.mxu0 0.0
    %570 = vmatpush1.msra.mxu0 %v510
    %571 = vmatprep.subr.mxu0 0.0
    %572 = vmatpush1.msra.mxu0 %v511
    %573 = vmatprep.subr.mxu0 0.0
    %574 = vmatpush1.msra.mxu0 %v512
    %575 = vmatprep.subr.mxu0 0.0
    %576 = vmatpush1.msra.mxu0 %v513
    %577 = vmatprep.subr.mxu0 0.0
    %578 = vmatpush1.msra.mxu0 %v514
    %579 = vmatprep.mubr.f32.mxu0 %v347
    %580 = vmatmul.mubr.f32.gmra.mrb[0].mxu0 %v345
    %v581 = vpop.f32.mrb[0].mxu0
    %v582 = vadd.f32 0.0, %v581
    %v583 = vpop.f32.mrb[0].mxu0
    %584 = vdwg.mxu0
    %v585 = vadd.f32 %v479, %v311
    %v586 = vadd.f32 %v481, %v316
    %v587 = vxor.u32 %v586, 2147483648
    %v588 = vmul.f32 %v587, 1.442695
    %v589 = vpow.pop %v588
    %v590 = vadd.f32 %v589, 1.0
    %v591 = vrcp.pop %v590
    %v592 = vmul.f32 1.0, %v591
    %v593 = vmul.f32 %v582, 1.442695
    %v594 = vpow.pop %v593
    %v595 = vadd.f32 %v594, %v329
    %v596 = vsub.f32 %v585, %v595
    %v597 = vmul.f32 %v592, %v596
    %v598 = vadd.f32 %v595, %v597
    %v599 = vtanh.pop %v598
    %600 = vst [vmem:[#allocation2 + $0x8] sm:$0xff] %v599
    %s601 = scalar_lea.vmem [#allocation8], 8
    %602 = vst [vmem:[%s601] sm:$0xff] %v599
    %s603 = scalar_lea.vmem %s0, 16
    %v604 = vld [vmem:[%s603] sm:$0xff]
    %605 = vst.msk [vmem:[#allocation2] sm:$0xff] %vm61, %v604
    %v606 = vld [vmem:[#allocation2] sm:$0xff]
    %v607 = vld [vmem:[#allocation2 + $0x8] sm:$0xff]
    %v608 = vadd.f32 %v606, 1e-06
    %v609 = vadd.f32 %v607, 1e-06
    %v610 = vlog2.pop %v608
    %v611 = vmul.f32 %v610, 0.6931472
    %v612 = vlog2.pop %v609
    %v613 = vmul.f32 %v612, 0.6931472
    %v614 = vld [vmem:[#allocation3] sm:$0xff]
    %v615 = vld [vmem:[#allocation3 + $0x8] sm:$0xff]
    %v616 = vld [vmem:[#allocation3 + $0x10] sm:$0xff]
    %v617 = vld [vmem:[#allocation3 + $0x18] sm:$0xff]
    %v618 = vld [vmem:[#allocation3 + $0x20] sm:$0xff]
    %v619 = vld [vmem:[#allocation3 + $0x28] sm:$0xff]
    %v620 = vld [vmem:[#allocation3 + $0x30] sm:$0xff]
    %v621 = vld [vmem:[#allocation3 + $0x38] sm:$0xff]
    %v622 = vld [vmem:[#allocation3 + $0x40] sm:$0xff]
    %v623 = vld [vmem:[#allocation3 + $0x48] sm:$0xff]
    %v624 = vld [vmem:[#allocation3 + $0x50] sm:$0xff]
    %v625 = vld [vmem:[#allocation3 + $0x58] sm:$0xff]
    %v626 = vld [vmem:[#allocation3 + $0x60] sm:$0xff]
    %v627 = vld [vmem:[#allocation3 + $0x68] sm:$0xff]
    %v628 = vld [vmem:[#allocation3 + $0x70] sm:$0xff]
    %v629 = vld [vmem:[#allocation3 + $0x78] sm:$0xff]
    %v630 = vld [vmem:[#allocation3 + $0x80] sm:$0xff]
    %v631 = vld [vmem:[#allocation3 + $0x88] sm:$0xff]
    %v632 = vld [vmem:[#allocation3 + $0x90] sm:$0xff]
    %v633 = vld [vmem:[#allocation3 + $0x98] sm:$0xff]
    %v634 = vld [vmem:[#allocation3 + $0xa0] sm:$0xff]
    %v635 = vld [vmem:[#allocation3 + $0xa8] sm:$0xff]
    %v636 = vld [vmem:[#allocation3 + $0xb0] sm:$0xff]
    %v637 = vld [vmem:[#allocation3 + $0xb8] sm:$0xff]
    %v638 = vld [vmem:[#allocation3 + $0xc0] sm:$0xff]
    %v639 = vld [vmem:[#allocation3 + $0xc8] sm:$0xff]
    %v640 = vld [vmem:[#allocation3 + $0xd0] sm:$0xff]
    %v641 = vld [vmem:[#allocation3 + $0xd8] sm:$0xff]
    %v642 = vld [vmem:[#allocation3 + $0xe0] sm:$0xff]
    %v643 = vld [vmem:[#allocation3 + $0xe8] sm:$0xff]
    %v644 = vld [vmem:[#allocation3 + $0xf0] sm:$0xff]
    %v645 = vld [vmem:[#allocation3 + $0xf8] sm:$0xff]
    %v646 = vld [vmem:[#allocation3 + $0x100] sm:$0xff]
    %v647 = vld [vmem:[#allocation3 + $0x108] sm:$0xff]
    %v648 = vld [vmem:[#allocation3 + $0x110] sm:$0xff]
    %v649 = vld [vmem:[#allocation3 + $0x118] sm:$0xff]
    %v650 = vld [vmem:[#allocation3 + $0x120] sm:$0xff]
    %v651 = vld [vmem:[#allocation3 + $0x128] sm:$0xff]
    %v652 = vld [vmem:[#allocation3 + $0x130] sm:$0xff]
    %v653 = vld [vmem:[#allocation3 + $0x138] sm:$0xff]
    %v654 = vld [vmem:[#allocation3 + $0x140] sm:$0xff]
    %v655 = vld [vmem:[#allocation3 + $0x148] sm:$0xff]
    %v656 = vld [vmem:[#allocation3 + $0x150] sm:$0xff]
    %v657 = vld [vmem:[#allocation3 + $0x158] sm:$0xff]
    %v658 = vld [vmem:[#allocation3 + $0x160] sm:$0xff]
    %v659 = vld [vmem:[#allocation3 + $0x168] sm:$0xff]
    %v660 = vld [vmem:[#allocation3 + $0x170] sm:$0xff]
    %v661 = vld [vmem:[#allocation3 + $0x178] sm:$0xff]
    %v662 = vld [vmem:[#allocation3 + $0x180] sm:$0xff]
    %v663 = vld [vmem:[#allocation3 + $0x188] sm:$0xff]
    %v664 = vld [vmem:[#allocation3 + $0x190] sm:$0xff]
    %v665 = vld [vmem:[#allocation3 + $0x198] sm:$0xff]
    %v666 = vld [vmem:[#allocation3 + $0x1a0] sm:$0xff]
    %v667 = vld [vmem:[#allocation3 + $0x1a8] sm:$0xff]
    %v668 = vld [vmem:[#allocation3 + $0x1b0] sm:$0xff]
    %v669 = vld [vmem:[#allocation3 + $0x1b8] sm:$0xff]
    %v670 = vld [vmem:[#allocation3 + $0x1c0] sm:$0xff]
    %v671 = vld [vmem:[#allocation3 + $0x1c8] sm:$0xff]
    %v672 = vld [vmem:[#allocation3 + $0x1d0] sm:$0xff]
    %v673 = vld [vmem:[#allocation3 + $0x1d8] sm:$0xff]
    %v674 = vld [vmem:[#allocation3 + $0x1e0] sm:$0xff]
    %v675 = vld [vmem:[#allocation3 + $0x1e8] sm:$0xff]
    %v676 = vld [vmem:[#allocation3 + $0x1f0] sm:$0xff]
    %v677 = vld [vmem:[#allocation3 + $0x1f8] sm:$0xff]
    %678 = vmatprep.subr.mxu0 %v615
    %679 = vmatpush1.msra.mxu0 %v614
    %680 = vmatprep.subr.mxu0 %v617
    %681 = vmatpush1.msra.mxu0 %v616
    %682 = vmatprep.subr.mxu0 %v619
    %683 = vmatpush1.msra.mxu0 %v618
    %684 = vmatprep.subr.mxu0 %v621
    %685 = vmatpush1.msra.mxu0 %v620
    %686 = vmatprep.subr.mxu0 %v623
    %687 = vmatpush1.msra.mxu0 %v622
    %688 = vmatprep.subr.mxu0 %v625
    %689 = vmatpush1.msra.mxu0 %v624
    %690 = vmatprep.subr.mxu0 %v627
    %691 = vmatpush1.msra.mxu0 %v626
    %692 = vmatprep.subr.mxu0 %v629
    %693 = vmatpush1.msra.mxu0 %v628
    %694 = vmatprep.subr.mxu0 %v631
    %695 = vmatpush1.msra.mxu0 %v630
    %696 = vmatprep.subr.mxu0 %v633
    %697 = vmatpush1.msra.mxu0 %v632
    %698 = vmatprep.subr.mxu0 %v635
    %699 = vmatpush1.msra.mxu0 %v634
    %700 = vmatprep.subr.mxu0 %v637
    %701 = vmatpush1.msra.mxu0 %v636
    %702 = vmatprep.subr.mxu0 %v639
    %703 = vmatpush1.msra.mxu0 %v638
    %704 = vmatprep.subr.mxu0 %v641
    %705 = vmatpush1.msra.mxu0 %v640
    %706 = vmatprep.subr.mxu0 %v643
    %707 = vmatpush1.msra.mxu0 %v642
    %708 = vmatprep.subr.mxu0 %v645
    %709 = vmatpush1.msra.mxu0 %v644
    %710 = vmatprep.subr.mxu0 %v647
    %711 = vmatpush1.msra.mxu0 %v646
    %712 = vmatprep.subr.mxu0 %v649
    %713 = vmatpush1.msra.mxu0 %v648
    %714 = vmatprep.subr.mxu0 %v651
    %715 = vmatpush1.msra.mxu0 %v650
    %716 = vmatprep.subr.mxu0 %v653
    %717 = vmatpush1.msra.mxu0 %v652
    %718 = vmatprep.subr.mxu0 %v655
    %719 = vmatpush1.msra.mxu0 %v654
    %720 = vmatprep.subr.mxu0 %v657
    %721 = vmatpush1.msra.mxu0 %v656
    %722 = vmatprep.subr.mxu0 %v659
    %723 = vmatpush1.msra.mxu0 %v658
    %724 = vmatprep.subr.mxu0 %v661
    %725 = vmatpush1.msra.mxu0 %v660
    %726 = vmatprep.subr.mxu0 %v663
    %727 = vmatpush1.msra.mxu0 %v662
    %728 = vmatprep.subr.mxu0 %v665
    %729 = vmatpush1.msra.mxu0 %v664
    %730 = vmatprep.subr.mxu0 %v667
    %731 = vmatpush1.msra.mxu0 %v666
    %732 = vmatprep.subr.mxu0 %v669
    %733 = vmatpush1.msra.mxu0 %v668
    %734 = vmatprep.subr.mxu0 %v671
    %735 = vmatpush1.msra.mxu0 %v670
    %736 = vmatprep.subr.mxu0 %v673
    %737 = vmatpush1.msra.mxu0 %v672
    %738 = vmatprep.subr.mxu0 %v675
    %739 = vmatpush1.msra.mxu0 %v674
    %740 = vmatprep.subr.mxu0 %v677
    %741 = vmatpush1.msra.mxu0 %v676
    %742 = vmatprep.mubr.f32.mxu0 %v607
    %743 = vmatmul.mubr.f32.gmra.mrb[0].mxu0 %v606
    %v744 = vpop.f32.mrb[0].mxu0
    %v745 = vadd.f32 0.0, %v744
    %v746 = vpop.f32.mrb[0].mxu0
    %v747 = vadd.f32 0.0, %v746
    %748 = vdwg.mxu0
    %v749 = vld [vmem:[#allocation6] sm:$0xff]
    %v750 = vld [vmem:[#allocation6 + $0x8] sm:$0xff]
    %v751 = vld [vmem:[#allocation6 + $0x10] sm:$0xff]
    %v752 = vld [vmem:[#allocation6 + $0x18] sm:$0xff]
    %v753 = vld [vmem:[#allocation6 + $0x20] sm:$0xff]
    %v754 = vld [vmem:[#allocation6 + $0x28] sm:$0xff]
    %v755 = vld [vmem:[#allocation6 + $0x30] sm:$0xff]
    %v756 = vld [vmem:[#allocation6 + $0x38] sm:$0xff]
    %v757 = vld [vmem:[#allocation6 + $0x40] sm:$0xff]
    %v758 = vld [vmem:[#allocation6 + $0x48] sm:$0xff]
    %v759 = vld [vmem:[#allocation6 + $0x50] sm:$0xff]
    %v760 = vld [vmem:[#allocation6 + $0x58] sm:$0xff]
    %v761 = vld [vmem:[#allocation6 + $0x60] sm:$0xff]
    %v762 = vld [vmem:[#allocation6 + $0x68] sm:$0xff]
    %v763 = vld [vmem:[#allocation6 + $0x70] sm:$0xff]
    %v764 = vld [vmem:[#allocation6 + $0x78] sm:$0xff]
    %v765 = vld [vmem:[#allocation6 + $0x80] sm:$0xff]
    %v766 = vld [vmem:[#allocation6 + $0x88] sm:$0xff]
    %v767 = vld [vmem:[#allocation6 + $0x90] sm:$0xff]
    %v768 = vld [vmem:[#allocation6 + $0x98] sm:$0xff]
    %v769 = vld [vmem:[#allocation6 + $0xa0] sm:$0xff]
    %v770 = vld [vmem:[#allocation6 + $0xa8] sm:$0xff]
    %v771 = vld [vmem:[#allocation6 + $0xb0] sm:$0xff]
    %v772 = vld [vmem:[#allocation6 + $0xb8] sm:$0xff]
    %v773 = vld [vmem:[#allocation6 + $0xc0] sm:$0xff]
    %v774 = vld [vmem:[#allocation6 + $0xc8] sm:$0xff]
    %v775 = vld [vmem:[#allocation6 + $0xd0] sm:$0xff]
    %v776 = vld [vmem:[#allocation6 + $0xd8] sm:$0xff]
    %v777 = vld [vmem:[#allocation6 + $0xe0] sm:$0xff]
    %v778 = vld [vmem:[#allocation6 + $0xe8] sm:$0xff]
    %v779 = vld [vmem:[#allocation6 + $0xf0] sm:$0xff]
    %v780 = vld [vmem:[#allocation6 + $0xf8] sm:$0xff]
    %781 = vmatprep.subr.mxu0 0.0
    %782 = vmatpush1.msra.mxu0 %v749
    %783 = vmatprep.subr.mxu0 0.0
    %784 = vmatpush1.msra.mxu0 %v750
    %785 = vmatprep.subr.mxu0 0.0
    %786 = vmatpush1.msra.mxu0 %v751
    %787 = vmatprep.subr.mxu0 0.0
    %788 = vmatpush1.msra.mxu0 %v752
    %789 = vmatprep.subr.mxu0 0.0
    %790 = vmatpush1.msra.mxu0 %v753
    %791 = vmatprep.subr.mxu0 0.0
    %792 = vmatpush1.msra.mxu0 %v754
    %793 = vmatprep.subr.mxu0 0.0
    %794 = vmatpush1.msra.mxu0 %v755
    %795 = vmatprep.subr.mxu0 0.0
    %796 = vmatpush1.msra.mxu0 %v756
    %797 = vmatprep.subr.mxu0 0.0
    %798 = vmatpush1.msra.mxu0 %v757
    %799 = vmatprep.subr.mxu0 0.0
    %800 = vmatpush1.msra.mxu0 %v758
    %801 = vmatprep.subr.mxu0 0.0
    %802 = vmatpush1.msra.mxu0 %v759
    %803 = vmatprep.subr.mxu0 0.0
    %804 = vmatpush1.msra.mxu0 %v760
    %805 = vmatprep.subr.mxu0 0.0
    %806 = vmatpush1.msra.mxu0 %v761
    %807 = vmatprep.subr.mxu0 0.0
    %808 = vmatpush1.msra.mxu0 %v762
    %809 = vmatprep.subr.mxu0 0.0
    %810 = vmatpush1.msra.mxu0 %v763
    %811 = vmatprep.subr.mxu0 0.0
    %812 = vmatpush1.msra.mxu0 %v764
    %813 = vmatprep.subr.mxu0 0.0
    %814 = vmatpush1.msra.mxu0 %v765
    %815 = vmatprep.subr.mxu0 0.0
    %816 = vmatpush1.msra.mxu0 %v766
    %817 = vmatprep.subr.mxu0 0.0
    %818 = vmatpush1.msra.mxu0 %v767
    %819 = vmatprep.subr.mxu0 0.0
    %820 = vmatpush1.msra.mxu0 %v768
    %821 = vmatprep.subr.mxu0 0.0
    %822 = vmatpush1.msra.mxu0 %v769
    %823 = vmatprep.subr.mxu0 0.0
    %824 = vmatpush1.msra.mxu0 %v770
    %825 = vmatprep.subr.mxu0 0.0
    %826 = vmatpush1.msra.mxu0 %v771
    %827 = vmatprep.subr.mxu0 0.0
    %828 = vmatpush1.msra.mxu0 %v772
    %829 = vmatprep.subr.mxu0 0.0
    %830 = vmatpush1.msra.mxu0 %v773
    %831 = vmatprep.subr.mxu0 0.0
    %832 = vmatpush1.msra.mxu0 %v774
    %833 = vmatprep.subr.mxu0 0.0
    %834 = vmatpush1.msra.mxu0 %v775
    %835 = vmatprep.subr.mxu0 0.0
    %836 = vmatpush1.msra.mxu0 %v776
    %837 = vmatprep.subr.mxu0 0.0
    %838 = vmatpush1.msra.mxu0 %v777
    %839 = vmatprep.subr.mxu0 0.0
    %840 = vmatpush1.msra.mxu0 %v778
    %841 = vmatprep.subr.mxu0 0.0
    %842 = vmatpush1.msra.mxu0 %v779
    %843 = vmatprep.subr.mxu0 0.0
    %844 = vmatpush1.msra.mxu0 %v780
    %845 = vmatprep.mubr.f32.mxu0 %v613
    %846 = vmatmul.mubr.f32.gmra.mrb[0].mxu0 %v611
    %v847 = vpop.f32.mrb[0].mxu0
    %v848 = vadd.f32 0.0, %v847
    %v849 = vpop.f32.mrb[0].mxu0
    %850 = vdwg.mxu0
    %v851 = vadd.f32 %v745, %v311
    %v852 = vadd.f32 %v747, %v316
    %v853 = vxor.u32 %v852, 2147483648
    %v854 = vmul.f32 %v853, 1.442695
    %v855 = vpow.pop %v854
    %v856 = vadd.f32 %v855, 1.0
    %v857 = vrcp.pop %v856
    %v858 = vmul.f32 1.0, %v857
    %v859 = vmul.f32 %v848, 1.442695
    %v860 = vpow.pop %v859
    %v861 = vadd.f32 %v860, %v329
    %v862 = vsub.f32 %v851, %v861
    %v863 = vmul.f32 %v858, %v862
    %v864 = vadd.f32 %v861, %v863
    %v865 = vtanh.pop %v864
    %866 = vst [vmem:[#allocation2 + $0x8] sm:$0xff] %v865
    %s867 = scalar_lea.vmem [#allocation8], 16
    %868 = vst [vmem:[%s867] sm:$0xff] %v865
    %s869 = scalar_lea.vmem %s0, 24
    %v870 = vld [vmem:[%s869] sm:$0xff]
    %871 = vst.msk [vmem:[#allocation2] sm:$0xff] %vm61, %v870
    %v872 = vld [vmem:[#allocation2] sm:$0xff]
    %v873 = vld [vmem:[#allocation2 + $0x8] sm:$0xff]
    %v874 = vadd.f32 %v872, 1e-06
    %v875 = vadd.f32 %v873, 1e-06
    %v876 = vlog2.pop %v874
    %v877 = vmul.f32 %v876, 0.6931472
    %v878 = vlog2.pop %v875
    %v879 = vmul.f32 %v878, 0.6931472
    %v880 = vld [vmem:[#allocation3] sm:$0xff]
    %v881 = vld [vmem:[#allocation3 + $0x8] sm:$0xff]
    %v882 = vld [vmem:[#allocation3 + $0x10] sm:$0xff]
    %v883 = vld [vmem:[#allocation3 + $0x18] sm:$0xff]
    %v884 = vld [vmem:[#allocation3 + $0x20] sm:$0xff]
    %v885 = vld [vmem:[#allocation3 + $0x28] sm:$0xff]
    %v886 = vld [vmem:[#allocation3 + $0x30] sm:$0xff]
    %v887 = vld [vmem:[#allocation3 + $0x38] sm:$0xff]
    %v888 = vld [vmem:[#allocation3 + $0x40] sm:$0xff]
    %v889 = vld [vmem:[#allocation3 + $0x48] sm:$0xff]
    %v890 = vld [vmem:[#allocation3 + $0x50] sm:$0xff]
    %v891 = vld [vmem:[#allocation3 + $0x58] sm:$0xff]
    %v892 = vld [vmem:[#allocation3 + $0x60] sm:$0xff]
    %v893 = vld [vmem:[#allocation3 + $0x68] sm:$0xff]
    %v894 = vld [vmem:[#allocation3 + $0x70] sm:$0xff]
    %v895 = vld [vmem:[#allocation3 + $0x78] sm:$0xff]
    %v896 = vld [vmem:[#allocation3 + $0x80] sm:$0xff]
    %v897 = vld [vmem:[#allocation3 + $0x88] sm:$0xff]
    %v898 = vld [vmem:[#allocation3 + $0x90] sm:$0xff]
    %v899 = vld [vmem:[#allocation3 + $0x98] sm:$0xff]
    %v900 = vld [vmem:[#allocation3 + $0xa0] sm:$0xff]
    %v901 = vld [vmem:[#allocation3 + $0xa8] sm:$0xff]
    %v902 = vld [vmem:[#allocation3 + $0xb0] sm:$0xff]
    %v903 = vld [vmem:[#allocation3 + $0xb8] sm:$0xff]
    %v904 = vld [vmem:[#allocation3 + $0xc0] sm:$0xff]
    %v905 = vld [vmem:[#allocation3 + $0xc8] sm:$0xff]
    %v906 = vld [vmem:[#allocation3 + $0xd0] sm:$0xff]
    %v907 = vld [vmem:[#allocation3 + $0xd8] sm:$0xff]
    %v908 = vld [vmem:[#allocation3 + $0xe0] sm:$0xff]
    %v909 = vld [vmem:[#allocation3 + $0xe8] sm:$0xff]
    %v910 = vld [vmem:[#allocation3 + $0xf0] sm:$0xff]
    %v911 = vld [vmem:[#allocation3 + $0xf8] sm:$0xff]
    %v912 = vld [vmem:[#allocation3 + $0x100] sm:$0xff]
    %v913 = vld [vmem:[#allocation3 + $0x108] sm:$0xff]
    %v914 = vld [vmem:[#allocation3 + $0x110] sm:$0xff]
    %v915 = vld [vmem:[#allocation3 + $0x118] sm:$0xff]
    %v916 = vld [vmem:[#allocation3 + $0x120] sm:$0xff]
    %v917 = vld [vmem:[#allocation3 + $0x128] sm:$0xff]
    %v918 = vld [vmem:[#allocation3 + $0x130] sm:$0xff]
    %v919 = vld [vmem:[#allocation3 + $0x138] sm:$0xff]
    %v920 = vld [vmem:[#allocation3 + $0x140] sm:$0xff]
    %v921 = vld [vmem:[#allocation3 + $0x148] sm:$0xff]
    %v922 = vld [vmem:[#allocation3 + $0x150] sm:$0xff]
    %v923 = vld [vmem:[#allocation3 + $0x158] sm:$0xff]
    %v924 = vld [vmem:[#allocation3 + $0x160] sm:$0xff]
    %v925 = vld [vmem:[#allocation3 + $0x168] sm:$0xff]
    %v926 = vld [vmem:[#allocation3 + $0x170] sm:$0xff]
    %v927 = vld [vmem:[#allocation3 + $0x178] sm:$0xff]
    %v928 = vld [vmem:[#allocation3 + $0x180] sm:$0xff]
    %v929 = vld [vmem:[#allocation3 + $0x188] sm:$0xff]
    %v930 = vld [vmem:[#allocation3 + $0x190] sm:$0xff]
    %v931 = vld [vmem:[#allocation3 + $0x198] sm:$0xff]
    %v932 = vld [vmem:[#allocation3 + $0x1a0] sm:$0xff]
    %v933 = vld [vmem:[#allocation3 + $0x1a8] sm:$0xff]
    %v934 = vld [vmem:[#allocation3 + $0x1b0] sm:$0xff]
    %v935 = vld [vmem:[#allocation3 + $0x1b8] sm:$0xff]
    %v936 = vld [vmem:[#allocation3 + $0x1c0] sm:$0xff]
    %v937 = vld [vmem:[#allocation3 + $0x1c8] sm:$0xff]
    %v938 = vld [vmem:[#allocation3 + $0x1d0] sm:$0xff]
    %v939 = vld [vmem:[#allocation3 + $0x1d8] sm:$0xff]
    %v940 = vld [vmem:[#allocation3 + $0x1e0] sm:$0xff]
    %v941 = vld [vmem:[#allocation3 + $0x1e8] sm:$0xff]
    %v942 = vld [vmem:[#allocation3 + $0x1f0] sm:$0xff]
    %v943 = vld [vmem:[#allocation3 + $0x1f8] sm:$0xff]
    %944 = vmatprep.subr.mxu0 %v881
    %945 = vmatpush1.msra.mxu0 %v880
    %946 = vmatprep.subr.mxu0 %v883
    %947 = vmatpush1.msra.mxu0 %v882
    %948 = vmatprep.subr.mxu0 %v885
    %949 = vmatpush1.msra.mxu0 %v884
    %950 = vmatprep.subr.mxu0 %v887
    %951 = vmatpush1.msra.mxu0 %v886
    %952 = vmatprep.subr.mxu0 %v889
    %953 = vmatpush1.msra.mxu0 %v888
    %954 = vmatprep.subr.mxu0 %v891
    %955 = vmatpush1.msra.mxu0 %v890
    %956 = vmatprep.subr.mxu0 %v893
    %957 = vmatpush1.msra.mxu0 %v892
    %958 = vmatprep.subr.mxu0 %v895
    %959 = vmatpush1.msra.mxu0 %v894
    %960 = vmatprep.subr.mxu0 %v897
    %961 = vmatpush1.msra.mxu0 %v896
    %962 = vmatprep.subr.mxu0 %v899
    %963 = vmatpush1.msra.mxu0 %v898
    %964 = vmatprep.subr.mxu0 %v901
    %965 = vmatpush1.msra.mxu0 %v900
    %966 = vmatprep.subr.mxu0 %v903
    %967 = vmatpush1.msra.mxu0 %v902
    %968 = vmatprep.subr.mxu0 %v905
    %969 = vmatpush1.msra.mxu0 %v904
    %970 = vmatprep.subr.mxu0 %v907
    %971 = vmatpush1.msra.mxu0 %v906
    %972 = vmatprep.subr.mxu0 %v909
    %973 = vmatpush1.msra.mxu0 %v908
    %974 = vmatprep.subr.mxu0 %v911
    %975 = vmatpush1.msra.mxu0 %v910
    %976 = vmatprep.subr.mxu0 %v913
    %977 = vmatpush1.msra.mxu0 %v912
    %978 = vmatprep.subr.mxu0 %v915
    %979 = vmatpush1.msra.mxu0 %v914
    %980 = vmatprep.subr.mxu0 %v917
    %981 = vmatpush1.msra.mxu0 %v916
    %982 = vmatprep.subr.mxu0 %v919
    %983 = vmatpush1.msra.mxu0 %v918
    %984 = vmatprep.subr.mxu0 %v921
    %985 = vmatpush1.msra.mxu0 %v920
    %986 = vmatprep.subr.mxu0 %v923
    %987 = vmatpush1.msra.mxu0 %v922
    %988 = vmatprep.subr.mxu0 %v925
    %989 = vmatpush1.msra.mxu0 %v924
    %990 = vmatprep.subr.mxu0 %v927
    %991 = vmatpush1.msra.mxu0 %v926
    %992 = vmatprep.subr.mxu0 %v929
    %993 = vmatpush1.msra.mxu0 %v928
    %994 = vmatprep.subr.mxu0 %v931
    %995 = vmatpush1.msra.mxu0 %v930
    %996 = vmatprep.subr.mxu0 %v933
    %997 = vmatpush1.msra.mxu0 %v932
    %998 = vmatprep.subr.mxu0 %v935
    %999 = vmatpush1.msra.mxu0 %v934
    %1000 = vmatprep.subr.mxu0 %v937
    %1001 = vmatpush1.msra.mxu0 %v936
    %1002 = vmatprep.subr.mxu0 %v939
    %1003 = vmatpush1.msra.mxu0 %v938
    %1004 = vmatprep.subr.mxu0 %v941
    %1005 = vmatpush1.msra.mxu0 %v940
    %1006 = vmatprep.subr.mxu0 %v943
    %1007 = vmatpush1.msra.mxu0 %v942
    %1008 = vmatprep.mubr.f32.mxu0 %v873
    %1009 = vmatmul.mubr.f32.gmra.mrb[0].mxu0 %v872
    %v1010 = vpop.f32.mrb[0].mxu0
    %v1011 = vadd.f32 0.0, %v1010
    %v1012 = vpop.f32.mrb[0].mxu0
    %v1013 = vadd.f32 0.0, %v1012
    %1014 = vdwg.mxu0
    %v1015 = vld [vmem:[#allocation6] sm:$0xff]
    %v1016 = vld [vmem:[#allocation6 + $0x8] sm:$0xff]
    %v1017 = vld [vmem:[#allocation6 + $0x10] sm:$0xff]
    %v1018 = vld [vmem:[#allocation6 + $0x18] sm:$0xff]
    %v1019 = vld [vmem:[#allocation6 + $0x20] sm:$0xff]
    %v1020 = vld [vmem:[#allocation6 + $0x28] sm:$0xff]
    %v1021 = vld [vmem:[#allocation6 + $0x30] sm:$0xff]
    %v1022 = vld [vmem:[#allocation6 + $0x38] sm:$0xff]
    %v1023 = vld [vmem:[#allocation6 + $0x40] sm:$0xff]
    %v1024 = vld [vmem:[#allocation6 + $0x48] sm:$0xff]
    %v1025 = vld [vmem:[#allocation6 + $0x50] sm:$0xff]
    %v1026 = vld [vmem:[#allocation6 + $0x58] sm:$0xff]
    %v1027 = vld [vmem:[#allocation6 + $0x60] sm:$0xff]
    %v1028 = vld [vmem:[#allocation6 + $0x68] sm:$0xff]
    %v1029 = vld [vmem:[#allocation6 + $0x70] sm:$0xff]
    %v1030 = vld [vmem:[#allocation6 + $0x78] sm:$0xff]
    %v1031 = vld [vmem:[#allocation6 + $0x80] sm:$0xff]
    %v1032 = vld [vmem:[#allocation6 + $0x88] sm:$0xff]
    %v1033 = vld [vmem:[#allocation6 + $0x90] sm:$0xff]
    %v1034 = vld [vmem:[#allocation6 + $0x98] sm:$0xff]
    %v1035 = vld [vmem:[#allocation6 + $0xa0] sm:$0xff]
    %v1036 = vld [vmem:[#allocation6 + $0xa8] sm:$0xff]
    %v1037 = vld [vmem:[#allocation6 + $0xb0] sm:$0xff]
    %v1038 = vld [vmem:[#allocation6 + $0xb8] sm:$0xff]
    %v1039 = vld [vmem:[#allocation6 + $0xc0] sm:$0xff]
    %v1040 = vld [vmem:[#allocation6 + $0xc8] sm:$0xff]
    %v1041 = vld [vmem:[#allocation6 + $0xd0] sm:$0xff]
    %v1042 = vld [vmem:[#allocation6 + $0xd8] sm:$0xff]
    %v1043 = vld [vmem:[#allocation6 + $0xe0] sm:$0xff]
    %v1044 = vld [vmem:[#allocation6 + $0xe8] sm:$0xff]
    %v1045 = vld [vmem:[#allocation6 + $0xf0] sm:$0xff]
    %v1046 = vld [vmem:[#allocation6 + $0xf8] sm:$0xff]
    %1047 = vmatprep.subr.mxu0 0.0
    %1048 = vmatpush1.msra.mxu0 %v1015
    %1049 = vmatprep.subr.mxu0 0.0
    %1050 = vmatpush1.msra.mxu0 %v1016
    %1051 = vmatprep.subr.mxu0 0.0
    %1052 = vmatpush1.msra.mxu0 %v1017
    %1053 = vmatprep.subr.mxu0 0.0
    %1054 = vmatpush1.msra.mxu0 %v1018
    %1055 = vmatprep.subr.mxu0 0.0
    %1056 = vmatpush1.msra.mxu0 %v1019
    %1057 = vmatprep.subr.mxu0 0.0
    %1058 = vmatpush1.msra.mxu0 %v1020
    %1059 = vmatprep.subr.mxu0 0.0
    %1060 = vmatpush1.msra.mxu0 %v1021
    %1061 = vmatprep.subr.mxu0 0.0
    %1062 = vmatpush1.msra.mxu0 %v1022
    %1063 = vmatprep.subr.mxu0 0.0
    %1064 = vmatpush1.msra.mxu0 %v1023
    %1065 = vmatprep.subr.mxu0 0.0
    %1066 = vmatpush1.msra.mxu0 %v1024
    %1067 = vmatprep.subr.mxu0 0.0
    %1068 = vmatpush1.msra.mxu0 %v1025
    %1069 = vmatprep.subr.mxu0 0.0
    %1070 = vmatpush1.msra.mxu0 %v1026
    %1071 = vmatprep.subr.mxu0 0.0
    %1072 = vmatpush1.msra.mxu0 %v1027
    %1073 = vmatprep.subr.mxu0 0.0
    %1074 = vmatpush1.msra.mxu0 %v1028
    %1075 = vmatprep.subr.mxu0 0.0
    %1076 = vmatpush1.msra.mxu0 %v1029
    %1077 = vmatprep.subr.mxu0 0.0
    %1078 = vmatpush1.msra.mxu0 %v1030
    %1079 = vmatprep.subr.mxu0 0.0
    %1080 = vmatpush1.msra.mxu0 %v1031
    %1081 = vmatprep.subr.mxu0 0.0
    %1082 = vmatpush1.msra.mxu0 %v1032
    %1083 = vmatprep.subr.mxu0 0.0
    %1084 = vmatpush1.msra.mxu0 %v1033
    %1085 = vmatprep.subr.mxu0 0.0
    %1086 = vmatpush1.msra.mxu0 %v1034
    %1087 = vmatprep.subr.mxu0 0.0
    %1088 = vmatpush1.msra.mxu0 %v1035
    %1089 = vmatprep.subr.mxu0 0.0
    %1090 = vmatpush1.msra.mxu0 %v1036
    %1091 = vmatprep.subr.mxu0 0.0
    %1092 = vmatpush1.msra.mxu0 %v1037
    %1093 = vmatprep.subr.mxu0 0.0
    %1094 = vmatpush1.msra.mxu0 %v1038
    %1095 = vmatprep.subr.mxu0 0.0
    %1096 = vmatpush1.msra.mxu0 %v1039
    %1097 = vmatprep.subr.mxu0 0.0
    %1098 = vmatpush1.msra.mxu0 %v1040
    %1099 = vmatprep.subr.mxu0 0.0
    %1100 = vmatpush1.msra.mxu0 %v1041
    %1101 = vmatprep.subr.mxu0 0.0
    %1102 = vmatpush1.msra.mxu0 %v1042
    %1103 = vmatprep.subr.mxu0 0.0
    %1104 = vmatpush1.msra.mxu0 %v1043
    %1105 = vmatprep.subr.mxu0 0.0
    %1106 = vmatpush1.msra.mxu0 %v1044
    %1107 = vmatprep.subr.mxu0 0.0
    %1108 = vmatpush1.msra.mxu0 %v1045
    %1109 = vmatprep.subr.mxu0 0.0
    %1110 = vmatpush1.msra.mxu0 %v1046
    %1111 = vmatprep.mubr.f32.mxu0 %v879
    %1112 = vmatmul.mubr.f32.gmra.mrb[0].mxu0 %v877
    %v1113 = vpop.f32.mrb[0].mxu0
    %v1114 = vadd.f32 0.0, %v1113
    %v1115 = vpop.f32.mrb[0].mxu0
    %1116 = vdwg.mxu0
    %v1117 = vadd.f32 %v1011, %v311
    %v1118 = vadd.f32 %v1013, %v316
    %v1119 = vxor.u32 %v1118, 2147483648
    %v1120 = vmul.f32 %v1119, 1.442695
    %v1121 = vpow.pop %v1120
    %v1122 = vadd.f32 %v1121, 1.0
    %v1123 = vrcp.pop %v1122
    %v1124 = vmul.f32 1.0, %v1123
    %v1125 = vmul.f32 %v1114, 1.442695
    %v1126 = vpow.pop %v1125
    %v1127 = vadd.f32 %v1126, %v329
    %v1128 = vsub.f32 %v1117, %v1127
    %v1129 = vmul.f32 %v1124, %v1128
    %v1130 = vadd.f32 %v1127, %v1129
    %v1131 = vtanh.pop %v1130
    %1132 = vst [vmem:[#allocation2 + $0x8] sm:$0xff] %v1131
    %s1133 = scalar_lea.vmem [#allocation8], 24
    %1134 = vst [vmem:[%s1133] sm:$0xff] %v1131
    %s1135 = scalar_lea.vmem %s0, 32
    %v1136 = vld [vmem:[%s1135] sm:$0xff]
    %1137 = vst.msk [vmem:[#allocation2] sm:$0xff] %vm61, %v1136
    %v1138 = vld [vmem:[#allocation2] sm:$0xff]
    %v1139 = vld [vmem:[#allocation2 + $0x8] sm:$0xff]
    %v1140 = vadd.f32 %v1138, 1e-06
    %v1141 = vadd.f32 %v1139, 1e-06
    %v1142 = vlog2.pop %v1140
    %v1143 = vmul.f32 %v1142, 0.6931472
    %v1144 = vlog2.pop %v1141
    %v1145 = vmul.f32 %v1144, 0.6931472
    %v1146 = vld [vmem:[#allocation3] sm:$0xff]
    %v1147 = vld [vmem:[#allocation3 + $0x8] sm:$0xff]
    %v1148 = vld [vmem:[#allocation3 + $0x10] sm:$0xff]
    %v1149 = vld [vmem:[#allocation3 + $0x18] sm:$0xff]
    %v1150 = vld [vmem:[#allocation3 + $0x20] sm:$0xff]
    %v1151 = vld [vmem:[#allocation3 + $0x28] sm:$0xff]
    %v1152 = vld [vmem:[#allocation3 + $0x30] sm:$0xff]
    %v1153 = vld [vmem:[#allocation3 + $0x38] sm:$0xff]
    %v1154 = vld [vmem:[#allocation3 + $0x40] sm:$0xff]
    %v1155 = vld [vmem:[#allocation3 + $0x48] sm:$0xff]
    %v1156 = vld [vmem:[#allocation3 + $0x50] sm:$0xff]
    %v1157 = vld [vmem:[#allocation3 + $0x58] sm:$0xff]
    %v1158 = vld [vmem:[#allocation3 + $0x60] sm:$0xff]
    %v1159 = vld [vmem:[#allocation3 + $0x68] sm:$0xff]
    %v1160 = vld [vmem:[#allocation3 + $0x70] sm:$0xff]
    %v1161 = vld [vmem:[#allocation3 + $0x78] sm:$0xff]
    %v1162 = vld [vmem:[#allocation3 + $0x80] sm:$0xff]
    %v1163 = vld [vmem:[#allocation3 + $0x88] sm:$0xff]
    %v1164 = vld [vmem:[#allocation3 + $0x90] sm:$0xff]
    %v1165 = vld [vmem:[#allocation3 + $0x98] sm:$0xff]
    %v1166 = vld [vmem:[#allocation3 + $0xa0] sm:$0xff]
    %v1167 = vld [vmem:[#allocation3 + $0xa8] sm:$0xff]
    %v1168 = vld [vmem:[#allocation3 + $0xb0] sm:$0xff]
    %v1169 = vld [vmem:[#allocation3 + $0xb8] sm:$0xff]
    %v1170 = vld [vmem:[#allocation3 + $0xc0] sm:$0xff]
    %v1171 = vld [vmem:[#allocation3 + $0xc8] sm:$0xff]
    %v1172 = vld [vmem:[#allocation3 + $0xd0] sm:$0xff]
    %v1173 = vld [vmem:[#allocation3 + $0xd8] sm:$0xff]
    %v1174 = vld [vmem:[#allocation3 + $0xe0] sm:$0xff]
    %v1175 = vld [vmem:[#allocation3 + $0xe8] sm:$0xff]
    %v1176 = vld [vmem:[#allocation3 + $0xf0] sm:$0xff]
    %v1177 = vld [vmem:[#allocation3 + $0xf8] sm:$0xff]
    %v1178 = vld [vmem:[#allocation3 + $0x100] sm:$0xff]
    %v1179 = vld [vmem:[#allocation3 + $0x108] sm:$0xff]
    %v1180 = vld [vmem:[#allocation3 + $0x110] sm:$0xff]
    %v1181 = vld [vmem:[#allocation3 + $0x118] sm:$0xff]
    %v1182 = vld [vmem:[#allocation3 + $0x120] sm:$0xff]
    %v1183 = vld [vmem:[#allocation3 + $0x128] sm:$0xff]
    %v1184 = vld [vmem:[#allocation3 + $0x130] sm:$0xff]
    %v1185 = vld [vmem:[#allocation3 + $0x138] sm:$0xff]
    %v1186 = vld [vmem:[#allocation3 + $0x140] sm:$0xff]
    %v1187 = vld [vmem:[#allocation3 + $0x148] sm:$0xff]
    %v1188 = vld [vmem:[#allocation3 + $0x150] sm:$0xff]
    %v1189 = vld [vmem:[#allocation3 + $0x158] sm:$0xff]
    %v1190 = vld [vmem:[#allocation3 + $0x160] sm:$0xff]
    %v1191 = vld [vmem:[#allocation3 + $0x168] sm:$0xff]
    %v1192 = vld [vmem:[#allocation3 + $0x170] sm:$0xff]
    %v1193 = vld [vmem:[#allocation3 + $0x178] sm:$0xff]
    %v1194 = vld [vmem:[#allocation3 + $0x180] sm:$0xff]
    %v1195 = vld [vmem:[#allocation3 + $0x188] sm:$0xff]
    %v1196 = vld [vmem:[#allocation3 + $0x190] sm:$0xff]
    %v1197 = vld [vmem:[#allocation3 + $0x198] sm:$0xff]
    %v1198 = vld [vmem:[#allocation3 + $0x1a0] sm:$0xff]
    %v1199 = vld [vmem:[#allocation3 + $0x1a8] sm:$0xff]
    %v1200 = vld [vmem:[#allocation3 + $0x1b0] sm:$0xff]
    %v1201 = vld [vmem:[#allocation3 + $0x1b8] sm:$0xff]
    %v1202 = vld [vmem:[#allocation3 + $0x1c0] sm:$0xff]
    %v1203 = vld [vmem:[#allocation3 + $0x1c8] sm:$0xff]
    %v1204 = vld [vmem:[#allocation3 + $0x1d0] sm:$0xff]
    %v1205 = vld [vmem:[#allocation3 + $0x1d8] sm:$0xff]
    %v1206 = vld [vmem:[#allocation3 + $0x1e0] sm:$0xff]
    %v1207 = vld [vmem:[#allocation3 + $0x1e8] sm:$0xff]
    %v1208 = vld [vmem:[#allocation3 + $0x1f0] sm:$0xff]
    %v1209 = vld [vmem:[#allocation3 + $0x1f8] sm:$0xff]
    %1210 = vmatprep.subr.mxu0 %v1147
    %1211 = vmatpush1.msra.mxu0 %v1146
    %1212 = vmatprep.subr.mxu0 %v1149
    %1213 = vmatpush1.msra.mxu0 %v1148
    %1214 = vmatprep.subr.mxu0 %v1151
    %1215 = vmatpush1.msra.mxu0 %v1150
    %1216 = vmatprep.subr.mxu0 %v1153
    %1217 = vmatpush1.msra.mxu0 %v1152
    %1218 = vmatprep.subr.mxu0 %v1155
    %1219 = vmatpush1.msra.mxu0 %v1154
    %1220 = vmatprep.subr.mxu0 %v1157
    %1221 = vmatpush1.msra.mxu0 %v1156
    %1222 = vmatprep.subr.mxu0 %v1159
    %1223 = vmatpush1.msra.mxu0 %v1158
    %1224 = vmatprep.subr.mxu0 %v1161
    %1225 = vmatpush1.msra.mxu0 %v1160
    %1226 = vmatprep.subr.mxu0 %v1163
    %1227 = vmatpush1.msra.mxu0 %v1162
    %1228 = vmatprep.subr.mxu0 %v1165
    %1229 = vmatpush1.msra.mxu0 %v1164
    %1230 = vmatprep.subr.mxu0 %v1167
    %1231 = vmatpush1.msra.mxu0 %v1166
    %1232 = vmatprep.subr.mxu0 %v1169
    %1233 = vmatpush1.msra.mxu0 %v1168
    %1234 = vmatprep.subr.mxu0 %v1171
    %1235 = vmatpush1.msra.mxu0 %v1170
    %1236 = vmatprep.subr.mxu0 %v1173
    %1237 = vmatpush1.msra.mxu0 %v1172
    %1238 = vmatprep.subr.mxu0 %v1175
    %1239 = vmatpush1.msra.mxu0 %v1174
    %1240 = vmatprep.subr.mxu0 %v1177
    %1241 = vmatpush1.msra.mxu0 %v1176
    %1242 = vmatprep.subr.mxu0 %v1179
    %1243 = vmatpush1.msra.mxu0 %v1178
    %1244 = vmatprep.subr.mxu0 %v1181
    %1245 = vmatpush1.msra.mxu0 %v1180
    %1246 = vmatprep.subr.mxu0 %v1183
    %1247 = vmatpush1.msra.mxu0 %v1182
    %1248 = vmatprep.subr.mxu0 %v1185
    %1249 = vmatpush1.msra.mxu0 %v1184
    %1250 = vmatprep.subr.mxu0 %v1187
    %1251 = vmatpush1.msra.mxu0 %v1186
    %1252 = vmatprep.subr.mxu0 %v1189
    %1253 = vmatpush1.msra.mxu0 %v1188
    %1254 = vmatprep.subr.mxu0 %v1191
    %1255 = vmatpush1.msra.mxu0 %v1190
    %1256 = vmatprep.subr.mxu0 %v1193
    %1257 = vmatpush1.msra.mxu0 %v1192
    %1258 = vmatprep.subr.mxu0 %v1195
    %1259 = vmatpush1.msra.mxu0 %v1194
    %1260 = vmatprep.subr.mxu0 %v1197
    %1261 = vmatpush1.msra.mxu0 %v1196
    %1262 = vmatprep.subr.mxu0 %v1199
    %1263 = vmatpush1.msra.mxu0 %v1198
    %1264 = vmatprep.subr.mxu0 %v1201
    %1265 = vmatpush1.msra.mxu0 %v1200
    %1266 = vmatprep.subr.mxu0 %v1203
    %1267 = vmatpush1.msra.mxu0 %v1202
    %1268 = vmatprep.subr.mxu0 %v1205
    %1269 = vmatpush1.msra.mxu0 %v1204
    %1270 = vmatprep.subr.mxu0 %v1207
    %1271 = vmatpush1.msra.mxu0 %v1206
    %1272 = vmatprep.subr.mxu0 %v1209
    %1273 = vmatpush1.msra.mxu0 %v1208
    %1274 = vmatprep.mubr.f32.mxu0 %v1139
    %1275 = vmatmul.mubr.f32.gmra.mrb[0].mxu0 %v1138
    %v1276 = vpop.f32.mrb[0].mxu0
    %v1277 = vadd.f32 0.0, %v1276
    %v1278 = vpop.f32.mrb[0].mxu0
    %v1279 = vadd.f32 0.0, %v1278
    %1280 = vdwg.mxu0
    %v1281 = vld [vmem:[#allocation6] sm:$0xff]
    %v1282 = vld [vmem:[#allocation6 + $0x8] sm:$0xff]
    %v1283 = vld [vmem:[#allocation6 + $0x10] sm:$0xff]
    %v1284 = vld [vmem:[#allocation6 + $0x18] sm:$0xff]
    %v1285 = vld [vmem:[#allocation6 + $0x20] sm:$0xff]
    %v1286 = vld [vmem:[#allocation6 + $0x28] sm:$0xff]
    %v1287 = vld [vmem:[#allocation6 + $0x30] sm:$0xff]
    %v1288 = vld [vmem:[#allocation6 + $0x38] sm:$0xff]
    %v1289 = vld [vmem:[#allocation6 + $0x40] sm:$0xff]
    %v1290 = vld [vmem:[#allocation6 + $0x48] sm:$0xff]
    %v1291 = vld [vmem:[#allocation6 + $0x50] sm:$0xff]
    %v1292 = vld [vmem:[#allocation6 + $0x58] sm:$0xff]
    %v1293 = vld [vmem:[#allocation6 + $0x60] sm:$0xff]
    %v1294 = vld [vmem:[#allocation6 + $0x68] sm:$0xff]
    %v1295 = vld [vmem:[#allocation6 + $0x70] sm:$0xff]
    %v1296 = vld [vmem:[#allocation6 + $0x78] sm:$0xff]
    %v1297 = vld [vmem:[#allocation6 + $0x80] sm:$0xff]
    %v1298 = vld [vmem:[#allocation6 + $0x88] sm:$0xff]
    %v1299 = vld [vmem:[#allocation6 + $0x90] sm:$0xff]
    %v1300 = vld [vmem:[#allocation6 + $0x98] sm:$0xff]
    %v1301 = vld [vmem:[#allocation6 + $0xa0] sm:$0xff]
    %v1302 = vld [vmem:[#allocation6 + $0xa8] sm:$0xff]
    %v1303 = vld [vmem:[#allocation6 + $0xb0] sm:$0xff]
    %v1304 = vld [vmem:[#allocation6 + $0xb8] sm:$0xff]
    %v1305 = vld [vmem:[#allocation6 + $0xc0] sm:$0xff]
    %v1306 = vld [vmem:[#allocation6 + $0xc8] sm:$0xff]
    %v1307 = vld [vmem:[#allocation6 + $0xd0] sm:$0xff]
    %v1308 = vld [vmem:[#allocation6 + $0xd8] sm:$0xff]
    %v1309 = vld [vmem:[#allocation6 + $0xe0] sm:$0xff]
    %v1310 = vld [vmem:[#allocation6 + $0xe8] sm:$0xff]
    %v1311 = vld [vmem:[#allocation6 + $0xf0] sm:$0xff]
    %v1312 = vld [vmem:[#allocation6 + $0xf8] sm:$0xff]
    %1313 = vmatprep.subr.mxu0 0.0
    %1314 = vmatpush1.msra.mxu0 %v1281
    %1315 = vmatprep.subr.mxu0 0.0
    %1316 = vmatpush1.msra.mxu0 %v1282
    %1317 = vmatprep.subr.mxu0 0.0
    %1318 = vmatpush1.msra.mxu0 %v1283
    %1319 = vmatprep.subr.mxu0 0.0
    %1320 = vmatpush1.msra.mxu0 %v1284
    %1321 = vmatprep.subr.mxu0 0.0
    %1322 = vmatpush1.msra.mxu0 %v1285
    %1323 = vmatprep.subr.mxu0 0.0
    %1324 = vmatpush1.msra.mxu0 %v1286
    %1325 = vmatprep.subr.mxu0 0.0
    %1326 = vmatpush1.msra.mxu0 %v1287
    %1327 = vmatprep.subr.mxu0 0.0
    %1328 = vmatpush1.msra.mxu0 %v1288
    %1329 = vmatprep.subr.mxu0 0.0
    %1330 = vmatpush1.msra.mxu0 %v1289
    %1331 = vmatprep.subr.mxu0 0.0
    %1332 = vmatpush1.msra.mxu0 %v1290
    %1333 = vmatprep.subr.mxu0 0.0
    %1334 = vmatpush1.msra.mxu0 %v1291
    %1335 = vmatprep.subr.mxu0 0.0
    %1336 = vmatpush1.msra.mxu0 %v1292
    %1337 = vmatprep.subr.mxu0 0.0
    %1338 = vmatpush1.msra.mxu0 %v1293
    %1339 = vmatprep.subr.mxu0 0.0
    %1340 = vmatpush1.msra.mxu0 %v1294
    %1341 = vmatprep.subr.mxu0 0.0
    %1342 = vmatpush1.msra.mxu0 %v1295
    %1343 = vmatprep.subr.mxu0 0.0
    %1344 = vmatpush1.msra.mxu0 %v1296
    %1345 = vmatprep.subr.mxu0 0.0
    %1346 = vmatpush1.msra.mxu0 %v1297
    %1347 = vmatprep.subr.mxu0 0.0
    %1348 = vmatpush1.msra.mxu0 %v1298
    %1349 = vmatprep.subr.mxu0 0.0
    %1350 = vmatpush1.msra.mxu0 %v1299
    %1351 = vmatprep.subr.mxu0 0.0
    %1352 = vmatpush1.msra.mxu0 %v1300
    %1353 = vmatprep.subr.mxu0 0.0
    %1354 = vmatpush1.msra.mxu0 %v1301
    %1355 = vmatprep.subr.mxu0 0.0
    %1356 = vmatpush1.msra.mxu0 %v1302
    %1357 = vmatprep.subr.mxu0 0.0
    %1358 = vmatpush1.msra.mxu0 %v1303
    %1359 = vmatprep.subr.mxu0 0.0
    %1360 = vmatpush1.msra.mxu0 %v1304
    %1361 = vmatprep.subr.mxu0 0.0
    %1362 = vmatpush1.msra.mxu0 %v1305
    %1363 = vmatprep.subr.mxu0 0.0
    %1364 = vmatpush1.msra.mxu0 %v1306
    %1365 = vmatprep.subr.mxu0 0.0
    %1366 = vmatpush1.msra.mxu0 %v1307
    %1367 = vmatprep.subr.mxu0 0.0
    %1368 = vmatpush1.msra.mxu0 %v1308
    %1369 = vmatprep.subr.mxu0 0.0
    %1370 = vmatpush1.msra.mxu0 %v1309
    %1371 = vmatprep.subr.mxu0 0.0
    %1372 = vmatpush1.msra.mxu0 %v1310
    %1373 = vmatprep.subr.mxu0 0.0
    %1374 = vmatpush1.msra.mxu0 %v1311
    %1375 = vmatprep.subr.mxu0 0.0
    %1376 = vmatpush1.msra.mxu0 %v1312
    %1377 = vmatprep.mubr.f32.mxu0 %v1145
    %1378 = vmatmul.mubr.f32.gmra.mrb[0].mxu0 %v1143
    %v1379 = vpop.f32.mrb[0].mxu0
    %v1380 = vadd.f32 0.0, %v1379
    %v1381 = vpop.f32.mrb[0].mxu0
    %1382 = vdwg.mxu0
    %v1383 = vadd.f32 %v1277, %v311
    %v1384 = vadd.f32 %v1279, %v316
    %v1385 = vxor.u32 %v1384, 2147483648
    %v1386 = vmul.f32 %v1385, 1.442695
    %v1387 = vpow.pop %v1386
    %v1388 = vadd.f32 %v1387, 1.0
    %v1389 = vrcp.pop %v1388
    %v1390 = vmul.f32 1.0, %v1389
    %v1391 = vmul.f32 %v1380, 1.442695
    %v1392 = vpow.pop %v1391
    %v1393 = vadd.f32 %v1392, %v329
    %v1394 = vsub.f32 %v1383, %v1393
    %v1395 = vmul.f32 %v1390, %v1394
    %v1396 = vadd.f32 %v1393, %v1395
    %v1397 = vtanh.pop %v1396
    %1398 = vst [vmem:[#allocation2 + $0x8] sm:$0xff] %v1397
    %s1399 = scalar_lea.vmem [#allocation8], 32
    %1400 = vst [vmem:[%s1399] sm:$0xff] %v1397
    %s1401 = scalar_lea.vmem %s0, 40
    %v1402 = vld [vmem:[%s1401] sm:$0xff]
    %1403 = vst.msk [vmem:[#allocation2] sm:$0xff] %vm61, %v1402
    %v1404 = vld [vmem:[#allocation2] sm:$0xff]
    %v1405 = vld [vmem:[#allocation2 + $0x8] sm:$0xff]
    %v1406 = vadd.f32 %v1404, 1e-06
    %v1407 = vadd.f32 %v1405, 1e-06
    %v1408 = vlog2.pop %v1406
    %v1409 = vmul.f32 %v1408, 0.6931472
    %v1410 = vlog2.pop %v1407
    %v1411 = vmul.f32 %v1410, 0.6931472
    %v1412 = vld [vmem:[#allocation3] sm:$0xff]
    %v1413 = vld [vmem:[#allocation3 + $0x8] sm:$0xff]
    %v1414 = vld [vmem:[#allocation3 + $0x10] sm:$0xff]
    %v1415 = vld [vmem:[#allocation3 + $0x18] sm:$0xff]
    %v1416 = vld [vmem:[#allocation3 + $0x20] sm:$0xff]
    %v1417 = vld [vmem:[#allocation3 + $0x28] sm:$0xff]
    %v1418 = vld [vmem:[#allocation3 + $0x30] sm:$0xff]
    %v1419 = vld [vmem:[#allocation3 + $0x38] sm:$0xff]
    %v1420 = vld [vmem:[#allocation3 + $0x40] sm:$0xff]
    %v1421 = vld [vmem:[#allocation3 + $0x48] sm:$0xff]
    %v1422 = vld [vmem:[#allocation3 + $0x50] sm:$0xff]
    %v1423 = vld [vmem:[#allocation3 + $0x58] sm:$0xff]
    %v1424 = vld [vmem:[#allocation3 + $0x60] sm:$0xff]
    %v1425 = vld [vmem:[#allocation3 + $0x68] sm:$0xff]
    %v1426 = vld [vmem:[#allocation3 + $0x70] sm:$0xff]
    %v1427 = vld [vmem:[#allocation3 + $0x78] sm:$0xff]
    %v1428 = vld [vmem:[#allocation3 + $0x80] sm:$0xff]
    %v1429 = vld [vmem:[#allocation3 + $0x88] sm:$0xff]
    %v1430 = vld [vmem:[#allocation3 + $0x90] sm:$0xff]
    %v1431 = vld [vmem:[#allocation3 + $0x98] sm:$0xff]
    %v1432 = vld [vmem:[#allocation3 + $0xa0] sm:$0xff]
    %v1433 = vld [vmem:[#allocation3 + $0xa8] sm:$0xff]
    %v1434 = vld [vmem:[#allocation3 + $0xb0] sm:$0xff]
    %v1435 = vld [vmem:[#allocation3 + $0xb8] sm:$0xff]
    %v1436 = vld [vmem:[#allocation3 + $0xc0] sm:$0xff]
    %v1437 = vld [vmem:[#allocation3 + $0xc8] sm:$0xff]
    %v1438 = vld [vmem:[#allocation3 + $0xd0] sm:$0xff]
    %v1439 = vld [vmem:[#allocation3 + $0xd8] sm:$0xff]
    %v1440 = vld [vmem:[#allocation3 + $0xe0] sm:$0xff]
    %v1441 = vld [vmem:[#allocation3 + $0xe8] sm:$0xff]
    %v1442 = vld [vmem:[#allocation3 + $0xf0] sm:$0xff]
    %v1443 = vld [vmem:[#allocation3 + $0xf8] sm:$0xff]
    %v1444 = vld [vmem:[#allocation3 + $0x100] sm:$0xff]
    %v1445 = vld [vmem:[#allocation3 + $0x108] sm:$0xff]
    %v1446 = vld [vmem:[#allocation3 + $0x110] sm:$0xff]
    %v1447 = vld [vmem:[#allocation3 + $0x118] sm:$0xff]
    %v1448 = vld [vmem:[#allocation3 + $0x120] sm:$0xff]
    %v1449 = vld [vmem:[#allocation3 + $0x128] sm:$0xff]
    %v1450 = vld [vmem:[#allocation3 + $0x130] sm:$0xff]
    %v1451 = vld [vmem:[#allocation3 + $0x138] sm:$0xff]
    %v1452 = vld [vmem:[#allocation3 + $0x140] sm:$0xff]
    %v1453 = vld [vmem:[#allocation3 + $0x148] sm:$0xff]
    %v1454 = vld [vmem:[#allocation3 + $0x150] sm:$0xff]
    %v1455 = vld [vmem:[#allocation3 + $0x158] sm:$0xff]
    %v1456 = vld [vmem:[#allocation3 + $0x160] sm:$0xff]
    %v1457 = vld [vmem:[#allocation3 + $0x168] sm:$0xff]
    %v1458 = vld [vmem:[#allocation3 + $0x170] sm:$0xff]
    %v1459 = vld [vmem:[#allocation3 + $0x178] sm:$0xff]
    %v1460 = vld [vmem:[#allocation3 + $0x180] sm:$0xff]
    %v1461 = vld [vmem:[#allocation3 + $0x188] sm:$0xff]
    %v1462 = vld [vmem:[#allocation3 + $0x190] sm:$0xff]
    %v1463 = vld [vmem:[#allocation3 + $0x198] sm:$0xff]
    %v1464 = vld [vmem:[#allocation3 + $0x1a0] sm:$0xff]
    %v1465 = vld [vmem:[#allocation3 + $0x1a8] sm:$0xff]
    %v1466 = vld [vmem:[#allocation3 + $0x1b0] sm:$0xff]
    %v1467 = vld [vmem:[#allocation3 + $0x1b8] sm:$0xff]
    %v1468 = vld [vmem:[#allocation3 + $0x1c0] sm:$0xff]
    %v1469 = vld [vmem:[#allocation3 + $0x1c8] sm:$0xff]
    %v1470 = vld [vmem:[#allocation3 + $0x1d0] sm:$0xff]
    %v1471 = vld [vmem:[#allocation3 + $0x1d8] sm:$0xff]
    %v1472 = vld [vmem:[#allocation3 + $0x1e0] sm:$0xff]
    %v1473 = vld [vmem:[#allocation3 + $0x1e8] sm:$0xff]
    %v1474 = vld [vmem:[#allocation3 + $0x1f0] sm:$0xff]
    %v1475 = vld [vmem:[#allocation3 + $0x1f8] sm:$0xff]
    %1476 = vmatprep.subr.mxu0 %v1413
    %1477 = vmatpush1.msra.mxu0 %v1412
    %1478 = vmatprep.subr.mxu0 %v1415
    %1479 = vmatpush1.msra.mxu0 %v1414
    %1480 = vmatprep.subr.mxu0 %v1417
    %1481 = vmatpush1.msra.mxu0 %v1416
    %1482 = vmatprep.subr.mxu0 %v1419
    %1483 = vmatpush1.msra.mxu0 %v1418
    %1484 = vmatprep.subr.mxu0 %v1421
    %1485 = vmatpush1.msra.mxu0 %v1420
    %1486 = vmatprep.subr.mxu0 %v1423
    %1487 = vmatpush1.msra.mxu0 %v1422
    %1488 = vmatprep.subr.mxu0 %v1425
    %1489 = vmatpush1.msra.mxu0 %v1424
    %1490 = vmatprep.subr.mxu0 %v1427
    %1491 = vmatpush1.msra.mxu0 %v1426
    %1492 = vmatprep.subr.mxu0 %v1429
    %1493 = vmatpush1.msra.mxu0 %v1428
    %1494 = vmatprep.subr.mxu0 %v1431
    %1495 = vmatpush1.msra.mxu0 %v1430
    %1496 = vmatprep.subr.mxu0 %v1433
    %1497 = vmatpush1.msra.mxu0 %v1432
    %1498 = vmatprep.subr.mxu0 %v1435
    %1499 = vmatpush1.msra.mxu0 %v1434
    %1500 = vmatprep.subr.mxu0 %v1437
    %1501 = vmatpush1.msra.mxu0 %v1436
    %1502 = vmatprep.subr.mxu0 %v1439
    %1503 = vmatpush1.msra.mxu0 %v1438
    %1504 = vmatprep.subr.mxu0 %v1441
    %1505 = vmatpush1.msra.mxu0 %v1440
    %1506 = vmatprep.subr.mxu0 %v1443
    %1507 = vmatpush1.msra.mxu0 %v1442
    %1508 = vmatprep.subr.mxu0 %v1445
    %1509 = vmatpush1.msra.mxu0 %v1444
    %1510 = vmatprep.subr.mxu0 %v1447
    %1511 = vmatpush1.msra.mxu0 %v1446
    %1512 = vmatprep.subr.mxu0 %v1449
    %1513 = vmatpush1.msra.mxu0 %v1448
    %1514 = vmatprep.subr.mxu0 %v1451
    %1515 = vmatpush1.msra.mxu0 %v1450
    %1516 = vmatprep.subr.mxu0 %v1453
    %1517 = vmatpush1.msra.mxu0 %v1452
    %1518 = vmatprep.subr.mxu0 %v1455
    %1519 = vmatpush1.msra.mxu0 %v1454
    %1520 = vmatprep.subr.mxu0 %v1457
    %1521 = vmatpush1.msra.mxu0 %v1456
    %1522 = vmatprep.subr.mxu0 %v1459
    %1523 = vmatpush1.msra.mxu0 %v1458
    %1524 = vmatprep.subr.mxu0 %v1461
    %1525 = vmatpush1.msra.mxu0 %v1460
    %1526 = vmatprep.subr.mxu0 %v1463
    %1527 = vmatpush1.msra.mxu0 %v1462
    %1528 = vmatprep.subr.mxu0 %v1465
    %1529 = vmatpush1.msra.mxu0 %v1464
    %1530 = vmatprep.subr.mxu0 %v1467
    %1531 = vmatpush1.msra.mxu0 %v1466
    %1532 = vmatprep.subr.mxu0 %v1469
    %1533 = vmatpush1.msra.mxu0 %v1468
    %1534 = vmatprep.subr.mxu0 %v1471
    %1535 = vmatpush1.msra.mxu0 %v1470
    %1536 = vmatprep.subr.mxu0 %v1473
    %1537 = vmatpush1.msra.mxu0 %v1472
    %1538 = vmatprep.subr.mxu0 %v1475
    %1539 = vmatpush1.msra.mxu0 %v1474
    %1540 = vmatprep.mubr.f32.mxu0 %v1405
    %1541 = vmatmul.mubr.f32.gmra.mrb[0].mxu0 %v1404
    %v1542 = vpop.f32.mrb[0].mxu0
    %v1543 = vadd.f32 0.0, %v1542
    %v1544 = vpop.f32.mrb[0].mxu0
    %v1545 = vadd.f32 0.0, %v1544
    %1546 = vdwg.mxu0
    %v1547 = vld [vmem:[#allocation6] sm:$0xff]
    %v1548 = vld [vmem:[#allocation6 + $0x8] sm:$0xff]
    %v1549 = vld [vmem:[#allocation6 + $0x10] sm:$0xff]
    %v1550 = vld [vmem:[#allocation6 + $0x18] sm:$0xff]
    %v1551 = vld [vmem:[#allocation6 + $0x20] sm:$0xff]
    %v1552 = vld [vmem:[#allocation6 + $0x28] sm:$0xff]
    %v1553 = vld [vmem:[#allocation6 + $0x30] sm:$0xff]
    %v1554 = vld [vmem:[#allocation6 + $0x38] sm:$0xff]
    %v1555 = vld [vmem:[#allocation6 + $0x40] sm:$0xff]
    %v1556 = vld [vmem:[#allocation6 + $0x48] sm:$0xff]
    %v1557 = vld [vmem:[#allocation6 + $0x50] sm:$0xff]
    %v1558 = vld [vmem:[#allocation6 + $0x58] sm:$0xff]
    %v1559 = vld [vmem:[#allocation6 + $0x60] sm:$0xff]
    %v1560 = vld [vmem:[#allocation6 + $0x68] sm:$0xff]
    %v1561 = vld [vmem:[#allocation6 + $0x70] sm:$0xff]
    %v1562 = vld [vmem:[#allocation6 + $0x78] sm:$0xff]
    %v1563 = vld [vmem:[#allocation6 + $0x80] sm:$0xff]
    %v1564 = vld [vmem:[#allocation6 + $0x88] sm:$0xff]
    %v1565 = vld [vmem:[#allocation6 + $0x90] sm:$0xff]
    %v1566 = vld [vmem:[#allocation6 + $0x98] sm:$0xff]
    %v1567 = vld [vmem:[#allocation6 + $0xa0] sm:$0xff]
    %v1568 = vld [vmem:[#allocation6 + $0xa8] sm:$0xff]
    %v1569 = vld [vmem:[#allocation6 + $0xb0] sm:$0xff]
    %v1570 = vld [vmem:[#allocation6 + $0xb8] sm:$0xff]
    %v1571 = vld [vmem:[#allocation6 + $0xc0] sm:$0xff]
    %v1572 = vld [vmem:[#allocation6 + $0xc8] sm:$0xff]
    %v1573 = vld [vmem:[#allocation6 + $0xd0] sm:$0xff]
    %v1574 = vld [vmem:[#allocation6 + $0xd8] sm:$0xff]
    %v1575 = vld [vmem:[#allocation6 + $0xe0] sm:$0xff]
    %v1576 = vld [vmem:[#allocation6 + $0xe8] sm:$0xff]
    %v1577 = vld [vmem:[#allocation6 + $0xf0] sm:$0xff]
    %v1578 = vld [vmem:[#allocation6 + $0xf8] sm:$0xff]
    %1579 = vmatprep.subr.mxu0 0.0
    %1580 = vmatpush1.msra.mxu0 %v1547
    %1581 = vmatprep.subr.mxu0 0.0
    %1582 = vmatpush1.msra.mxu0 %v1548
    %1583 = vmatprep.subr.mxu0 0.0
    %1584 = vmatpush1.msra.mxu0 %v1549
    %1585 = vmatprep.subr.mxu0 0.0
    %1586 = vmatpush1.msra.mxu0 %v1550
    %1587 = vmatprep.subr.mxu0 0.0
    %1588 = vmatpush1.msra.mxu0 %v1551
    %1589 = vmatprep.subr.mxu0 0.0
    %1590 = vmatpush1.msra.mxu0 %v1552
    %1591 = vmatprep.subr.mxu0 0.0
    %1592 = vmatpush1.msra.mxu0 %v1553
    %1593 = vmatprep.subr.mxu0 0.0
    %1594 = vmatpush1.msra.mxu0 %v1554
    %1595 = vmatprep.subr.mxu0 0.0
    %1596 = vmatpush1.msra.mxu0 %v1555
    %1597 = vmatprep.subr.mxu0 0.0
    %1598 = vmatpush1.msra.mxu0 %v1556
    %1599 = vmatprep.subr.mxu0 0.0
    %1600 = vmatpush1.msra.mxu0 %v1557
    %1601 = vmatprep.subr.mxu0 0.0
    %1602 = vmatpush1.msra.mxu0 %v1558
    %1603 = vmatprep.subr.mxu0 0.0
    %1604 = vmatpush1.msra.mxu0 %v1559
    %1605 = vmatprep.subr.mxu0 0.0
    %1606 = vmatpush1.msra.mxu0 %v1560
    %1607 = vmatprep.subr.mxu0 0.0
    %1608 = vmatpush1.msra.mxu0 %v1561
    %1609 = vmatprep.subr.mxu0 0.0
    %1610 = vmatpush1.msra.mxu0 %v1562
    %1611 = vmatprep.subr.mxu0 0.0
    %1612 = vmatpush1.msra.mxu0 %v1563
    %1613 = vmatprep.subr.mxu0 0.0
    %1614 = vmatpush1.msra.mxu0 %v1564
    %1615 = vmatprep.subr.mxu0 0.0
    %1616 = vmatpush1.msra.mxu0 %v1565
    %1617 = vmatprep.subr.mxu0 0.0
    %1618 = vmatpush1.msra.mxu0 %v1566
    %1619 = vmatprep.subr.mxu0 0.0
    %1620 = vmatpush1.msra.mxu0 %v1567
    %1621 = vmatprep.subr.mxu0 0.0
    %1622 = vmatpush1.msra.mxu0 %v1568
    %1623 = vmatprep.subr.mxu0 0.0
    %1624 = vmatpush1.msra.mxu0 %v1569
    %1625 = vmatprep.subr.mxu0 0.0
    %1626 = vmatpush1.msra.mxu0 %v1570
    %1627 = vmatprep.subr.mxu0 0.0
    %1628 = vmatpush1.msra.mxu0 %v1571
    %1629 = vmatprep.subr.mxu0 0.0
    %1630 = vmatpush1.msra.mxu0 %v1572
    %1631 = vmatprep.subr.mxu0 0.0
    %1632 = vmatpush1.msra.mxu0 %v1573
    %1633 = vmatprep.subr.mxu0 0.0
    %1634 = vmatpush1.msra.mxu0 %v1574
    %1635 = vmatprep.subr.mxu0 0.0
    %1636 = vmatpush1.msra.mxu0 %v1575
    %1637 = vmatprep.subr.mxu0 0.0
    %1638 = vmatpush1.msra.mxu0 %v1576
    %1639 = vmatprep.subr.mxu0 0.0
    %1640 = vmatpush1.msra.mxu0 %v1577
    %1641 = vmatprep.subr.mxu0 0.0
    %1642 = vmatpush1.msra.mxu0 %v1578
    %1643 = vmatprep.mubr.f32.mxu0 %v1411
    %1644 = vmatmul.mubr.f32.gmra.mrb[0].mxu0 %v1409
    %v1645 = vpop.f32.mrb[0].mxu0
    %v1646 = vadd.f32 0.0, %v1645
    %v1647 = vpop.f32.mrb[0].mxu0
    %1648 = vdwg.mxu0
    %v1649 = vadd.f32 %v1543, %v311
    %v1650 = vadd.f32 %v1545, %v316
    %v1651 = vxor.u32 %v1650, 2147483648
    %v1652 = vmul.f32 %v1651, 1.442695
    %v1653 = vpow.pop %v1652
    %v1654 = vadd.f32 %v1653, 1.0
    %v1655 = vrcp.pop %v1654
    %v1656 = vmul.f32 1.0, %v1655
    %v1657 = vmul.f32 %v1646, 1.442695
    %v1658 = vpow.pop %v1657
    %v1659 = vadd.f32 %v1658, %v329
    %v1660 = vsub.f32 %v1649, %v1659
    %v1661 = vmul.f32 %v1656, %v1660
    %v1662 = vadd.f32 %v1659, %v1661
    %v1663 = vtanh.pop %v1662
    %1664 = vst [vmem:[#allocation2 + $0x8] sm:$0xff] %v1663
    %s1665 = scalar_lea.vmem [#allocation8], 40
    %1666 = vst [vmem:[%s1665] sm:$0xff] %v1663
    %s1667 = scalar_lea.vmem %s0, 48
    %v1668 = vld [vmem:[%s1667] sm:$0xff]
    %1669 = vst.msk [vmem:[#allocation2] sm:$0xff] %vm61, %v1668
    %v1670 = vld [vmem:[#allocation2] sm:$0xff]
    %v1671 = vld [vmem:[#allocation2 + $0x8] sm:$0xff]
    %v1672 = vadd.f32 %v1670, 1e-06
    %v1673 = vadd.f32 %v1671, 1e-06
    %v1674 = vlog2.pop %v1672
    %v1675 = vmul.f32 %v1674, 0.6931472
    %v1676 = vlog2.pop %v1673
    %v1677 = vmul.f32 %v1676, 0.6931472
    %v1678 = vld [vmem:[#allocation3] sm:$0xff]
    %v1679 = vld [vmem:[#allocation3 + $0x8] sm:$0xff]
    %v1680 = vld [vmem:[#allocation3 + $0x10] sm:$0xff]
    %v1681 = vld [vmem:[#allocation3 + $0x18] sm:$0xff]
    %v1682 = vld [vmem:[#allocation3 + $0x20] sm:$0xff]
    %v1683 = vld [vmem:[#allocation3 + $0x28] sm:$0xff]
    %v1684 = vld [vmem:[#allocation3 + $0x30] sm:$0xff]
    %v1685 = vld [vmem:[#allocation3 + $0x38] sm:$0xff]
    %v1686 = vld [vmem:[#allocation3 + $0x40] sm:$0xff]
    %v1687 = vld [vmem:[#allocation3 + $0x48] sm:$0xff]
    %v1688 = vld [vmem:[#allocation3 + $0x50] sm:$0xff]
    %v1689 = vld [vmem:[#allocation3 + $0x58] sm:$0xff]
    %v1690 = vld [vmem:[#allocation3 + $0x60] sm:$0xff]
    %v1691 = vld [vmem:[#allocation3 + $0x68] sm:$0xff]
    %v1692 = vld [vmem:[#allocation3 + $0x70] sm:$0xff]
    %v1693 = vld [vmem:[#allocation3 + $0x78] sm:$0xff]
    %v1694 = vld [vmem:[#allocation3 + $0x80] sm:$0xff]
    %v1695 = vld [vmem:[#allocation3 + $0x88] sm:$0xff]
    %v1696 = vld [vmem:[#allocation3 + $0x90] sm:$0xff]
    %v1697 = vld [vmem:[#allocation3 + $0x98] sm:$0xff]
    %v1698 = vld [vmem:[#allocation3 + $0xa0] sm:$0xff]
    %v1699 = vld [vmem:[#allocation3 + $0xa8] sm:$0xff]
    %v1700 = vld [vmem:[#allocation3 + $0xb0] sm:$0xff]
    %v1701 = vld [vmem:[#allocation3 + $0xb8] sm:$0xff]
    %v1702 = vld [vmem:[#allocation3 + $0xc0] sm:$0xff]
    %v1703 = vld [vmem:[#allocation3 + $0xc8] sm:$0xff]
    %v1704 = vld [vmem:[#allocation3 + $0xd0] sm:$0xff]
    %v1705 = vld [vmem:[#allocation3 + $0xd8] sm:$0xff]
    %v1706 = vld [vmem:[#allocation3 + $0xe0] sm:$0xff]
    %v1707 = vld [vmem:[#allocation3 + $0xe8] sm:$0xff]
    %v1708 = vld [vmem:[#allocation3 + $0xf0] sm:$0xff]
    %v1709 = vld [vmem:[#allocation3 + $0xf8] sm:$0xff]
    %v1710 = vld [vmem:[#allocation3 + $0x100] sm:$0xff]
    %v1711 = vld [vmem:[#allocation3 + $0x108] sm:$0xff]
    %v1712 = vld [vmem:[#allocation3 + $0x110] sm:$0xff]
    %v1713 = vld [vmem:[#allocation3 + $0x118] sm:$0xff]
    %v1714 = vld [vmem:[#allocation3 + $0x120] sm:$0xff]
    %v1715 = vld [vmem:[#allocation3 + $0x128] sm:$0xff]
    %v1716 = vld [vmem:[#allocation3 + $0x130] sm:$0xff]
    %v1717 = vld [vmem:[#allocation3 + $0x138] sm:$0xff]
    %v1718 = vld [vmem:[#allocation3 + $0x140] sm:$0xff]
    %v1719 = vld [vmem:[#allocation3 + $0x148] sm:$0xff]
    %v1720 = vld [vmem:[#allocation3 + $0x150] sm:$0xff]
    %v1721 = vld [vmem:[#allocation3 + $0x158] sm:$0xff]
    %v1722 = vld [vmem:[#allocation3 + $0x160] sm:$0xff]
    %v1723 = vld [vmem:[#allocation3 + $0x168] sm:$0xff]
    %v1724 = vld [vmem:[#allocation3 + $0x170] sm:$0xff]
    %v1725 = vld [vmem:[#allocation3 + $0x178] sm:$0xff]
    %v1726 = vld [vmem:[#allocation3 + $0x180] sm:$0xff]
    %v1727 = vld [vmem:[#allocation3 + $0x188] sm:$0xff]
    %v1728 = vld [vmem:[#allocation3 + $0x190] sm:$0xff]
    %v1729 = vld [vmem:[#allocation3 + $0x198] sm:$0xff]
    %v1730 = vld [vmem:[#allocation3 + $0x1a0] sm:$0xff]
    %v1731 = vld [vmem:[#allocation3 + $0x1a8] sm:$0xff]
    %v1732 = vld [vmem:[#allocation3 + $0x1b0] sm:$0xff]
    %v1733 = vld [vmem:[#allocation3 + $0x1b8] sm:$0xff]
    %v1734 = vld [vmem:[#allocation3 + $0x1c0] sm:$0xff]
    %v1735 = vld [vmem:[#allocation3 + $0x1c8] sm:$0xff]
    %v1736 = vld [vmem:[#allocation3 + $0x1d0] sm:$0xff]
    %v1737 = vld [vmem:[#allocation3 + $0x1d8] sm:$0xff]
    %v1738 = vld [vmem:[#allocation3 + $0x1e0] sm:$0xff]
    %v1739 = vld [vmem:[#allocation3 + $0x1e8] sm:$0xff]
    %v1740 = vld [vmem:[#allocation3 + $0x1f0] sm:$0xff]
    %v1741 = vld [vmem:[#allocation3 + $0x1f8] sm:$0xff]
    %1742 = vmatprep.subr.mxu0 %v1679
    %1743 = vmatpush1.msra.mxu0 %v1678
    %1744 = vmatprep.subr.mxu0 %v1681
    %1745 = vmatpush1.msra.mxu0 %v1680
    %1746 = vmatprep.subr.mxu0 %v1683
    %1747 = vmatpush1.msra.mxu0 %v1682
    %1748 = vmatprep.subr.mxu0 %v1685
    %1749 = vmatpush1.msra.mxu0 %v1684
    %1750 = vmatprep.subr.mxu0 %v1687
    %1751 = vmatpush1.msra.mxu0 %v1686
    %1752 = vmatprep.subr.mxu0 %v1689
    %1753 = vmatpush1.msra.mxu0 %v1688
    %1754 = vmatprep.subr.mxu0 %v1691
    %1755 = vmatpush1.msra.mxu0 %v1690
    %1756 = vmatprep.subr.mxu0 %v1693
    %1757 = vmatpush1.msra.mxu0 %v1692
    %1758 = vmatprep.subr.mxu0 %v1695
    %1759 = vmatpush1.msra.mxu0 %v1694
    %1760 = vmatprep.subr.mxu0 %v1697
    %1761 = vmatpush1.msra.mxu0 %v1696
    %1762 = vmatprep.subr.mxu0 %v1699
    %1763 = vmatpush1.msra.mxu0 %v1698
    %1764 = vmatprep.subr.mxu0 %v1701
    %1765 = vmatpush1.msra.mxu0 %v1700
    %1766 = vmatprep.subr.mxu0 %v1703
    %1767 = vmatpush1.msra.mxu0 %v1702
    %1768 = vmatprep.subr.mxu0 %v1705
    %1769 = vmatpush1.msra.mxu0 %v1704
    %1770 = vmatprep.subr.mxu0 %v1707
    %1771 = vmatpush1.msra.mxu0 %v1706
    %1772 = vmatprep.subr.mxu0 %v1709
    %1773 = vmatpush1.msra.mxu0 %v1708
    %1774 = vmatprep.subr.mxu0 %v1711
    %1775 = vmatpush1.msra.mxu0 %v1710
    %1776 = vmatprep.subr.mxu0 %v1713
    %1777 = vmatpush1.msra.mxu0 %v1712
    %1778 = vmatprep.subr.mxu0 %v1715
    %1779 = vmatpush1.msra.mxu0 %v1714
    %1780 = vmatprep.subr.mxu0 %v1717
    %1781 = vmatpush1.msra.mxu0 %v1716
    %1782 = vmatprep.subr.mxu0 %v1719
    %1783 = vmatpush1.msra.mxu0 %v1718
    %1784 = vmatprep.subr.mxu0 %v1721
    %1785 = vmatpush1.msra.mxu0 %v1720
    %1786 = vmatprep.subr.mxu0 %v1723
    %1787 = vmatpush1.msra.mxu0 %v1722
    %1788 = vmatprep.subr.mxu0 %v1725
    %1789 = vmatpush1.msra.mxu0 %v1724
    %1790 = vmatprep.subr.mxu0 %v1727
    %1791 = vmatpush1.msra.mxu0 %v1726
    %1792 = vmatprep.subr.mxu0 %v1729
    %1793 = vmatpush1.msra.mxu0 %v1728
    %1794 = vmatprep.subr.mxu0 %v1731
    %1795 = vmatpush1.msra.mxu0 %v1730
    %1796 = vmatprep.subr.mxu0 %v1733
    %1797 = vmatpush1.msra.mxu0 %v1732
    %1798 = vmatprep.subr.mxu0 %v1735
    %1799 = vmatpush1.msra.mxu0 %v1734
    %1800 = vmatprep.subr.mxu0 %v1737
    %1801 = vmatpush1.msra.mxu0 %v1736
    %1802 = vmatprep.subr.mxu0 %v1739
    %1803 = vmatpush1.msra.mxu0 %v1738
    %1804 = vmatprep.subr.mxu0 %v1741
    %1805 = vmatpush1.msra.mxu0 %v1740
    %1806 = vmatprep.mubr.f32.mxu0 %v1671
    %1807 = vmatmul.mubr.f32.gmra.mrb[0].mxu0 %v1670
    %v1808 = vpop.f32.mrb[0].mxu0
    %v1809 = vadd.f32 0.0, %v1808
    %v1810 = vpop.f32.mrb[0].mxu0
    %v1811 = vadd.f32 0.0, %v1810
    %1812 = vdwg.mxu0
    %v1813 = vld [vmem:[#allocation6] sm:$0xff]
    %v1814 = vld [vmem:[#allocation6 + $0x8] sm:$0xff]
    %v1815 = vld [vmem:[#allocation6 + $0x10] sm:$0xff]
    %v1816 = vld [vmem:[#allocation6 + $0x18] sm:$0xff]
    %v1817 = vld [vmem:[#allocation6 + $0x20] sm:$0xff]
    %v1818 = vld [vmem:[#allocation6 + $0x28] sm:$0xff]
    %v1819 = vld [vmem:[#allocation6 + $0x30] sm:$0xff]
    %v1820 = vld [vmem:[#allocation6 + $0x38] sm:$0xff]
    %v1821 = vld [vmem:[#allocation6 + $0x40] sm:$0xff]
    %v1822 = vld [vmem:[#allocation6 + $0x48] sm:$0xff]
    %v1823 = vld [vmem:[#allocation6 + $0x50] sm:$0xff]
    %v1824 = vld [vmem:[#allocation6 + $0x58] sm:$0xff]
    %v1825 = vld [vmem:[#allocation6 + $0x60] sm:$0xff]
    %v1826 = vld [vmem:[#allocation6 + $0x68] sm:$0xff]
    %v1827 = vld [vmem:[#allocation6 + $0x70] sm:$0xff]
    %v1828 = vld [vmem:[#allocation6 + $0x78] sm:$0xff]
    %v1829 = vld [vmem:[#allocation6 + $0x80] sm:$0xff]
    %v1830 = vld [vmem:[#allocation6 + $0x88] sm:$0xff]
    %v1831 = vld [vmem:[#allocation6 + $0x90] sm:$0xff]
    %v1832 = vld [vmem:[#allocation6 + $0x98] sm:$0xff]
    %v1833 = vld [vmem:[#allocation6 + $0xa0] sm:$0xff]
    %v1834 = vld [vmem:[#allocation6 + $0xa8] sm:$0xff]
    %v1835 = vld [vmem:[#allocation6 + $0xb0] sm:$0xff]
    %v1836 = vld [vmem:[#allocation6 + $0xb8] sm:$0xff]
    %v1837 = vld [vmem:[#allocation6 + $0xc0] sm:$0xff]
    %v1838 = vld [vmem:[#allocation6 + $0xc8] sm:$0xff]
    %v1839 = vld [vmem:[#allocation6 + $0xd0] sm:$0xff]
    %v1840 = vld [vmem:[#allocation6 + $0xd8] sm:$0xff]
    %v1841 = vld [vmem:[#allocation6 + $0xe0] sm:$0xff]
    %v1842 = vld [vmem:[#allocation6 + $0xe8] sm:$0xff]
    %v1843 = vld [vmem:[#allocation6 + $0xf0] sm:$0xff]
    %v1844 = vld [vmem:[#allocation6 + $0xf8] sm:$0xff]
    %1845 = vmatprep.subr.mxu0 0.0
    %1846 = vmatpush1.msra.mxu0 %v1813
    %1847 = vmatprep.subr.mxu0 0.0
    %1848 = vmatpush1.msra.mxu0 %v1814
    %1849 = vmatprep.subr.mxu0 0.0
    %1850 = vmatpush1.msra.mxu0 %v1815
    %1851 = vmatprep.subr.mxu0 0.0
    %1852 = vmatpush1.msra.mxu0 %v1816
    %1853 = vmatprep.subr.mxu0 0.0
    %1854 = vmatpush1.msra.mxu0 %v1817
    %1855 = vmatprep.subr.mxu0 0.0
    %1856 = vmatpush1.msra.mxu0 %v1818
    %1857 = vmatprep.subr.mxu0 0.0
    %1858 = vmatpush1.msra.mxu0 %v1819
    %1859 = vmatprep.subr.mxu0 0.0
    %1860 = vmatpush1.msra.mxu0 %v1820
    %1861 = vmatprep.subr.mxu0 0.0
    %1862 = vmatpush1.msra.mxu0 %v1821
    %1863 = vmatprep.subr.mxu0 0.0
    %1864 = vmatpush1.msra.mxu0 %v1822
    %1865 = vmatprep.subr.mxu0 0.0
    %1866 = vmatpush1.msra.mxu0 %v1823
    %1867 = vmatprep.subr.mxu0 0.0
    %1868 = vmatpush1.msra.mxu0 %v1824
    %1869 = vmatprep.subr.mxu0 0.0
    %1870 = vmatpush1.msra.mxu0 %v1825
    %1871 = vmatprep.subr.mxu0 0.0
    %1872 = vmatpush1.msra.mxu0 %v1826
    %1873 = vmatprep.subr.mxu0 0.0
    %1874 = vmatpush1.msra.mxu0 %v1827
    %1875 = vmatprep.subr.mxu0 0.0
    %1876 = vmatpush1.msra.mxu0 %v1828
    %1877 = vmatprep.subr.mxu0 0.0
    %1878 = vmatpush1.msra.mxu0 %v1829
    %1879 = vmatprep.subr.mxu0 0.0
    %1880 = vmatpush1.msra.mxu0 %v1830
    %1881 = vmatprep.subr.mxu0 0.0
    %1882 = vmatpush1.msra.mxu0 %v1831
    %1883 = vmatprep.subr.mxu0 0.0
    %1884 = vmatpush1.msra.mxu0 %v1832
    %1885 = vmatprep.subr.mxu0 0.0
    %1886 = vmatpush1.msra.mxu0 %v1833
    %1887 = vmatprep.subr.mxu0 0.0
    %1888 = vmatpush1.msra.mxu0 %v1834
    %1889 = vmatprep.subr.mxu0 0.0
    %1890 = vmatpush1.msra.mxu0 %v1835
    %1891 = vmatprep.subr.mxu0 0.0
    %1892 = vmatpush1.msra.mxu0 %v1836
    %1893 = vmatprep.subr.mxu0 0.0
    %1894 = vmatpush1.msra.mxu0 %v1837
    %1895 = vmatprep.subr.mxu0 0.0
    %1896 = vmatpush1.msra.mxu0 %v1838
    %1897 = vmatprep.subr.mxu0 0.0
    %1898 = vmatpush1.msra.mxu0 %v1839
    %1899 = vmatprep.subr.mxu0 0.0
    %1900 = vmatpush1.msra.mxu0 %v1840
    %1901 = vmatprep.subr.mxu0 0.0
    %1902 = vmatpush1.msra.mxu0 %v1841
    %1903 = vmatprep.subr.mxu0 0.0
    %1904 = vmatpush1.msra.mxu0 %v1842
    %1905 = vmatprep.subr.mxu0 0.0
    %1906 = vmatpush1.msra.mxu0 %v1843
    %1907 = vmatprep.subr.mxu0 0.0
    %1908 = vmatpush1.msra.mxu0 %v1844
    %1909 = vmatprep.mubr.f32.mxu0 %v1677
    %1910 = vmatmul.mubr.f32.gmra.mrb[0].mxu0 %v1675
    %v1911 = vpop.f32.mrb[0].mxu0
    %v1912 = vadd.f32 0.0, %v1911
    %v1913 = vpop.f32.mrb[0].mxu0
    %1914 = vdwg.mxu0
    %v1915 = vadd.f32 %v1809, %v311
    %v1916 = vadd.f32 %v1811, %v316
    %v1917 = vxor.u32 %v1916, 2147483648
    %v1918 = vmul.f32 %v1917, 1.442695
    %v1919 = vpow.pop %v1918
    %v1920 = vadd.f32 %v1919, 1.0
    %v1921 = vrcp.pop %v1920
    %v1922 = vmul.f32 1.0, %v1921
    %v1923 = vmul.f32 %v1912, 1.442695
    %v1924 = vpow.pop %v1923
    %v1925 = vadd.f32 %v1924, %v329
    %v1926 = vsub.f32 %v1915, %v1925
    %v1927 = vmul.f32 %v1922, %v1926
    %v1928 = vadd.f32 %v1925, %v1927
    %v1929 = vtanh.pop %v1928
    %1930 = vst [vmem:[#allocation2 + $0x8] sm:$0xff] %v1929
    %s1931 = scalar_lea.vmem [#allocation8], 48
    %1932 = vst [vmem:[%s1931] sm:$0xff] %v1929
    %s1933 = scalar_lea.vmem %s0, 56
    %v1934 = vld [vmem:[%s1933] sm:$0xff]
    %1935 = vst.msk [vmem:[#allocation2] sm:$0xff] %vm61, %v1934
    %v1936 = vld [vmem:[#allocation2] sm:$0xff]
    %v1937 = vld [vmem:[#allocation2 + $0x8] sm:$0xff]
    %v1938 = vadd.f32 %v1936, 1e-06
    %v1939 = vadd.f32 %v1937, 1e-06
    %v1940 = vlog2.pop %v1938
    %v1941 = vmul.f32 %v1940, 0.6931472
    %v1942 = vlog2.pop %v1939
    %v1943 = vmul.f32 %v1942, 0.6931472
    %v1944 = vld [vmem:[#allocation3] sm:$0xff]
    %v1945 = vld [vmem:[#allocation3 + $0x8] sm:$0xff]
    %v1946 = vld [vmem:[#allocation3 + $0x10] sm:$0xff]
    %v1947 = vld [vmem:[#allocation3 + $0x18] sm:$0xff]
    %v1948 = vld [vmem:[#allocation3 + $0x20] sm:$0xff]
    %v1949 = vld [vmem:[#allocation3 + $0x28] sm:$0xff]
    %v1950 = vld [vmem:[#allocation3 + $0x30] sm:$0xff]
    %v1951 = vld [vmem:[#allocation3 + $0x38] sm:$0xff]
    %v1952 = vld [vmem:[#allocation3 + $0x40] sm:$0xff]
    %v1953 = vld [vmem:[#allocation3 + $0x48] sm:$0xff]
    %v1954 = vld [vmem:[#allocation3 + $0x50] sm:$0xff]
    %v1955 = vld [vmem:[#allocation3 + $0x58] sm:$0xff]
    %v1956 = vld [vmem:[#allocation3 + $0x60] sm:$0xff]
    %v1957 = vld [vmem:[#allocation3 + $0x68] sm:$0xff]
    %v1958 = vld [vmem:[#allocation3 + $0x70] sm:$0xff]
    %v1959 = vld [vmem:[#allocation3 + $0x78] sm:$0xff]
    %v1960 = vld [vmem:[#allocation3 + $0x80] sm:$0xff]
    %v1961 = vld [vmem:[#allocation3 + $0x88] sm:$0xff]
    %v1962 = vld [vmem:[#allocation3 + $0x90] sm:$0xff]
    %v1963 = vld [vmem:[#allocation3 + $0x98] sm:$0xff]
    %v1964 = vld [vmem:[#allocation3 + $0xa0] sm:$0xff]
    %v1965 = vld [vmem:[#allocation3 + $0xa8] sm:$0xff]
    %v1966 = vld [vmem:[#allocation3 + $0xb0] sm:$0xff]
    %v1967 = vld [vmem:[#allocation3 + $0xb8] sm:$0xff]
    %v1968 = vld [vmem:[#allocation3 + $0xc0] sm:$0xff]
    %v1969 = vld [vmem:[#allocation3 + $0xc8] sm:$0xff]
    %v1970 = vld [vmem:[#allocation3 + $0xd0] sm:$0xff]
    %v1971 = vld [vmem:[#allocation3 + $0xd8] sm:$0xff]
    %v1972 = vld [vmem:[#allocation3 + $0xe0] sm:$0xff]
    %v1973 = vld [vmem:[#allocation3 + $0xe8] sm:$0xff]
    %v1974 = vld [vmem:[#allocation3 + $0xf0] sm:$0xff]
    %v1975 = vld [vmem:[#allocation3 + $0xf8] sm:$0xff]
    %v1976 = vld [vmem:[#allocation3 + $0x100] sm:$0xff]
    %v1977 = vld [vmem:[#allocation3 + $0x108] sm:$0xff]
    %v1978 = vld [vmem:[#allocation3 + $0x110] sm:$0xff]
    %v1979 = vld [vmem:[#allocation3 + $0x118] sm:$0xff]
    %v1980 = vld [vmem:[#allocation3 + $0x120] sm:$0xff]
    %v1981 = vld [vmem:[#allocation3 + $0x128] sm:$0xff]
    %v1982 = vld [vmem:[#allocation3 + $0x130] sm:$0xff]
    %v1983 = vld [vmem:[#allocation3 + $0x138] sm:$0xff]
    %v1984 = vld [vmem:[#allocation3 + $0x140] sm:$0xff]
    %v1985 = vld [vmem:[#allocation3 + $0x148] sm:$0xff]
    %v1986 = vld [vmem:[#allocation3 + $0x150] sm:$0xff]
    %v1987 = vld [vmem:[#allocation3 + $0x158] sm:$0xff]
    %v1988 = vld [vmem:[#allocation3 + $0x160] sm:$0xff]
    %v1989 = vld [vmem:[#allocation3 + $0x168] sm:$0xff]
    %v1990 = vld [vmem:[#allocation3 + $0x170] sm:$0xff]
    %v1991 = vld [vmem:[#allocation3 + $0x178] sm:$0xff]
    %v1992 = vld [vmem:[#allocation3 + $0x180] sm:$0xff]
    %v1993 = vld [vmem:[#allocation3 + $0x188] sm:$0xff]
    %v1994 = vld [vmem:[#allocation3 + $0x190] sm:$0xff]
    %v1995 = vld [vmem:[#allocation3 + $0x198] sm:$0xff]
    %v1996 = vld [vmem:[#allocation3 + $0x1a0] sm:$0xff]
    %v1997 = vld [vmem:[#allocation3 + $0x1a8] sm:$0xff]
    %v1998 = vld [vmem:[#allocation3 + $0x1b0] sm:$0xff]
    %v1999 = vld [vmem:[#allocation3 + $0x1b8] sm:$0xff]
    %v2000 = vld [vmem:[#allocation3 + $0x1c0] sm:$0xff]
    %v2001 = vld [vmem:[#allocation3 + $0x1c8] sm:$0xff]
    %v2002 = vld [vmem:[#allocation3 + $0x1d0] sm:$0xff]
    %v2003 = vld [vmem:[#allocation3 + $0x1d8] sm:$0xff]
    %v2004 = vld [vmem:[#allocation3 + $0x1e0] sm:$0xff]
    %v2005 = vld [vmem:[#allocation3 + $0x1e8] sm:$0xff]
    %v2006 = vld [vmem:[#allocation3 + $0x1f0] sm:$0xff]
    %v2007 = vld [vmem:[#allocation3 + $0x1f8] sm:$0xff]
    %2008 = vmatprep.subr.mxu0 %v1945
    %2009 = vmatpush1.msra.mxu0 %v1944
    %2010 = vmatprep.subr.mxu0 %v1947
    %2011 = vmatpush1.msra.mxu0 %v1946
    %2012 = vmatprep.subr.mxu0 %v1949
    %2013 = vmatpush1.msra.mxu0 %v1948
    %2014 = vmatprep.subr.mxu0 %v1951
    %2015 = vmatpush1.msra.mxu0 %v1950
    %2016 = vmatprep.subr.mxu0 %v1953
    %2017 = vmatpush1.msra.mxu0 %v1952
    %2018 = vmatprep.subr.mxu0 %v1955
    %2019 = vmatpush1.msra.mxu0 %v1954
    %2020 = vmatprep.subr.mxu0 %v1957
    %2021 = vmatpush1.msra.mxu0 %v1956
    %2022 = vmatprep.subr.mxu0 %v1959
    %2023 = vmatpush1.msra.mxu0 %v1958
    %2024 = vmatprep.subr.mxu0 %v1961
    %2025 = vmatpush1.msra.mxu0 %v1960
    %2026 = vmatprep.subr.mxu0 %v1963
    %2027 = vmatpush1.msra.mxu0 %v1962
    %2028 = vmatprep.subr.mxu0 %v1965
    %2029 = vmatpush1.msra.mxu0 %v1964
    %2030 = vmatprep.subr.mxu0 %v1967
    %2031 = vmatpush1.msra.mxu0 %v1966
    %2032 = vmatprep.subr.mxu0 %v1969
    %2033 = vmatpush1.msra.mxu0 %v1968
    %2034 = vmatprep.subr.mxu0 %v1971
    %2035 = vmatpush1.msra.mxu0 %v1970
    %2036 = vmatprep.subr.mxu0 %v1973
    %2037 = vmatpush1.msra.mxu0 %v1972
    %2038 = vmatprep.subr.mxu0 %v1975
    %2039 = vmatpush1.msra.mxu0 %v1974
    %2040 = vmatprep.subr.mxu0 %v1977
    %2041 = vmatpush1.msra.mxu0 %v1976
    %2042 = vmatprep.subr.mxu0 %v1979
    %2043 = vmatpush1.msra.mxu0 %v1978
    %2044 = vmatprep.subr.mxu0 %v1981
    %2045 = vmatpush1.msra.mxu0 %v1980
    %2046 = vmatprep.subr.mxu0 %v1983
    %2047 = vmatpush1.msra.mxu0 %v1982
    %2048 = vmatprep.subr.mxu0 %v1985
    %2049 = vmatpush1.msra.mxu0 %v1984
    %2050 = vmatprep.subr.mxu0 %v1987
    %2051 = vmatpush1.msra.mxu0 %v1986
    %2052 = vmatprep.subr.mxu0 %v1989
    %2053 = vmatpush1.msra.mxu0 %v1988
    %2054 = vmatprep.subr.mxu0 %v1991
    %2055 = vmatpush1.msra.mxu0 %v1990
    %2056 = vmatprep.subr.mxu0 %v1993
    %2057 = vmatpush1.msra.mxu0 %v1992
    %2058 = vmatprep.subr.mxu0 %v1995
    %2059 = vmatpush1.msra.mxu0 %v1994
    %2060 = vmatprep.subr.mxu0 %v1997
    %2061 = vmatpush1.msra.mxu0 %v1996
    %2062 = vmatprep.subr.mxu0 %v1999
    %2063 = vmatpush1.msra.mxu0 %v1998
    %2064 = vmatprep.subr.mxu0 %v2001
    %2065 = vmatpush1.msra.mxu0 %v2000
    %2066 = vmatprep.subr.mxu0 %v2003
    %2067 = vmatpush1.msra.mxu0 %v2002
    %2068 = vmatprep.subr.mxu0 %v2005
    %2069 = vmatpush1.msra.mxu0 %v2004
    %2070 = vmatprep.subr.mxu0 %v2007
    %2071 = vmatpush1.msra.mxu0 %v2006
    %2072 = vmatprep.mubr.f32.mxu0 %v1937
    %2073 = vmatmul.mubr.f32.gmra.mrb[0].mxu0 %v1936
    %v2074 = vpop.f32.mrb[0].mxu0
    %v2075 = vadd.f32 0.0, %v2074
    %v2076 = vpop.f32.mrb[0].mxu0
    %v2077 = vadd.f32 0.0, %v2076
    %2078 = vdwg.mxu0
    %v2079 = vld [vmem:[#allocation6] sm:$0xff]
    %v2080 = vld [vmem:[#allocation6 + $0x8] sm:$0xff]
    %v2081 = vld [vmem:[#allocation6 + $0x10] sm:$0xff]
    %v2082 = vld [vmem:[#allocation6 + $0x18] sm:$0xff]
    %v2083 = vld [vmem:[#allocation6 + $0x20] sm:$0xff]
    %v2084 = vld [vmem:[#allocation6 + $0x28] sm:$0xff]
    %v2085 = vld [vmem:[#allocation6 + $0x30] sm:$0xff]
    %v2086 = vld [vmem:[#allocation6 + $0x38] sm:$0xff]
    %v2087 = vld [vmem:[#allocation6 + $0x40] sm:$0xff]
    %v2088 = vld [vmem:[#allocation6 + $0x48] sm:$0xff]
    %v2089 = vld [vmem:[#allocation6 + $0x50] sm:$0xff]
    %v2090 = vld [vmem:[#allocation6 + $0x58] sm:$0xff]
    %v2091 = vld [vmem:[#allocation6 + $0x60] sm:$0xff]
    %v2092 = vld [vmem:[#allocation6 + $0x68] sm:$0xff]
    %v2093 = vld [vmem:[#allocation6 + $0x70] sm:$0xff]
    %v2094 = vld [vmem:[#allocation6 + $0x78] sm:$0xff]
    %v2095 = vld [vmem:[#allocation6 + $0x80] sm:$0xff]
    %v2096 = vld [vmem:[#allocation6 + $0x88] sm:$0xff]
    %v2097 = vld [vmem:[#allocation6 + $0x90] sm:$0xff]
    %v2098 = vld [vmem:[#allocation6 + $0x98] sm:$0xff]
    %v2099 = vld [vmem:[#allocation6 + $0xa0] sm:$0xff]
    %v2100 = vld [vmem:[#allocation6 + $0xa8] sm:$0xff]
    %v2101 = vld [vmem:[#allocation6 + $0xb0] sm:$0xff]
    %v2102 = vld [vmem:[#allocation6 + $0xb8] sm:$0xff]
    %v2103 = vld [vmem:[#allocation6 + $0xc0] sm:$0xff]
    %v2104 = vld [vmem:[#allocation6 + $0xc8] sm:$0xff]
    %v2105 = vld [vmem:[#allocation6 + $0xd0] sm:$0xff]
    %v2106 = vld [vmem:[#allocation6 + $0xd8] sm:$0xff]
    %v2107 = vld [vmem:[#allocation6 + $0xe0] sm:$0xff]
    %v2108 = vld [vmem:[#allocation6 + $0xe8] sm:$0xff]
    %v2109 = vld [vmem:[#allocation6 + $0xf0] sm:$0xff]
    %v2110 = vld [vmem:[#allocation6 + $0xf8] sm:$0xff]
    %2111 = vmatprep.subr.mxu0 0.0
    %2112 = vmatpush1.msra.mxu0 %v2079
    %2113 = vmatprep.subr.mxu0 0.0
    %2114 = vmatpush1.msra.mxu0 %v2080
    %2115 = vmatprep.subr.mxu0 0.0
    %2116 = vmatpush1.msra.mxu0 %v2081
    %2117 = vmatprep.subr.mxu0 0.0
    %2118 = vmatpush1.msra.mxu0 %v2082
    %2119 = vmatprep.subr.mxu0 0.0
    %2120 = vmatpush1.msra.mxu0 %v2083
    %2121 = vmatprep.subr.mxu0 0.0
    %2122 = vmatpush1.msra.mxu0 %v2084
    %2123 = vmatprep.subr.mxu0 0.0
    %2124 = vmatpush1.msra.mxu0 %v2085
    %2125 = vmatprep.subr.mxu0 0.0
    %2126 = vmatpush1.msra.mxu0 %v2086
    %2127 = vmatprep.subr.mxu0 0.0
    %2128 = vmatpush1.msra.mxu0 %v2087
    %2129 = vmatprep.subr.mxu0 0.0
    %2130 = vmatpush1.msra.mxu0 %v2088
    %2131 = vmatprep.subr.mxu0 0.0
    %2132 = vmatpush1.msra.mxu0 %v2089
    %2133 = vmatprep.subr.mxu0 0.0
    %2134 = vmatpush1.msra.mxu0 %v2090
    %2135 = vmatprep.subr.mxu0 0.0
    %2136 = vmatpush1.msra.mxu0 %v2091
    %2137 = vmatprep.subr.mxu0 0.0
    %2138 = vmatpush1.msra.mxu0 %v2092
    %2139 = vmatprep.subr.mxu0 0.0
    %2140 = vmatpush1.msra.mxu0 %v2093
    %2141 = vmatprep.subr.mxu0 0.0
    %2142 = vmatpush1.msra.mxu0 %v2094
    %2143 = vmatprep.subr.mxu0 0.0
    %2144 = vmatpush1.msra.mxu0 %v2095
    %2145 = vmatprep.subr.mxu0 0.0
    %2146 = vmatpush1.msra.mxu0 %v2096
    %2147 = vmatprep.subr.mxu0 0.0
    %2148 = vmatpush1.msra.mxu0 %v2097
    %2149 = vmatprep.subr.mxu0 0.0
    %2150 = vmatpush1.msra.mxu0 %v2098
    %2151 = vmatprep.subr.mxu0 0.0
    %2152 = vmatpush1.msra.mxu0 %v2099
    %2153 = vmatprep.subr.mxu0 0.0
    %2154 = vmatpush1.msra.mxu0 %v2100
    %2155 = vmatprep.subr.mxu0 0.0
    %2156 = vmatpush1.msra.mxu0 %v2101
    %2157 = vmatprep.subr.mxu0 0.0
    %2158 = vmatpush1.msra.mxu0 %v2102
    %2159 = vmatprep.subr.mxu0 0.0
    %2160 = vmatpush1.msra.mxu0 %v2103
    %2161 = vmatprep.subr.mxu0 0.0
    %2162 = vmatpush1.msra.mxu0 %v2104
    %2163 = vmatprep.subr.mxu0 0.0
    %2164 = vmatpush1.msra.mxu0 %v2105
    %2165 = vmatprep.subr.mxu0 0.0
    %2166 = vmatpush1.msra.mxu0 %v2106
    %2167 = vmatprep.subr.mxu0 0.0
    %2168 = vmatpush1.msra.mxu0 %v2107
    %2169 = vmatprep.subr.mxu0 0.0
    %2170 = vmatpush1.msra.mxu0 %v2108
    %2171 = vmatprep.subr.mxu0 0.0
    %2172 = vmatpush1.msra.mxu0 %v2109
    %2173 = vmatprep.subr.mxu0 0.0
    %2174 = vmatpush1.msra.mxu0 %v2110
    %2175 = vmatprep.mubr.f32.mxu0 %v1943
    %2176 = vmatmul.mubr.f32.gmra.mrb[0].mxu0 %v1941
    %v2177 = vpop.f32.mrb[0].mxu0
    %v2178 = vadd.f32 0.0, %v2177
    %v2179 = vpop.f32.mrb[0].mxu0
    %2180 = vdwg.mxu0
    %v2181 = vadd.f32 %v2075, %v311
    %v2182 = vadd.f32 %v2077, %v316
    %v2183 = vxor.u32 %v2182, 2147483648
    %v2184 = vmul.f32 %v2183, 1.442695
    %v2185 = vpow.pop %v2184
    %v2186 = vadd.f32 %v2185, 1.0
    %v2187 = vrcp.pop %v2186
    %v2188 = vmul.f32 1.0, %v2187
    %v2189 = vmul.f32 %v2178, 1.442695
    %v2190 = vpow.pop %v2189
    %v2191 = vadd.f32 %v2190, %v329
    %v2192 = vsub.f32 %v2181, %v2191
    %v2193 = vmul.f32 %v2188, %v2192
    %v2194 = vadd.f32 %v2191, %v2193
    %v2195 = vtanh.pop %v2194
    %2196 = vst [vmem:[#allocation2 + $0x8] sm:$0xff] %v2195
    %s2197 = scalar_lea.vmem [#allocation8], 56
    %2198 = vst [vmem:[%s2197] sm:$0xff] %v2195
    // Predicated region
    $region34: #{tpu_custom_call.1} parent=1 // pred_check
      _
    $region35: #{tpu_custom_call.1} parent=1 // pred_check_branch
      %2200 = sbr.rel (0) target = $region37
    $region36: #{tpu_custom_call.1} parent=1 // pred_region
      %s2202 = ssub.s32 1024, 1024
      %2203 = vsyncadd [#allocation5], %s2202
      %s2204 = sshll.u32 [#allocation8], 4
      %s2205 = int_to_ptr.vmem [resolvable:$true] %s2204
      %2210 = dma.vmem_to_hbm [thread:$0]  %s2205, 1024, %s5, [#allocation5], 128, 128, 8
    $region37: #{tpu_custom_call.1} parent=1 // pred_fallthru
      _
    // Predicated region
    $region38: #{tpu_custom_call.1} parent=1 // pred_check
      _
    $region39: #{tpu_custom_call.1} parent=1 // pred_check_branch
      %2212 = sbr.rel (0) target = $region41
    $region40: #{tpu_custom_call.1} parent=1 // pred_region
      %2213 = dma.done [#allocation5], 1024
    $region41: #{tpu_custom_call.1} parent=1 // pred_fallthru
      _
    %2214 = vsyncpa [#allocation4], 1
    %2215 = vsyncpa [#allocation7], 1
    %2216 = vsyncpa [#allocation5], 1

</llo_original>
